<compile_context>
chip_gen: v5e
topology: v5e:2x2
jax: 0.10.0
libtpu: 0.0.40
codegen_flags: <defaults>
</compile_context>

<pallas_src>
import functools
import math

import jax
import jax.numpy as jnp
from jax.experimental import pallas as pl
from jax.experimental.pallas import tpu as pltpu

# ----------------------------------------------------------------------------
# Small synthetic Jasper config (stands in for jasper.toml; no file I/O).
# ----------------------------------------------------------------------------
JASPER_CFG = {
    "input": {"features": 32},
    "encoder": {"activation": "relu", "convmask": True},
    "jasper": [
        {"filters": 32, "repeat": 1, "kernel": [7], "stride": [1], "dilation": [1],
         "dropout": 0.2, "residual": False},
        {"filters": 32, "repeat": 2, "kernel": [7], "stride": [1], "dilation": [1],
         "dropout": 0.2, "residual": True, "residual_dense": True},
        {"filters": 48, "repeat": 2, "kernel": [5], "stride": [1], "dilation": [1],
         "dropout": 0.2, "residual": True, "residual_dense": True},
        {"filters": 64, "repeat": 1, "kernel": [1], "stride": [1], "dilation": [1],
         "dropout": 0.4, "residual": False},
    ],
}
NUM_CLASSES = 29          # decoder num_classes (as in JasperDecoderForCTC)
BN_EPS = 0.001
C_PAD = 128               # every channel axis is padded to one full lane register
HBM_DTYPE = jnp.bfloat16  # activations / weights at the HBM boundary
NEG_BIG = -1e30           # mask value for padded class lanes (acts like -inf in f32)
HALO_AL = 8               # 8-aligned leading halo rows in the shared conv scratch
HALO_TAIL = 8             # trailing halo rows (>= max one-sided padding)


# ----------------------------------------------------------------------------
# Single fused kernel: whole encoder (masked convs + folded BN + dense residual +
# relu) followed by the CTC decoder head (1x1 conv + bias + log_softmax).
# ----------------------------------------------------------------------------
def _jasper_fused_kernel(lens_ref, *refs, plan, nc_valid, max_pad):
    n_layers = len(plan)
    x_ref = refs[0]                       # (1, T, 128) bf16
    w_refs = refs[1:1 + n_layers]         # stacked im2col(+residual) weights, bf16
    shifts_ref = refs[1 + n_layers]       # (>=8, 128) f32: folded BN shift / dec bias
    o_ref = refs[2 + n_layers]            # (1, T, 128) f32
    xpad_ref = refs[3 + n_layers] if max_pad > 0 else None  # shared halo scratch

    b = pl.program_id(0)
    seq_len = lens_ref[b]                 # scalar from SMEM (prefetched)

    T = x_ref.shape[1]
    C = x_ref.shape[2]
    t_idx = jax.lax.broadcasted_iota(jnp.int32, (T, C), 0)
    valid = t_idx < seq_len               # MaskedConv1d length mask (reused each layer)

    if max_pad > 0:
        # Zero ONLY the halo rows, once; the interior is overwritten every layer.
        xpad_ref[pl.ds(0, HALO_AL), :] = jnp.zeros((HALO_AL, C), jnp.float32)
        xpad_ref[pl.ds(HALO_AL + T, HALO_TAIL), :] = jnp.zeros((HALO_TAIL, C),
                                                               jnp.float32)

    cur = x_ref[0].astype(jnp.float32)    # current activation, (T, 128) value
    panes = []                            # dense-residual panes (values in VMEM/vregs)

    for li, layer in enumerate(plan):
        K, dil, pad = layer["K"], layer["dil"], layer["pad"]

        # MaskedConv1d zeroes positions t >= seq_len before the conv.
        xm = jnp.where(valid, cur, 0.0) if layer["mask"] else cur

        if K == 1:
            mats = [xm]
        else:
            # im2col taps via the shared halo scratch: aligned interior store,
            # K offset reads (halo rows stay zero for the whole kernel).
            xpad_ref[pl.ds(HALO_AL, T), :] = xm
            base = HALO_AL - pad
            mats = [xpad_ref[pl.ds(base + k * dil, T), :] for k in range(K)]

        # Dense-residual 1x1 convs are stacked into the same matmul: contraction
        # grows by 128 per pane, so each layer is exactly one MXU matmul.
        for pi in range(layer["pane_count"]):
            mats.append(jnp.where(valid, panes[pi], 0.0))

        x2 = jnp.concatenate(mats, axis=1) if len(mats) > 1 else mats[0]
        w = w_refs[li][...]
        y = jnp.dot(x2.astype(w.dtype), w, preferred_element_type=jnp.float32)
        y = y + shifts_ref[pl.ds(li, 1), :]          # folded BN shift / decoder bias

        if layer["decoder"]:
            # JasperDecoderForCTC: mask padded class lanes, then log_softmax.
            c_idx = jax.lax.broadcasted_iota(jnp.int32, y.shape, 1)
            y = jnp.where(c_idx < nc_valid, y, NEG_BIG)
            m = jnp.max(y, axis=-1, keepdims=True)
            lse = jnp.log(jnp.sum(jnp.exp(y - m), axis=-1, keepdims=True)) + m
            y = y - lse
        elif layer["act"] == "relu":
            y = jnp.maximum(y, 0.0)
        elif layer["act"] == "hardtanh":
            y = jnp.clip(y, 0.0, 20.0)

        cur = y
        # Dense-residual pane bookkeeping (mirrors JasperEncoder's xs list).
        if layer["block_end"] == "append":
            panes = panes + [cur]
        elif layer["block_end"] == "reset":
            panes = [cur]

    o_ref[0] = cur.astype(o_ref.dtype)


def fused_jasper_call(x, lens, params):
    """x: (B, T, 128) bf16, lens: (B,) int32 -> (B, T, 128) f32 log-prob slab."""
    B, T, C = x.shape
    plan = params["plan"]
    weights = params["weights"]
    shifts = params["shifts"]
    max_pad = max(l["pad"] for l in plan)

    in_specs = [pl.BlockSpec((1, T, C), lambda b, lens_ref: (b, 0, 0))]
    operands = [x]
    for w in weights:                                       # constant blocks: DMA'd once
        in_specs.append(pl.BlockSpec(w.shape, lambda b, lens_ref: (0, 0)))
        operands.append(w)
    in_specs.append(pl.BlockSpec(shifts.shape, lambda b, lens_ref: (0, 0)))
    operands.append(shifts)

    scratch_shapes = []
    if max_pad > 0:
        scratch_shapes.append(
            pltpu.VMEM((HALO_AL + T + HALO_TAIL, C), jnp.float32))

    kernel = functools.partial(_jasper_fused_kernel, plan=plan,
                               nc_valid=NUM_CLASSES, max_pad=max_pad)

    return pl.pallas_call(
        kernel,
        out_shape=jax.ShapeDtypeStruct((B, T, C), jnp.float32),
        grid_spec=pltpu.PrefetchScalarGridSpec(
            num_scalar_prefetch=1,
            grid=(B,),
            in_specs=in_specs,
            out_specs=pl.BlockSpec((1, T, C), lambda b, lens_ref: (b, 0, 0)),
            scratch_shapes=scratch_shapes),
        compiler_params=pltpu.CompilerParams(
            dimension_semantics=("parallel",),
            vmem_limit_bytes=32 * 1024 * 1024),
    )(lens, *operands)


# ----------------------------------------------------------------------------
# Parameter construction (mirrors __init__ shapes + init_weights, lane-padded,
# BN scale folded into weights, residual weights stacked along the contraction).
# ----------------------------------------------------------------------------
def _xavier_uniform(key, K, cin, cout):
    fan_in, fan_out = cin * K, cout * K
    bound = math.sqrt(6.0 / (fan_in + fan_out))
    # torch Conv1d weight is (cout, cin, K); stored here as (K, cin, cout)
    return jax.random.uniform(key, (K, cin, cout), jnp.float32, -bound, bound)


def _pack_weight(w_kio, cin, cout, scale_vec):
    """(K,cin,cout) f32 -> im2col rows (K*128, 128) f32 with BN scale folded in."""
    K = w_kio.shape[0]
    w = w_kio * scale_vec[None, None, :]
    wp = jnp.zeros((K, C_PAD, C_PAD), jnp.float32)
    wp = wp.at[:, :cin, :cout].set(w)
    return wp.reshape(K * C_PAD, C_PAD)


def init_params(key):
    feat_in = JASPER_CFG["input"]["features"]
    act = JASPER_CFG["encoder"]["activation"]
    # init_weights: running_mean=0, running_var=1, gamma=1, beta=0
    bn_scale = 1.0 / math.sqrt(1.0 + BN_EPS)

    weights, shifts, plan = [], [], []
    residual_panes = []

    for lcfg in JASPER_CFG["jasper"]:
        K = lcfg["kernel"][0]
        stride = lcfg["stride"][0]
        assert stride == 1  # TODO(synk): stride > 1 not implemented (unused here)
        dil = lcfg["dilation"][0]
        pad = (K // 2) * dil                       # get_same_padding
        filters = lcfg["filters"]
        repeat = lcfg["repeat"]

        if lcfg.get("residual_dense", False):      # mirrors JasperEncoder bookkeeping
            residual_panes.append(feat_in)
            panes = list(residual_panes)
        else:
            panes = []

        cin = feat_in
        for r in range(repeat):
            is_last = r == repeat - 1
            key, sub = jax.random.split(key)
            w_main = _xavier_uniform(sub, K, cin, filters)
            scale_vec = jnp.full((filters,), bn_scale, jnp.float32)
            pieces = [_pack_weight(w_main, cin, filters, scale_vec)]
            shift = jnp.zeros((C_PAD,), jnp.float32)   # folded BN shift is 0 at init
            pane_count = 0
            if is_last and lcfg["residual"]:
                for ip in panes:
                    key, sub = jax.random.split(key)
                    w_res = _xavier_uniform(sub, 1, ip, filters)
                    pieces.append(_pack_weight(w_res, ip, filters, scale_vec))
                    # residual-path BN shift is also 0 under init_weights
                pane_count = len(panes)
            weights.append(jnp.concatenate(pieces, axis=0).astype(HBM_DTYPE))
            shifts.append(shift)
            block_end = None
            if is_last:
                block_end = "append" if lcfg["residual"] else "reset"
            plan.append(dict(K=K, dil=dil, pad=pad, pane_count=pane_count,
                             act=act, decoder=False, mask=True,
                             block_end=block_end))
            cin = filters
        feat_in = filters

    # Decoder head: Conv1d(feat_in, NUM_CLASSES, kernel_size=1, bias=True).
    key, sub = jax.random.split(key)
    dec_w = _xavier_uniform(sub, 1, feat_in, NUM_CLASSES)
    key, sub = jax.random.split(key)
    bbound = 1.0 / math.sqrt(feat_in)
    dec_b = jax.random.uniform(sub, (NUM_CLASSES,), jnp.float32, -bbound, bbound)
    weights.append(_pack_weight(dec_w, feat_in, NUM_CLASSES,
                                jnp.ones((NUM_CLASSES,), jnp.float32)).astype(HBM_DTYPE))
    shifts.append(jnp.zeros((C_PAD,), jnp.float32).at[:NUM_CLASSES].set(dec_b))
    plan.append(dict(K=1, dil=1, pad=0, pane_count=0, act=None, decoder=True,
                     mask=False, block_end=None))

    shifts_arr = jnp.zeros((max(8, len(shifts)), C_PAD), jnp.float32)
    for i, s in enumerate(shifts):
        shifts_arr = shifts_arr.at[i].set(s)

    return dict(weights=weights, shifts=shifts_arr, plan=plan)


# ----------------------------------------------------------------------------
# Forward pass glue (PyTorch (N, C, T) boundary -> one fused pallas_call)
# ----------------------------------------------------------------------------
def jasper_encoder_decoder(x_nct, lens, params):
    """x_nct: (B, C, T) as in PyTorch; lens: (B,) int32.  Returns (log_probs, lens)."""
    B, C, T = x_nct.shape
    x = jnp.transpose(x_nct, (0, 2, 1))                   # -> (B, T, C)
    x = jnp.pad(x, ((0, 0), (0, 0), (0, C_PAD - C)))      # lane-pad channels once
    x = x.astype(HBM_DTYPE)
    lens = lens.astype(jnp.int32)

    slab = fused_jasper_call(x, lens, params)             # (B, T, 128) f32 log-probs
    log_probs = slab[:, :, :NUM_CLASSES]                  # slice padded class lanes
    # All convs are stride-1 'same' padding: get_seq_len is the identity here.
    return log_probs, lens


# ----------------------------------------------------------------------------
if __name__ == "__main__":
    key = jax.random.PRNGKey(0)
    key, kx, kp = jax.random.split(key, 3)

    B, C, T = 2, JASPER_CFG["input"]["features"], 16
    x = jax.random.normal(kx, (B, C, T), jnp.float32)     # PyTorch (N, C, T) layout
    lens = jnp.array([16, 11], jnp.int32)

    params = init_params(kp)
    log_probs, out_lens = jasper_encoder_decoder(x, lens, params)
    log_probs = jax.block_until_ready(log_probs)
    out_lens = jax.block_until_ready(out_lens)

    assert log_probs.shape == (B, T, NUM_CLASSES)
    assert bool(jnp.all(jnp.isfinite(log_probs)))
    # log_softmax rows should exponentiate-sum to 1
    assert bool(jnp.allclose(jnp.sum(jnp.exp(log_probs), axis=-1), 1.0, atol=1e-4))
    print("KERNEL_OK")
</pallas_src>

<mosaic_0001>
module attributes {stable_mosaic.version = 11 : i64} {
  func.func @_jasper_fused_kernel(%arg0: i32, %arg1: memref<2xi32, #tpu.memory_space<smem>>, %arg2: memref<1x16x128xbf16, #tpu.memory_space<vmem>>, %arg3: memref<896x128xbf16, #tpu.memory_space<vmem>>, %arg4: memref<896x128xbf16, #tpu.memory_space<vmem>>, %arg5: memref<1024x128xbf16, #tpu.memory_space<vmem>>, %arg6: memref<640x128xbf16, #tpu.memory_space<vmem>>, %arg7: memref<896x128xbf16, #tpu.memory_space<vmem>>, %arg8: memref<128x128xbf16, #tpu.memory_space<vmem>>, %arg9: memref<128x128xbf16, #tpu.memory_space<vmem>>, %arg10: memref<8x128xf32, #tpu.memory_space<vmem>>, %arg11: memref<1x16x128xf32, #tpu.memory_space<vmem>>, %arg12: memref<32x128xf32, #tpu.memory_space<vmem>>) attributes {dimension_semantics = [#tpu.dimension_semantics<parallel>], iteration_bounds = array<i64: 2>, scalar_prefetch = 1 : i64, scratch_operands = 1 : i64, tpu.core_type = #tpu.core_type<tc>, window_params = [{transform_indices = @transform_0, window_bounds = array<i64: 1, 16, 128>}, {pipeline_mode = #tpu.pipeline_mode<synchronous>, transform_indices = @transform_1, window_bounds = array<i64: 896, 128>}, {pipeline_mode = #tpu.pipeline_mode<synchronous>, transform_indices = @transform_2, window_bounds = array<i64: 896, 128>}, {pipeline_mode = #tpu.pipeline_mode<synchronous>, transform_indices = @transform_3, window_bounds = array<i64: 1024, 128>}, {pipeline_mode = #tpu.pipeline_mode<synchronous>, transform_indices = @transform_4, window_bounds = array<i64: 640, 128>}, {pipeline_mode = #tpu.pipeline_mode<synchronous>, transform_indices = @transform_5, window_bounds = array<i64: 896, 128>}, {pipeline_mode = #tpu.pipeline_mode<synchronous>, transform_indices = @transform_6, window_bounds = array<i64: 128, 128>}, {pipeline_mode = #tpu.pipeline_mode<synchronous>, transform_indices = @transform_7, window_bounds = array<i64: 128, 128>}, {pipeline_mode = #tpu.pipeline_mode<synchronous>, transform_indices = @transform_8, window_bounds = array<i64: 8, 128>}, {transform_indices = @transform_9, window_bounds = array<i64: 1, 16, 128>}]} {
    %0 = arith.index_cast %arg0 : i32 to index
    %1 = memref.load %arg1[%0] : memref<2xi32, #tpu.memory_space<smem>>
    %2 = tpu.iota {dimensions = array<i32: 0>} : vector<16x128xi32>
    %3 = vector.broadcast %1 : i32 to vector<16x128xi32>
    %4 = arith.cmpi slt, %2, %3 : vector<16x128xi32>
    %cst = arith.constant 0.000000e+00 : f32
    %5 = vector.broadcast %cst : f32 to vector<8x128xf32>
    %c0 = arith.constant 0 : index
    %c0_0 = arith.constant 0 : index
    %6 = vector.load %arg12[%c0, %c0_0] : memref<32x128xf32, #tpu.memory_space<vmem>>, vector<8x128xf32>
    tpu.vector_store %arg12[%c0, %c0_0], %5 {strides = array<i32>} : memref<32x128xf32, #tpu.memory_space<vmem>>, vector<8x128xf32>,
    %cst_1 = arith.constant 0.000000e+00 : f32
    %7 = vector.broadcast %cst_1 : f32 to vector<8x128xf32>
    %c24 = arith.constant 24 : index
    %c0_2 = arith.constant 0 : index
    %8 = vector.load %arg12[%c24, %c0_2] : memref<32x128xf32, #tpu.memory_space<vmem>>, vector<8x128xf32>
    tpu.vector_store %arg12[%c24, %c0_2], %7 {strides = array<i32>} : memref<32x128xf32, #tpu.memory_space<vmem>>, vector<8x128xf32>,
    %c0_3 = arith.constant 0 : index
    %c0_4 = arith.constant 0 : index
    %c0_5 = arith.constant 0 : index
    %9 = vector.load %arg2[%c0_3, %c0_4, %c0_5] : memref<1x16x128xbf16, #tpu.memory_space<vmem>>, vector<1x16x128xbf16>
    %10 = vector.shape_cast %9 : vector<1x16x128xbf16> to vector<16x128xbf16>
    %11 = arith.extf %10 : vector<16x128xbf16> to vector<16x128xf32>
    %cst_6 = arith.constant 0.000000e+00 : f32
    %12 = vector.broadcast %cst_6 : f32 to vector<16x128xf32>
    %13 = arith.select %4, %11, %12 : vector<16x128xi1>, vector<16x128xf32>
    %c8 = arith.constant 8 : index
    %c0_7 = arith.constant 0 : index
    %14 = vector.load %arg12[%c8, %c0_7] : memref<32x128xf32, #tpu.memory_space<vmem>>, vector<16x128xf32>
    tpu.vector_store %arg12[%c8, %c0_7], %13 {strides = array<i32>} : memref<32x128xf32, #tpu.memory_space<vmem>>, vector<16x128xf32>,
    %c5 = arith.constant 5 : index
    %c0_8 = arith.constant 0 : index
    %15 = vector.load %arg12[%c5, %c0_8] : memref<32x128xf32, #tpu.memory_space<vmem>>, vector<16x128xf32>
    %c6 = arith.constant 6 : index
    %c0_9 = arith.constant 0 : index
    %16 = vector.load %arg12[%c6, %c0_9] : memref<32x128xf32, #tpu.memory_space<vmem>>, vector<16x128xf32>
    %c7 = arith.constant 7 : index
    %c0_10 = arith.constant 0 : index
    %17 = vector.load %arg12[%c7, %c0_10] : memref<32x128xf32, #tpu.memory_space<vmem>>, vector<16x128xf32>
    %c8_11 = arith.constant 8 : index
    %c0_12 = arith.constant 0 : index
    %18 = vector.load %arg12[%c8_11, %c0_12] : memref<32x128xf32, #tpu.memory_space<vmem>>, vector<16x128xf32>
    %c9 = arith.constant 9 : index
    %c0_13 = arith.constant 0 : index
    %19 = vector.load %arg12[%c9, %c0_13] : memref<32x128xf32, #tpu.memory_space<vmem>>, vector<16x128xf32>
    %c10 = arith.constant 10 : index
    %c0_14 = arith.constant 0 : index
    %20 = vector.load %arg12[%c10, %c0_14] : memref<32x128xf32, #tpu.memory_space<vmem>>, vector<16x128xf32>
    %c11 = arith.constant 11 : index
    %c0_15 = arith.constant 0 : index
    %21 = vector.load %arg12[%c11, %c0_15] : memref<32x128xf32, #tpu.memory_space<vmem>>, vector<16x128xf32>
    %22 = tpu.concatenate %15, %16, %17, %18, %19, %20, %21 in 1 : vector<16x128xf32>, vector<16x128xf32>, vector<16x128xf32>, vector<16x128xf32>, vector<16x128xf32>, vector<16x128xf32>, vector<16x128xf32> -> vector<16x896xf32>
    %c0_16 = arith.constant 0 : index
    %c0_17 = arith.constant 0 : index
    %23 = vector.load %arg3[%c0_16, %c0_17] : memref<896x128xbf16, #tpu.memory_space<vmem>>, vector<896x128xbf16>
    %24 = arith.truncf %22 : vector<16x896xf32> to vector<16x896xbf16>
    %cst_18 = arith.constant dense<0.000000e+00> : vector<16x128xf32>
    %25 = tpu.matmul %24, %23, %cst_18 {dimension_numbers = #tpu.dot_dimension_numbers<[1], [0], [0], [1], [0, 0, 1, 1], [], []>} : vector<16x896xbf16>, vector<896x128xbf16>, vector<16x128xf32> -> vector<16x128xf32>
    %c0_19 = arith.constant 0 : index
    %c0_20 = arith.constant 0 : index
    %26 = vector.load %arg10[%c0_19, %c0_20] : memref<8x128xf32, #tpu.memory_space<vmem>>, vector<1x128xf32>
    %27 = vector.broadcast %26 : vector<1x128xf32> to vector<16x128xf32>
    %28 = arith.addf %25, %27 : vector<16x128xf32>
    %cst_21 = arith.constant 0.000000e+00 : f32
    %29 = vector.broadcast %cst_21 : f32 to vector<16x128xf32>
    %30 = arith.maximumf %28, %29 : vector<16x128xf32>
    %cst_22 = arith.constant 0.000000e+00 : f32
    %31 = vector.broadcast %cst_22 : f32 to vector<16x128xf32>
    %32 = arith.select %4, %30, %31 : vector<16x128xi1>, vector<16x128xf32>
    %c8_23 = arith.constant 8 : index
    %c0_24 = arith.constant 0 : index
    %33 = vector.load %arg12[%c8_23, %c0_24] : memref<32x128xf32, #tpu.memory_space<vmem>>, vector<16x128xf32>
    tpu.vector_store %arg12[%c8_23, %c0_24], %32 {strides = array<i32>} : memref<32x128xf32, #tpu.memory_space<vmem>>, vector<16x128xf32>,
    %c5_25 = arith.constant 5 : index
    %c0_26 = arith.constant 0 : index
    %34 = vector.load %arg12[%c5_25, %c0_26] : memref<32x128xf32, #tpu.memory_space<vmem>>, vector<16x128xf32>
    %c6_27 = arith.constant 6 : index
    %c0_28 = arith.constant 0 : index
    %35 = vector.load %arg12[%c6_27, %c0_28] : memref<32x128xf32, #tpu.memory_space<vmem>>, vector<16x128xf32>
    %c7_29 = arith.constant 7 : index
    %c0_30 = arith.constant 0 : index
    %36 = vector.load %arg12[%c7_29, %c0_30] : memref<32x128xf32, #tpu.memory_space<vmem>>, vector<16x128xf32>
    %c8_31 = arith.constant 8 : index
    %c0_32 = arith.constant 0 : index
    %37 = vector.load %arg12[%c8_31, %c0_32] : memref<32x128xf32, #tpu.memory_space<vmem>>, vector<16x128xf32>
    %c9_33 = arith.constant 9 : index
    %c0_34 = arith.constant 0 : index
    %38 = vector.load %arg12[%c9_33, %c0_34] : memref<32x128xf32, #tpu.memory_space<vmem>>, vector<16x128xf32>
    %c10_35 = arith.constant 10 : index
    %c0_36 = arith.constant 0 : index
    %39 = vector.load %arg12[%c10_35, %c0_36] : memref<32x128xf32, #tpu.memory_space<vmem>>, vector<16x128xf32>
    %c11_37 = arith.constant 11 : index
    %c0_38 = arith.constant 0 : index
    %40 = vector.load %arg12[%c11_37, %c0_38] : memref<32x128xf32, #tpu.memory_space<vmem>>, vector<16x128xf32>
    %41 = tpu.concatenate %34, %35, %36, %37, %38, %39, %40 in 1 : vector<16x128xf32>, vector<16x128xf32>, vector<16x128xf32>, vector<16x128xf32>, vector<16x128xf32>, vector<16x128xf32>, vector<16x128xf32> -> vector<16x896xf32>
    %c0_39 = arith.constant 0 : index
    %c0_40 = arith.constant 0 : index
    %42 = vector.load %arg4[%c0_39, %c0_40] : memref<896x128xbf16, #tpu.memory_space<vmem>>, vector<896x128xbf16>
    %43 = arith.truncf %41 : vector<16x896xf32> to vector<16x896xbf16>
    %cst_41 = arith.constant dense<0.000000e+00> : vector<16x128xf32>
    %44 = tpu.matmul %43, %42, %cst_41 {dimension_numbers = #tpu.dot_dimension_numbers<[1], [0], [0], [1], [0, 0, 1, 1], [], []>} : vector<16x896xbf16>, vector<896x128xbf16>, vector<16x128xf32> -> vector<16x128xf32>
    %c1 = arith.constant 1 : index
    %c0_42 = arith.constant 0 : index
    %45 = vector.load %arg10[%c1, %c0_42] : memref<8x128xf32, #tpu.memory_space<vmem>>, vector<1x128xf32>
    %46 = vector.broadcast %45 : vector<1x128xf32> to vector<16x128xf32>
    %47 = arith.addf %44, %46 : vector<16x128xf32>
    %cst_43 = arith.constant 0.000000e+00 : f32
    %48 = vector.broadcast %cst_43 : f32 to vector<16x128xf32>
    %49 = arith.maximumf %47, %48 : vector<16x128xf32>
    %cst_44 = arith.constant 0.000000e+00 : f32
    %50 = vector.broadcast %cst_44 : f32 to vector<16x128xf32>
    %51 = arith.select %4, %49, %50 : vector<16x128xi1>, vector<16x128xf32>
    %c8_45 = arith.constant 8 : index
    %c0_46 = arith.constant 0 : index
    %52 = vector.load %arg12[%c8_45, %c0_46] : memref<32x128xf32, #tpu.memory_space<vmem>>, vector<16x128xf32>
    tpu.vector_store %arg12[%c8_45, %c0_46], %51 {strides = array<i32>} : memref<32x128xf32, #tpu.memory_space<vmem>>, vector<16x128xf32>,
    %c5_47 = arith.constant 5 : index
    %c0_48 = arith.constant 0 : index
    %53 = vector.load %arg12[%c5_47, %c0_48] : memref<32x128xf32, #tpu.memory_space<vmem>>, vector<16x128xf32>
    %c6_49 = arith.constant 6 : index
    %c0_50 = arith.constant 0 : index
    %54 = vector.load %arg12[%c6_49, %c0_50] : memref<32x128xf32, #tpu.memory_space<vmem>>, vector<16x128xf32>
    %c7_51 = arith.constant 7 : index
    %c0_52 = arith.constant 0 : index
    %55 = vector.load %arg12[%c7_51, %c0_52] : memref<32x128xf32, #tpu.memory_space<vmem>>, vector<16x128xf32>
    %c8_53 = arith.constant 8 : index
    %c0_54 = arith.constant 0 : index
    %56 = vector.load %arg12[%c8_53, %c0_54] : memref<32x128xf32, #tpu.memory_space<vmem>>, vector<16x128xf32>
    %c9_55 = arith.constant 9 : index
    %c0_56 = arith.constant 0 : index
    %57 = vector.load %arg12[%c9_55, %c0_56] : memref<32x128xf32, #tpu.memory_space<vmem>>, vector<16x128xf32>
    %c10_57 = arith.constant 10 : index
    %c0_58 = arith.constant 0 : index
    %58 = vector.load %arg12[%c10_57, %c0_58] : memref<32x128xf32, #tpu.memory_space<vmem>>, vector<16x128xf32>
    %c11_59 = arith.constant 11 : index
    %c0_60 = arith.constant 0 : index
    %59 = vector.load %arg12[%c11_59, %c0_60] : memref<32x128xf32, #tpu.memory_space<vmem>>, vector<16x128xf32>
    %cst_61 = arith.constant 0.000000e+00 : f32
    %60 = vector.broadcast %cst_61 : f32 to vector<16x128xf32>
    %61 = arith.select %4, %30, %60 : vector<16x128xi1>, vector<16x128xf32>
    %62 = tpu.concatenate %53, %54, %55, %56, %57, %58, %59, %61 in 1 : vector<16x128xf32>, vector<16x128xf32>, vector<16x128xf32>, vector<16x128xf32>, vector<16x128xf32>, vector<16x128xf32>, vector<16x128xf32>, vector<16x128xf32> -> vector<16x1024xf32>
    %c0_62 = arith.constant 0 : index
    %c0_63 = arith.constant 0 : index
    %63 = vector.load %arg5[%c0_62, %c0_63] : memref<1024x128xbf16, #tpu.memory_space<vmem>>, vector<1024x128xbf16>
    %64 = arith.truncf %62 : vector<16x1024xf32> to vector<16x1024xbf16>
    %cst_64 = arith.constant dense<0.000000e+00> : vector<16x128xf32>
    %65 = tpu.matmul %64, %63, %cst_64 {dimension_numbers = #tpu.dot_dimension_numbers<[1], [0], [0], [1], [0, 0, 1, 1], [], []>} : vector<16x1024xbf16>, vector<1024x128xbf16>, vector<16x128xf32> -> vector<16x128xf32>
    %c2 = arith.constant 2 : index
    %c0_65 = arith.constant 0 : index
    %66 = vector.load %arg10[%c2, %c0_65] : memref<8x128xf32, #tpu.memory_space<vmem>>, vector<1x128xf32>
    %67 = vector.broadcast %66 : vector<1x128xf32> to vector<16x128xf32>
    %68 = arith.addf %65, %67 : vector<16x128xf32>
    %cst_66 = arith.constant 0.000000e+00 : f32
    %69 = vector.broadcast %cst_66 : f32 to vector<16x128xf32>
    %70 = arith.maximumf %68, %69 : vector<16x128xf32>
    %cst_67 = arith.constant 0.000000e+00 : f32
    %71 = vector.broadcast %cst_67 : f32 to vector<16x128xf32>
    %72 = arith.select %4, %70, %71 : vector<16x128xi1>, vector<16x128xf32>
    %c8_68 = arith.constant 8 : index
    %c0_69 = arith.constant 0 : index
    %73 = vector.load %arg12[%c8_68, %c0_69] : memref<32x128xf32, #tpu.memory_space<vmem>>, vector<16x128xf32>
    tpu.vector_store %arg12[%c8_68, %c0_69], %72 {strides = array<i32>} : memref<32x128xf32, #tpu.memory_space<vmem>>, vector<16x128xf32>,
    %c6_70 = arith.constant 6 : index
    %c0_71 = arith.constant 0 : index
    %74 = vector.load %arg12[%c6_70, %c0_71] : memref<32x128xf32, #tpu.memory_space<vmem>>, vector<16x128xf32>
    %c7_72 = arith.constant 7 : index
    %c0_73 = arith.constant 0 : index
    %75 = vector.load %arg12[%c7_72, %c0_73] : memref<32x128xf32, #tpu.memory_space<vmem>>, vector<16x128xf32>
    %c8_74 = arith.constant 8 : index
    %c0_75 = arith.constant 0 : index
    %76 = vector.load %arg12[%c8_74, %c0_75] : memref<32x128xf32, #tpu.memory_space<vmem>>, vector<16x128xf32>
    %c9_76 = arith.constant 9 : index
    %c0_77 = arith.constant 0 : index
    %77 = vector.load %arg12[%c9_76, %c0_77] : memref<32x128xf32, #tpu.memory_space<vmem>>, vector<16x128xf32>
    %c10_78 = arith.constant 10 : index
    %c0_79 = arith.constant 0 : index
    %78 = vector.load %arg12[%c10_78, %c0_79] : memref<32x128xf32, #tpu.memory_space<vmem>>, vector<16x128xf32>
    %79 = tpu.concatenate %74, %75, %76, %77, %78 in 1 : vector<16x128xf32>, vector<16x128xf32>, vector<16x128xf32>, vector<16x128xf32>, vector<16x128xf32> -> vector<16x640xf32>
    %c0_80 = arith.constant 0 : index
    %c0_81 = arith.constant 0 : index
    %80 = vector.load %arg6[%c0_80, %c0_81] : memref<640x128xbf16, #tpu.memory_space<vmem>>, vector<640x128xbf16>
    %81 = arith.truncf %79 : vector<16x640xf32> to vector<16x640xbf16>
    %cst_82 = arith.constant dense<0.000000e+00> : vector<16x128xf32>
    %82 = tpu.matmul %81, %80, %cst_82 {dimension_numbers = #tpu.dot_dimension_numbers<[1], [0], [0], [1], [0, 0, 1, 1], [], []>} : vector<16x640xbf16>, vector<640x128xbf16>, vector<16x128xf32> -> vector<16x128xf32>
    %c3 = arith.constant 3 : index
    %c0_83 = arith.constant 0 : index
    %83 = vector.load %arg10[%c3, %c0_83] : memref<8x128xf32, #tpu.memory_space<vmem>>, vector<1x128xf32>
    %84 = vector.broadcast %83 : vector<1x128xf32> to vector<16x128xf32>
    %85 = arith.addf %82, %84 : vector<16x128xf32>
    %cst_84 = arith.constant 0.000000e+00 : f32
    %86 = vector.broadcast %cst_84 : f32 to vector<16x128xf32>
    %87 = arith.maximumf %85, %86 : vector<16x128xf32>
    %cst_85 = arith.constant 0.000000e+00 : f32
    %88 = vector.broadcast %cst_85 : f32 to vector<16x128xf32>
    %89 = arith.select %4, %87, %88 : vector<16x128xi1>, vector<16x128xf32>
    %c8_86 = arith.constant 8 : index
    %c0_87 = arith.constant 0 : index
    %90 = vector.load %arg12[%c8_86, %c0_87] : memref<32x128xf32, #tpu.memory_space<vmem>>, vector<16x128xf32>
    tpu.vector_store %arg12[%c8_86, %c0_87], %89 {strides = array<i32>} : memref<32x128xf32, #tpu.memory_space<vmem>>, vector<16x128xf32>,
    %c6_88 = arith.constant 6 : index
    %c0_89 = arith.constant 0 : index
    %91 = vector.load %arg12[%c6_88, %c0_89] : memref<32x128xf32, #tpu.memory_space<vmem>>, vector<16x128xf32>
    %c7_90 = arith.constant 7 : index
    %c0_91 = arith.constant 0 : index
    %92 = vector.load %arg12[%c7_90, %c0_91] : memref<32x128xf32, #tpu.memory_space<vmem>>, vector<16x128xf32>
    %c8_92 = arith.constant 8 : index
    %c0_93 = arith.constant 0 : index
    %93 = vector.load %arg12[%c8_92, %c0_93] : memref<32x128xf32, #tpu.memory_space<vmem>>, vector<16x128xf32>
    %c9_94 = arith.constant 9 : index
    %c0_95 = arith.constant 0 : index
    %94 = vector.load %arg12[%c9_94, %c0_95] : memref<32x128xf32, #tpu.memory_space<vmem>>, vector<16x128xf32>
    %c10_96 = arith.constant 10 : index
    %c0_97 = arith.constant 0 : index
    %95 = vector.load %arg12[%c10_96, %c0_97] : memref<32x128xf32, #tpu.memory_space<vmem>>, vector<16x128xf32>
    %cst_98 = arith.constant 0.000000e+00 : f32
    %96 = vector.broadcast %cst_98 : f32 to vector<16x128xf32>
    %97 = arith.select %4, %30, %96 : vector<16x128xi1>, vector<16x128xf32>
    %cst_99 = arith.constant 0.000000e+00 : f32
    %98 = vector.broadcast %cst_99 : f32 to vector<16x128xf32>
    %99 = arith.select %4, %70, %98 : vector<16x128xi1>, vector<16x128xf32>
    %100 = tpu.concatenate %91, %92, %93, %94, %95, %97, %99 in 1 : vector<16x128xf32>, vector<16x128xf32>, vector<16x128xf32>, vector<16x128xf32>, vector<16x128xf32>, vector<16x128xf32>, vector<16x128xf32> -> vector<16x896xf32>
    %c0_100 = arith.constant 0 : index
    %c0_101 = arith.constant 0 : index
    %101 = vector.load %arg7[%c0_100, %c0_101] : memref<896x128xbf16, #tpu.memory_space<vmem>>, vector<896x128xbf16>
    %102 = arith.truncf %100 : vector<16x896xf32> to vector<16x896xbf16>
    %cst_102 = arith.constant dense<0.000000e+00> : vector<16x128xf32>
    %103 = tpu.matmul %102, %101, %cst_102 {dimension_numbers = #tpu.dot_dimension_numbers<[1], [0], [0], [1], [0, 0, 1, 1], [], []>} : vector<16x896xbf16>, vector<896x128xbf16>, vector<16x128xf32> -> vector<16x128xf32>
    %c4 = arith.constant 4 : index
    %c0_103 = arith.constant 0 : index
    %104 = vector.load %arg10[%c4, %c0_103] : memref<8x128xf32, #tpu.memory_space<vmem>>, vector<1x128xf32>
    %105 = vector.broadcast %104 : vector<1x128xf32> to vector<16x128xf32>
    %106 = arith.addf %103, %105 : vector<16x128xf32>
    %cst_104 = arith.constant 0.000000e+00 : f32
    %107 = vector.broadcast %cst_104 : f32 to vector<16x128xf32>
    %108 = arith.maximumf %106, %107 : vector<16x128xf32>
    %cst_105 = arith.constant 0.000000e+00 : f32
    %109 = vector.broadcast %cst_105 : f32 to vector<16x128xf32>
    %110 = arith.select %4, %108, %109 : vector<16x128xi1>, vector<16x128xf32>
    %c0_106 = arith.constant 0 : index
    %c0_107 = arith.constant 0 : index
    %111 = vector.load %arg8[%c0_106, %c0_107] : memref<128x128xbf16, #tpu.memory_space<vmem>>, vector<128x128xbf16>
    %112 = arith.truncf %110 : vector<16x128xf32> to vector<16x128xbf16>
    %cst_108 = arith.constant dense<0.000000e+00> : vector<16x128xf32>
    %113 = tpu.matmul %112, %111, %cst_108 {dimension_numbers = #tpu.dot_dimension_numbers<[1], [0], [0], [1], [0, 0, 1, 1], [], []>} : vector<16x128xbf16>, vector<128x128xbf16>, vector<16x128xf32> -> vector<16x128xf32>
    %c5_109 = arith.constant 5 : index
    %c0_110 = arith.constant 0 : index
    %114 = vector.load %arg10[%c5_109, %c0_110] : memref<8x128xf32, #tpu.memory_space<vmem>>, vector<1x128xf32>
    %115 = vector.broadcast %114 : vector<1x128xf32> to vector<16x128xf32>
    %116 = arith.addf %113, %115 : vector<16x128xf32>
    %cst_111 = arith.constant 0.000000e+00 : f32
    %117 = vector.broadcast %cst_111 : f32 to vector<16x128xf32>
    %118 = arith.maximumf %116, %117 : vector<16x128xf32>
    %c0_112 = arith.constant 0 : index
    %c0_113 = arith.constant 0 : index
    %119 = vector.load %arg9[%c0_112, %c0_113] : memref<128x128xbf16, #tpu.memory_space<vmem>>, vector<128x128xbf16>
    %120 = arith.truncf %118 : vector<16x128xf32> to vector<16x128xbf16>
    %cst_114 = arith.constant dense<0.000000e+00> : vector<16x128xf32>
    %121 = tpu.matmul %120, %119, %cst_114 {dimension_numbers = #tpu.dot_dimension_numbers<[1], [0], [0], [1], [0, 0, 1, 1], [], []>} : vector<16x128xbf16>, vector<128x128xbf16>, vector<16x128xf32> -> vector<16x128xf32>
    %c6_115 = arith.constant 6 : index
    %c0_116 = arith.constant 0 : index
    %122 = vector.load %arg10[%c6_115, %c0_116] : memref<8x128xf32, #tpu.memory_space<vmem>>, vector<1x128xf32>
    %123 = vector.broadcast %122 : vector<1x128xf32> to vector<16x128xf32>
    %124 = arith.addf %121, %123 : vector<16x128xf32>
    %125 = tpu.iota {dimensions = array<i32: 1>} : vector<16x128xi32>
    %c29_i32 = arith.constant 29 : i32
    %126 = vector.broadcast %c29_i32 : i32 to vector<16x128xi32>
    %127 = arith.cmpi slt, %125, %126 : vector<16x128xi32>
    %cst_117 = arith.constant -1.000000e+30 : f32
    %128 = vector.broadcast %cst_117 : f32 to vector<16x128xf32>
    %129 = arith.select %127, %124, %128 : vector<16x128xi1>, vector<16x128xf32>
    %cst_118 = arith.constant dense<0xFF800000> : vector<16xf32>
    %130 = vector.multi_reduction <maximumf>, %129, %cst_118 [1] : vector<16x128xf32> to vector<16xf32>
    %131 = vector.shape_cast %130 : vector<16xf32> to vector<16x1xf32>
    %132 = vector.broadcast %131 : vector<16x1xf32> to vector<16x128xf32>
    %133 = arith.subf %129, %132 : vector<16x128xf32>
    %134 = math.exp %133 : vector<16x128xf32>
    %cst_119 = arith.constant dense<0.000000e+00> : vector<16xf32>
    %135 = vector.multi_reduction <add>, %134, %cst_119 [1] : vector<16x128xf32> to vector<16xf32>
    %136 = vector.shape_cast %135 : vector<16xf32> to vector<16x1xf32>
    %137 = math.log %136 : vector<16x1xf32>
    %138 = arith.addf %137, %131 : vector<16x1xf32>
    %139 = vector.broadcast %138 : vector<16x1xf32> to vector<16x128xf32>
    %140 = arith.subf %129, %139 : vector<16x128xf32>
    %c0_120 = arith.constant 0 : index
    %c0_121 = arith.constant 0 : index
    %c0_122 = arith.constant 0 : index
    %141 = vector.load %arg11[%c0_120, %c0_121, %c0_122] : memref<1x16x128xf32, #tpu.memory_space<vmem>>, vector<1x16x128xf32>
    %142 = vector.shape_cast %141 : vector<1x16x128xf32> to vector<16x128xf32>
    %143 = vector.shape_cast %140 : vector<16x128xf32> to vector<1x16x128xf32>
    tpu.vector_store %arg11[%c0_120, %c0_121, %c0_122], %143 {strides = array<i32>} : memref<1x16x128xf32, #tpu.memory_space<vmem>>, vector<1x16x128xf32>,
    return
  }
  func.func @transform_0(%arg0: i32, %arg1: memref<2xi32, #tpu.memory_space<smem>>) -> (i32, i32, i32) {
    %c0_i32 = arith.constant 0 : i32
    %c0_i32_0 = arith.constant 0 : i32
    %c0_i32_1 = arith.constant 0 : i32
    return %arg0, %c0_i32, %c0_i32_0 : i32, i32, i32
  }
  func.func @transform_1(%arg0: i32, %arg1: memref<2xi32, #tpu.memory_space<smem>>) -> (i32, i32) {
    %c0_i32 = arith.constant 0 : i32
    %c0_i32_0 = arith.constant 0 : i32
    %c0_i32_1 = arith.constant 0 : i32
    return %c0_i32, %c0_i32_0 : i32, i32
  }
  func.func @transform_2(%arg0: i32, %arg1: memref<2xi32, #tpu.memory_space<smem>>) -> (i32, i32) {
    %c0_i32 = arith.constant 0 : i32
    %c0_i32_0 = arith.constant 0 : i32
    %c0_i32_1 = arith.constant 0 : i32
    return %c0_i32, %c0_i32_0 : i32, i32
  }
  func.func @transform_3(%arg0: i32, %arg1: memref<2xi32, #tpu.memory_space<smem>>) -> (i32, i32) {
    %c0_i32 = arith.constant 0 : i32
    %c0_i32_0 = arith.constant 0 : i32
    %c0_i32_1 = arith.constant 0 : i32
    return %c0_i32, %c0_i32_0 : i32, i32
  }
  func.func @transform_4(%arg0: i32, %arg1: memref<2xi32, #tpu.memory_space<smem>>) -> (i32, i32) {
    %c0_i32 = arith.constant 0 : i32
    %c0_i32_0 = arith.constant 0 : i32
    %c0_i32_1 = arith.constant 0 : i32
    return %c0_i32, %c0_i32_0 : i32, i32
  }
  func.func @transform_5(%arg0: i32, %arg1: memref<2xi32, #tpu.memory_space<smem>>) -> (i32, i32) {
    %c0_i32 = arith.constant 0 : i32
    %c0_i32_0 = arith.constant 0 : i32
    %c0_i32_1 = arith.constant 0 : i32
    return %c0_i32, %c0_i32_0 : i32, i32
  }
  func.func @transform_6(%arg0: i32, %arg1: memref<2xi32, #tpu.memory_space<smem>>) -> (i32, i32) {
    %c0_i32 = arith.constant 0 : i32
    %c0_i32_0 = arith.constant 0 : i32
    %c0_i32_1 = arith.constant 0 : i32
    return %c0_i32, %c0_i32_0 : i32, i32
  }
  func.func @transform_7(%arg0: i32, %arg1: memref<2xi32, #tpu.memory_space<smem>>) -> (i32, i32) {
    %c0_i32 = arith.constant 0 : i32
    %c0_i32_0 = arith.constant 0 : i32
    %c0_i32_1 = arith.constant 0 : i32
    return %c0_i32, %c0_i32_0 : i32, i32
  }
  func.func @transform_8(%arg0: i32, %arg1: memref<2xi32, #tpu.memory_space<smem>>) -> (i32, i32) {
    %c0_i32 = arith.constant 0 : i32
    %c0_i32_0 = arith.constant 0 : i32
    %c0_i32_1 = arith.constant 0 : i32
    return %c0_i32, %c0_i32_0 : i32, i32
  }
  func.func @transform_9(%arg0: i32, %arg1: memref<2xi32, #tpu.memory_space<smem>>) -> (i32, i32, i32) {
    %c0_i32 = arith.constant 0 : i32
    %c0_i32_0 = arith.constant 0 : i32
    %c0_i32_1 = arith.constant 0 : i32
    return %arg0, %c0_i32, %c0_i32_0 : i32, i32, i32
  }
}

</mosaic_0001>

<llo_original>
// kernel: tpu_custom_call.1
$region0: #{tpu_custom_call.1}
  #allocation0 [shape = 'u32[]', space=smem, size = 0x4, offset = 0x4, fixed_abs, tag = 'smem constant byte address 0x4 - core index']
  #allocation1 [shape = 'u32[72,128]{1,0:T(1,128)}', space=vmem, size = 0x9000, scoped, tag = 'internal scratch']
  #allocation2 [shape = 'f32[32,128]{1,0:T(8,128)}', space=vmem, size = 0x4000, scoped, tag = 'scratch operand']
  #allocation3 [shape = 's32[1]{0}', space=sflag, size = 0x4, scoped, tag = 'scoped memory for tpu_custom_call.1']
  #allocation4 [shape = 'u8[512]{0}', space=smem, size = 0x200, scoped, tag = 'prefetched SMEM operand 0']
  %s0 = inlined_call_operand.hbm [shape: s32[2], index: 0, kind: input, shape index: {}]
  %s1 = inlined_call_operand.hbm [shape: bf16[2,16,128], index: 1, kind: input, shape index: {}]
  %s2 = inlined_call_operand.hbm [shape: bf16[896,128], index: 2, kind: input, shape index: {}]
  %s3 = inlined_call_operand.hbm [shape: bf16[896,128], index: 3, kind: input, shape index: {}]
  %s4 = inlined_call_operand.hbm [shape: bf16[1024,128], index: 4, kind: input, shape index: {}]
  %s5 = inlined_call_operand.hbm [shape: bf16[640,128], index: 5, kind: input, shape index: {}]
  %s6 = inlined_call_operand.hbm [shape: bf16[896,128], index: 6, kind: input, shape index: {}]
  %s7 = inlined_call_operand.hbm [shape: bf16[128,128], index: 7, kind: input, shape index: {}]
  %s8 = inlined_call_operand.hbm [shape: bf16[128,128], index: 8, kind: input, shape index: {}]
  %s9 = inlined_call_operand.vmem [shape: f32[8,128], index: 9, kind: input, shape index: {}]
  %s10 = inlined_call_operand.hbm [shape: f32[2,16,128], index: 10, kind: output, shape index: {}]
  %s11 = sld [smem:[#allocation0]]
  $region101: #{tpu_custom_call.1} parent=0
    _
  %s13 = ssub.s32 1, %s11
  %s14 = scalar_select 0, %s13, %s11
  %s16 = sshll.u32 %s0, 4
  %s17 = int_to_ptr.hbm [resolvable:$true] %s16
  %19 = dma.hbm_to_smem %s17, 16, [#allocation4], [#allocation3]
  %21 = dma.done [#allocation3], 16
  %22 = sfence
  $region1: #{tpu_custom_call.1} parent=0
    #allocation5 [shape = 'u8[8192]{0}', space=vmem, size = 0x2000, scoped, tag = 'input window, operand 1']
    #allocation6 [shape = 's32[2]{0}', space=sflag, size = 0x8, scoped, tag = 'scoped memory for tpu_custom_call.1']
    #allocation7 [shape = 's32[2]{0}', space=sflag, size = 0x8, scoped, tag = 'scoped memory for tpu_custom_call.1']
    #allocation8 [shape = 'u8[229376]{0}', space=vmem, size = 0x38000, scoped, tag = 'input window, operand 2, single buffered']
    #allocation9 [shape = 's32[1]{0}', space=sflag, size = 0x4, scoped, tag = 'scoped memory for tpu_custom_call.1']
    #allocation10 [shape = 'u8[229376]{0}', space=vmem, size = 0x38000, scoped, tag = 'input window, operand 3, single buffered']
    #allocation11 [shape = 'u8[262144]{0}', space=vmem, size = 0x40000, scoped, tag = 'input window, operand 4, single buffered']
    #allocation12 [shape = 's32[1]{0}', space=sflag, size = 0x4, scoped, tag = 'scoped memory for tpu_custom_call.1']
    #allocation13 [shape = 'u8[163840]{0}', space=vmem, size = 0x28000, scoped, tag = 'input window, operand 5, single buffered']
    #allocation14 [shape = 'u8[229376]{0}', space=vmem, size = 0x38000, scoped, tag = 'input window, operand 6, single buffered']
    #allocation15 [shape = 's32[1]{0}', space=sflag, size = 0x4, scoped, tag = 'scoped memory for tpu_custom_call.1']
    #allocation16 [shape = 'u8[32768]{0}', space=vmem, size = 0x8000, scoped, tag = 'input window, operand 7, single buffered']
    #allocation17 [shape = 'u8[32768]{0}', space=vmem, size = 0x8000, scoped, tag = 'input window, operand 8, single buffered']
    #allocation18 [shape = 's32[1]{0}', space=sflag, size = 0x4, scoped, tag = 'scoped memory for tpu_custom_call.1']
    #allocation19 [shape = 'u8[16384]{0}', space=vmem, size = 0x4000, scoped, tag = 'output window, operand 0']
    %23 = vsyncpa [#allocation6], 0
    %s24 = scalar_lea.sflag [#allocation6], 1
    %25 = vsyncpa %s24, 0
    %26 = vsyncpa [#allocation9], 0
    %27 = vsyncpa [#allocation12], 0
    %28 = vsyncpa [#allocation15], 0
    %29 = vsyncpa [#allocation18], 0
    %30 = vsyncpa [#allocation7], 0
    %s31 = scalar_lea.sflag [#allocation7], 1
    %32 = vsyncpa %s31, 0
    loop: start=0, step=1, limit=4
    $region2: #{tpu_custom_call.1} parent=1 // loop_pre_header
      _
    $region3: #{tpu_custom_call.1} parent=1 // loop_header
      %s34 = sphi 0, %s38
      %p35 = scmp.ge.s32.totalorder %s34, 4
      %s44 = sphi 0, %s46
      %s47 = sphi 0, %s44
      %s48 = sphi 0, %s47
      %s64 = sphi 0, %s48
      %s68 = sphi 0, %s68
      %s70 = sphi 0, %s68
      %s71 = sphi 0, %s70
      %s85 = sphi 0, %s71
      %s89 = sphi 0, %s89
      %s91 = sphi 0, %s89
      %s92 = sphi 0, %s91
      %s106 = sphi 0, %s92
      %s110 = sphi 0, %s110
      %s112 = sphi 0, %s110
      %s113 = sphi 0, %s112
      %s127 = sphi 0, %s113
      %s131 = sphi 0, %s131
      %s133 = sphi 0, %s131
      %s134 = sphi 0, %s133
      %s148 = sphi 0, %s134
      %s152 = sphi 0, %s152
      %s154 = sphi 0, %s152
      %s155 = sphi 0, %s154
      %s169 = sphi 0, %s155
      %s173 = sphi 0, %s173
      %s175 = sphi 0, %s173
      %s176 = sphi 0, %s175
      %s190 = sphi 0, %s176
      %s194 = sphi 0, %s194
      %s196 = sphi 0, %s194
      %s197 = sphi 0, %s196
      %s211 = sphi 0, %s197
      %s215 = sphi 0, %s215
      %s217 = sphi 0, %s215
      %s218 = sphi 0, %s217
      %s232 = sphi 0, %s218
      %s238 = sphi 0, %s240
      %s241 = sphi 0, %s238
      %s242 = sphi 0, %s241
      %s258 = sphi 0, %s242
    $region4: #{tpu_custom_call.1} parent=1 // loop_header_branch
      %37 = sbr.rel (%p35) target = $region8
    $region5: #{tpu_custom_call.1} parent=1 // loop_body
      %s39 = ssub.s32 %s34, 1
      %s40 = ssub.s32 %s34, 2
      %s41 = sadd.s32 %s34, 1
      %s42 = ssub.s32 %s34, %s41
      %p43 = scmp.eq.s32.totalorder %s42, 0
      %s45 = sadd.s32 %s44, 1
      %s46 = scalar_select %p43, %s44, %s45
      %p49 = pneg %p43
      %p50 = scmp.eq.s32.totalorder %s34, 1
      %p51 = por %p49, %p50
      %p52 = scmp.ne.s32.totalorder %s44, %s47
      %p53 = scmp.eq.s32.totalorder %s34, 0
      %p54 = por %p52, %p53
      %p55 = scmp.ne.s32.totalorder %s44, %s47
      %p56 = scmp.eq.s32.totalorder %s39, 1
      %p57 = por %p55, %p56
      %p58 = scmp.ne.s32.totalorder %s47, %s48
      %p59 = scmp.eq.s32.totalorder %s39, 0
      %p60 = por %p58, %p59
      %p61 = scmp.ne.s32.totalorder %s47, %s48
      %p62 = scmp.eq.s32.totalorder %s40, 1
      %p63 = por %p61, %p62
      %p65 = scmp.ne.s32.totalorder %s48, %s64
      %p66 = scmp.eq.s32.totalorder %s40, 0
      %p67 = por %p65, %p66
      %s69 = sadd.s32 %s68, 1
      %p72 = scmp.eq.s32.totalorder %s34, 1
      %p73 = scmp.ne.s32.totalorder %s68, %s70
      %p74 = scmp.eq.s32.totalorder %s34, 0
      %p75 = por %p73, %p74
      %p76 = scmp.ne.s32.totalorder %s68, %s70
      %p77 = scmp.eq.s32.totalorder %s39, 1
      %p78 = por %p76, %p77
      %p79 = scmp.ne.s32.totalorder %s70, %s71
      %p80 = scmp.eq.s32.totalorder %s39, 0
      %p81 = por %p79, %p80
      %p82 = scmp.ne.s32.totalorder %s70, %s71
      %p83 = scmp.eq.s32.totalorder %s40, 1
      %p84 = por %p82, %p83
      %p86 = scmp.ne.s32.totalorder %s71, %s85
      %p87 = scmp.eq.s32.totalorder %s40, 0
      %p88 = por %p86, %p87
      %s90 = sadd.s32 %s89, 1
      %p93 = scmp.eq.s32.totalorder %s34, 1
      %p94 = scmp.ne.s32.totalorder %s89, %s91
      %p95 = scmp.eq.s32.totalorder %s34, 0
      %p96 = por %p94, %p95
      %p97 = scmp.ne.s32.totalorder %s89, %s91
      %p98 = scmp.eq.s32.totalorder %s39, 1
      %p99 = por %p97, %p98
      %p100 = scmp.ne.s32.totalorder %s91, %s92
      %p101 = scmp.eq.s32.totalorder %s39, 0
      %p102 = por %p100, %p101
      %p103 = scmp.ne.s32.totalorder %s91, %s92
      %p104 = scmp.eq.s32.totalorder %s40, 1
      %p105 = por %p103, %p104
      %p107 = scmp.ne.s32.totalorder %s92, %s106
      %p108 = scmp.eq.s32.totalorder %s40, 0
      %p109 = por %p107, %p108
      %s111 = sadd.s32 %s110, 1
      %p114 = scmp.eq.s32.totalorder %s34, 1
      %p115 = scmp.ne.s32.totalorder %s110, %s112
      %p116 = scmp.eq.s32.totalorder %s34, 0
      %p117 = por %p115, %p116
      %p118 = scmp.ne.s32.totalorder %s110, %s112
      %p119 = scmp.eq.s32.totalorder %s39, 1
      %p120 = por %p118, %p119
      %p121 = scmp.ne.s32.totalorder %s112, %s113
      %p122 = scmp.eq.s32.totalorder %s39, 0
      %p123 = por %p121, %p122
      %p124 = scmp.ne.s32.totalorder %s112, %s113
      %p125 = scmp.eq.s32.totalorder %s40, 1
      %p126 = por %p124, %p125
      %p128 = scmp.ne.s32.totalorder %s113, %s127
      %p129 = scmp.eq.s32.totalorder %s40, 0
      %p130 = por %p128, %p129
      %s132 = sadd.s32 %s131, 1
      %p135 = scmp.eq.s32.totalorder %s34, 1
      %p136 = scmp.ne.s32.totalorder %s131, %s133
      %p137 = scmp.eq.s32.totalorder %s34, 0
      %p138 = por %p136, %p137
      %p139 = scmp.ne.s32.totalorder %s131, %s133
      %p140 = scmp.eq.s32.totalorder %s39, 1
      %p141 = por %p139, %p140
      %p142 = scmp.ne.s32.totalorder %s133, %s134
      %p143 = scmp.eq.s32.totalorder %s39, 0
      %p144 = por %p142, %p143
      %p145 = scmp.ne.s32.totalorder %s133, %s134
      %p146 = scmp.eq.s32.totalorder %s40, 1
      %p147 = por %p145, %p146
      %p149 = scmp.ne.s32.totalorder %s134, %s148
      %p150 = scmp.eq.s32.totalorder %s40, 0
      %p151 = por %p149, %p150
      %s153 = sadd.s32 %s152, 1
      %p156 = scmp.eq.s32.totalorder %s34, 1
      %p157 = scmp.ne.s32.totalorder %s152, %s154
      %p158 = scmp.eq.s32.totalorder %s34, 0
      %p159 = por %p157, %p158
      %p160 = scmp.ne.s32.totalorder %s152, %s154
      %p161 = scmp.eq.s32.totalorder %s39, 1
      %p162 = por %p160, %p161
      %p163 = scmp.ne.s32.totalorder %s154, %s155
      %p164 = scmp.eq.s32.totalorder %s39, 0
      %p165 = por %p163, %p164
      %p166 = scmp.ne.s32.totalorder %s154, %s155
      %p167 = scmp.eq.s32.totalorder %s40, 1
      %p168 = por %p166, %p167
      %p170 = scmp.ne.s32.totalorder %s155, %s169
      %p171 = scmp.eq.s32.totalorder %s40, 0
      %p172 = por %p170, %p171
      %s174 = sadd.s32 %s173, 1
      %p177 = scmp.eq.s32.totalorder %s34, 1
      %p178 = scmp.ne.s32.totalorder %s173, %s175
      %p179 = scmp.eq.s32.totalorder %s34, 0
      %p180 = por %p178, %p179
      %p181 = scmp.ne.s32.totalorder %s173, %s175
      %p182 = scmp.eq.s32.totalorder %s39, 1
      %p183 = por %p181, %p182
      %p184 = scmp.ne.s32.totalorder %s175, %s176
      %p185 = scmp.eq.s32.totalorder %s39, 0
      %p186 = por %p184, %p185
      %p187 = scmp.ne.s32.totalorder %s175, %s176
      %p188 = scmp.eq.s32.totalorder %s40, 1
      %p189 = por %p187, %p188
      %p191 = scmp.ne.s32.totalorder %s176, %s190
      %p192 = scmp.eq.s32.totalorder %s40, 0
      %p193 = por %p191, %p192
      %s195 = sadd.s32 %s194, 1
      %p198 = scmp.eq.s32.totalorder %s34, 1
      %p199 = scmp.ne.s32.totalorder %s194, %s196
      %p200 = scmp.eq.s32.totalorder %s34, 0
      %p201 = por %p199, %p200
      %p202 = scmp.ne.s32.totalorder %s194, %s196
      %p203 = scmp.eq.s32.totalorder %s39, 1
      %p204 = por %p202, %p203
      %p205 = scmp.ne.s32.totalorder %s196, %s197
      %p206 = scmp.eq.s32.totalorder %s39, 0
      %p207 = por %p205, %p206
      %p208 = scmp.ne.s32.totalorder %s196, %s197
      %p209 = scmp.eq.s32.totalorder %s40, 1
      %p210 = por %p208, %p209
      %p212 = scmp.ne.s32.totalorder %s197, %s211
      %p213 = scmp.eq.s32.totalorder %s40, 0
      %p214 = por %p212, %p213
      %s216 = sadd.s32 %s215, 1
      %p219 = scmp.eq.s32.totalorder %s34, 1
      %p220 = scmp.ne.s32.totalorder %s215, %s217
      %p221 = scmp.eq.s32.totalorder %s34, 0
      %p222 = por %p220, %p221
      %p223 = scmp.ne.s32.totalorder %s215, %s217
      %p224 = scmp.eq.s32.totalorder %s39, 1
      %p225 = por %p223, %p224
      %p226 = scmp.ne.s32.totalorder %s217, %s218
      %p227 = scmp.eq.s32.totalorder %s39, 0
      %p228 = por %p226, %p227
      %p229 = scmp.ne.s32.totalorder %s217, %s218
      %p230 = scmp.eq.s32.totalorder %s40, 1
      %p231 = por %p229, %p230
      %p233 = scmp.ne.s32.totalorder %s218, %s232
      %p234 = scmp.eq.s32.totalorder %s40, 0
      %p235 = por %p233, %p234
      %s236 = ssub.s32 %s34, %s41
      %p237 = scmp.eq.s32.totalorder %s236, 0
      %s239 = sadd.s32 %s238, 1
      %s240 = scalar_select %p237, %s238, %s239
      %p243 = pneg %p237
      %p244 = scmp.eq.s32.totalorder %s34, 1
      %p245 = por %p243, %p244
      %p246 = scmp.ne.s32.totalorder %s238, %s241
      %p247 = scmp.eq.s32.totalorder %s34, 0
      %p248 = por %p246, %p247
      %p249 = scmp.ne.s32.totalorder %s238, %s241
      %p250 = scmp.eq.s32.totalorder %s39, 1
      %p251 = por %p249, %p250
      %p252 = scmp.ne.s32.totalorder %s241, %s242
      %p253 = scmp.eq.s32.totalorder %s39, 0
      %p254 = por %p252, %p253
      %p255 = scmp.ne.s32.totalorder %s241, %s242
      %p256 = scmp.eq.s32.totalorder %s40, 1
      %p257 = por %p255, %p256
      %p259 = scmp.ne.s32.totalorder %s242, %s258
      %p260 = scmp.eq.s32.totalorder %s40, 0
      %p261 = por %p259, %p260
      %p262 = scmp.le.s32.totalorder 1, %s34
      %p263 = scmp.lt.s32.totalorder %s34, 3
      %p264 = pnand %p262, %p263
      %p265 = pneg %p264
      // Predicated region
      $region9: #{tpu_custom_call.1} parent=5 // pred_check
        _
      $region10: #{tpu_custom_call.1} parent=5 // pred_check_branch
        %267 = sbr.rel (%p264) target = $region12
      $region11: #{tpu_custom_call.1} parent=5 // pred_region
        %s268 = ssub.s32 %s34, 1
        // Predicated region
        $region13: #{tpu_custom_call.1} parent=11 // pred_check
          %p269 = pneg %p81
        $region14: #{tpu_custom_call.1} parent=11 // pred_check_branch
          %271 = sbr.rel (%p269) target = $region16
        $region15: #{tpu_custom_call.1} parent=11 // pred_region
          %273 = vsyncadd [#allocation9], 0
          %s274 = sshll.u32 %s2, 4
          %s275 = int_to_ptr.hbm [resolvable:$true] %s274
          %s276 = sshll.u32 [#allocation8], 4
          %s277 = int_to_ptr.vmem [resolvable:$true] %s276
          %282 = dma.hbm_to_vmem [thread:$0]  %s275, 7168, %s277, [#allocation9], 64, 64, 4
        $region16: #{tpu_custom_call.1} parent=11 // pred_fallthru
          _
        // Predicated region
        $region17: #{tpu_custom_call.1} parent=11 // pred_check
          %p283 = pneg %p102
        $region18: #{tpu_custom_call.1} parent=11 // pred_check_branch
          %285 = sbr.rel (%p283) target = $region20
        $region19: #{tpu_custom_call.1} parent=11 // pred_region
          %287 = vsyncadd [#allocation9], 0
          %s288 = sshll.u32 %s3, 4
          %s289 = int_to_ptr.hbm [resolvable:$true] %s288
          %s290 = sshll.u32 [#allocation10], 4
          %s291 = int_to_ptr.vmem [resolvable:$true] %s290
          %296 = dma.hbm_to_vmem [thread:$0]  %s289, 7168, %s291, [#allocation9], 64, 64, 4
        $region20: #{tpu_custom_call.1} parent=11 // pred_fallthru
          _
        // Predicated region
        $region21: #{tpu_custom_call.1} parent=11 // pred_check
          %p297 = pneg %p123
        $region22: #{tpu_custom_call.1} parent=11 // pred_check_branch
          %299 = sbr.rel (%p297) target = $region24
        $region23: #{tpu_custom_call.1} parent=11 // pred_region
          %301 = vsyncadd [#allocation12], 0
          %s302 = sshll.u32 %s4, 4
          %s303 = int_to_ptr.hbm [resolvable:$true] %s302
          %s304 = sshll.u32 [#allocation11], 4
          %s305 = int_to_ptr.vmem [resolvable:$true] %s304
          %310 = dma.hbm_to_vmem [thread:$0]  %s303, 8192, %s305, [#allocation12], 64, 64, 4
        $region24: #{tpu_custom_call.1} parent=11 // pred_fallthru
          _
        // Predicated region
        $region25: #{tpu_custom_call.1} parent=11 // pred_check
          %p311 = pneg %p144
        $region26: #{tpu_custom_call.1} parent=11 // pred_check_branch
          %313 = sbr.rel (%p311) target = $region28
        $region27: #{tpu_custom_call.1} parent=11 // pred_region
          %315 = vsyncadd [#allocation12], 0
          %s316 = sshll.u32 %s5, 4
          %s317 = int_to_ptr.hbm [resolvable:$true] %s316
          %s318 = sshll.u32 [#allocation13], 4
          %s319 = int_to_ptr.vmem [resolvable:$true] %s318
          %324 = dma.hbm_to_vmem [thread:$0]  %s317, 5120, %s319, [#allocation12], 64, 64, 4
        $region28: #{tpu_custom_call.1} parent=11 // pred_fallthru
          _
        // Predicated region
        $region29: #{tpu_custom_call.1} parent=11 // pred_check
          %p325 = pneg %p165
        $region30: #{tpu_custom_call.1} parent=11 // pred_check_branch
          %327 = sbr.rel (%p325) target = $region32
        $region31: #{tpu_custom_call.1} parent=11 // pred_region
          %329 = vsyncadd [#allocation15], 0
          %s330 = sshll.u32 %s6, 4
          %s331 = int_to_ptr.hbm [resolvable:$true] %s330
          %s332 = sshll.u32 [#allocation14], 4
          %s333 = int_to_ptr.vmem [resolvable:$true] %s332
          %338 = dma.hbm_to_vmem [thread:$0]  %s331, 7168, %s333, [#allocation15], 64, 64, 4
        $region32: #{tpu_custom_call.1} parent=11 // pred_fallthru
          _
        // Predicated region
        $region33: #{tpu_custom_call.1} parent=11 // pred_check
          %p339 = pneg %p186
        $region34: #{tpu_custom_call.1} parent=11 // pred_check_branch
          %341 = sbr.rel (%p339) target = $region36
        $region35: #{tpu_custom_call.1} parent=11 // pred_region
          %343 = vsyncadd [#allocation15], 0
          %s344 = sshll.u32 %s7, 4
          %s345 = int_to_ptr.hbm [resolvable:$true] %s344
          %s346 = sshll.u32 [#allocation16], 4
          %s347 = int_to_ptr.vmem [resolvable:$true] %s346
          %352 = dma.hbm_to_vmem [thread:$0]  %s345, 1024, %s347, [#allocation15], 64, 64, 4
        $region36: #{tpu_custom_call.1} parent=11 // pred_fallthru
          _
        // Predicated region
        $region37: #{tpu_custom_call.1} parent=11 // pred_check
          %p353 = pneg %p207
        $region38: #{tpu_custom_call.1} parent=11 // pred_check_branch
          %355 = sbr.rel (%p353) target = $region40
        $region39: #{tpu_custom_call.1} parent=11 // pred_region
          %357 = vsyncadd [#allocation18], 0
          %s358 = sshll.u32 %s8, 4
          %s359 = int_to_ptr.hbm [resolvable:$true] %s358
          %s360 = sshll.u32 [#allocation17], 4
          %s361 = int_to_ptr.vmem [resolvable:$true] %s360
          %366 = dma.hbm_to_vmem [thread:$0]  %s359, 1024, %s361, [#allocation18], 64, 64, 4
        $region40: #{tpu_custom_call.1} parent=11 // pred_fallthru
          _
        // Predicated region
        $region41: #{tpu_custom_call.1} parent=11 // pred_check
          %p367 = pneg %p228
        $region42: #{tpu_custom_call.1} parent=11 // pred_check_branch
          %369 = sbr.rel (%p367) target = $region44
        $region43: #{tpu_custom_call.1} parent=11 // pred_region
          _
        $region44: #{tpu_custom_call.1} parent=11 // pred_fallthru
          _
      $region12: #{tpu_custom_call.1} parent=5 // pred_fallthru
        _
      %p370 = scmp.lt.s32.totalorder %s34, 2
      // Predicated region
      $region45: #{tpu_custom_call.1} parent=5 // pred_check
        %p371 = pneg %p370
      $region46: #{tpu_custom_call.1} parent=5 // pred_check_branch
        %373 = sbr.rel (%p371) target = $region48
      $region47: #{tpu_custom_call.1} parent=5 // pred_region
        // Predicated region
        $region49: #{tpu_custom_call.1} parent=47 // pred_check
          %p374 = pneg %p54
        $region50: #{tpu_custom_call.1} parent=47 // pred_check_branch
          %376 = sbr.rel (%p374) target = $region52
        $region51: #{tpu_custom_call.1} parent=47 // pred_region
          %s377 = sand.u32 %s44, 1
          %s378 = scalar_lea.sflag [#allocation6], %s377
          %s379 = sand.u32 %s44, 1
          %s380 = smul.addr %s379, 8
          %s381 = scalar_lea.vmem [#allocation5], %s380
          %383 = vsyncadd %s378, 0
          %s384 = smul.addr %s34, 2
          %s385 = smul.addr %s384, 4
          %s386 = scalar_lea.hbm %s1, %s385
          %s387 = sshll.u32 %s386, 4
          %s388 = int_to_ptr.hbm [resolvable:$true] %s387
          %s389 = sshll.u32 %s381, 4
          %s390 = int_to_ptr.vmem [resolvable:$true] %s389
          %395 = dma.hbm_to_vmem [thread:$0]  %s388, 128, %s390, %s378, 64, 64, 4
        $region52: #{tpu_custom_call.1} parent=47 // pred_fallthru
          _
      $region48: #{tpu_custom_call.1} parent=5 // pred_fallthru
        _
      %p396 = scmp.le.s32.totalorder 1, %s34
      %p397 = scmp.lt.s32.totalorder %s34, 3
      %p398 = pnand %p396, %p397
      %p399 = pneg %p398
      // Predicated region
      $region53: #{tpu_custom_call.1} parent=5 // pred_check
        _
      $region54: #{tpu_custom_call.1} parent=5 // pred_check_branch
        %401 = sbr.rel (%p398) target = $region56
      $region55: #{tpu_custom_call.1} parent=5 // pred_region
        %s402 = ssub.s32 %s34, 1
        %s403 = sand.u32 %s47, 1
        %s404 = scalar_lea.sflag [#allocation6], %s403
        %s405 = sand.u32 %s47, 1
        %s406 = smul.addr %s405, 8
        %s407 = scalar_lea.vmem [#allocation5], %s406
        // Predicated region
        $region57: #{tpu_custom_call.1} parent=55 // pred_check
          %p408 = pneg %p60
        $region58: #{tpu_custom_call.1} parent=55 // pred_check_branch
          %410 = sbr.rel (%p408) target = $region60
        $region59: #{tpu_custom_call.1} parent=55 // pred_region
          %412 = dma.done %s404, 128
        $region60: #{tpu_custom_call.1} parent=55 // pred_fallthru
          _
        // Predicated region
        $region61: #{tpu_custom_call.1} parent=55 // pred_check
          %p413 = pneg %p81
        $region62: #{tpu_custom_call.1} parent=55 // pred_check_branch
          %415 = sbr.rel (%p413) target = $region64
        $region63: #{tpu_custom_call.1} parent=55 // pred_region
          %417 = dma.done [#allocation9], 7168
        $region64: #{tpu_custom_call.1} parent=55 // pred_fallthru
          _
        // Predicated region
        $region65: #{tpu_custom_call.1} parent=55 // pred_check
          %p418 = pneg %p102
        $region66: #{tpu_custom_call.1} parent=55 // pred_check_branch
          %420 = sbr.rel (%p418) target = $region68
        $region67: #{tpu_custom_call.1} parent=55 // pred_region
          %422 = dma.done [#allocation9], 7168
        $region68: #{tpu_custom_call.1} parent=55 // pred_fallthru
          _
        // Predicated region
        $region69: #{tpu_custom_call.1} parent=55 // pred_check
          %p423 = pneg %p123
        $region70: #{tpu_custom_call.1} parent=55 // pred_check_branch
          %425 = sbr.rel (%p423) target = $region72
        $region71: #{tpu_custom_call.1} parent=55 // pred_region
          %427 = dma.done [#allocation12], 8192
        $region72: #{tpu_custom_call.1} parent=55 // pred_fallthru
          _
        // Predicated region
        $region73: #{tpu_custom_call.1} parent=55 // pred_check
          %p428 = pneg %p144
        $region74: #{tpu_custom_call.1} parent=55 // pred_check_branch
          %430 = sbr.rel (%p428) target = $region76
        $region75: #{tpu_custom_call.1} parent=55 // pred_region
          %432 = dma.done [#allocation12], 5120
        $region76: #{tpu_custom_call.1} parent=55 // pred_fallthru
          _
        // Predicated region
        $region77: #{tpu_custom_call.1} parent=55 // pred_check
          %p433 = pneg %p165
        $region78: #{tpu_custom_call.1} parent=55 // pred_check_branch
          %435 = sbr.rel (%p433) target = $region80
        $region79: #{tpu_custom_call.1} parent=55 // pred_region
          %437 = dma.done [#allocation15], 7168
        $region80: #{tpu_custom_call.1} parent=55 // pred_fallthru
          _
        // Predicated region
        $region81: #{tpu_custom_call.1} parent=55 // pred_check
          %p438 = pneg %p186
        $region82: #{tpu_custom_call.1} parent=55 // pred_check_branch
          %440 = sbr.rel (%p438) target = $region84
        $region83: #{tpu_custom_call.1} parent=55 // pred_region
          %442 = dma.done [#allocation15], 1024
        $region84: #{tpu_custom_call.1} parent=55 // pred_fallthru
          _
        // Predicated region
        $region85: #{tpu_custom_call.1} parent=55 // pred_check
          %p443 = pneg %p207
        $region86: #{tpu_custom_call.1} parent=55 // pred_check_branch
          %445 = sbr.rel (%p443) target = $region88
        $region87: #{tpu_custom_call.1} parent=55 // pred_region
          %447 = dma.done [#allocation18], 1024
        $region88: #{tpu_custom_call.1} parent=55 // pred_fallthru
          _
        %s448 = sand.u32 %s47, 1
        %s449 = scalar_lea.sflag [#allocation6], %s448
        %s450 = sand.u32 %s47, 1
        %s451 = smul.addr %s450, 8
        %s452 = scalar_lea.vmem [#allocation5], %s451
        %p453 = pneg %p60
        %p454 = pneg %p57
        %p455 = pneg %p81
        %p456 = pneg %p78
        %p457 = pneg %p102
        %p458 = pneg %p99
        %p459 = pneg %p123
        %p460 = pneg %p120
        %p461 = pneg %p144
        %p462 = pneg %p141
        %p463 = pneg %p165
        %p464 = pneg %p162
        %p465 = pneg %p186
        %p466 = pneg %p183
        %p467 = pneg %p207
        %p468 = pneg %p204
        %p469 = pneg %p228
        %p470 = pneg %p225
        %p471 = pneg %p254
        %p472 = pneg %p251
        %s473 = sand.u32 %s241, 1
        %s474 = scalar_lea.sflag [#allocation7], %s473
        %s475 = sand.u32 %s241, 1
        %s476 = smul.addr %s475, 16
        %s477 = scalar_lea.vmem [#allocation19], %s476
        %s478 = sld [smem:[#allocation4 + %s39]]
        %v479 = vlaneseq
        %v480 = vshrl.u32 %v479, 7
        %v481 = vadd.s32 %v480, 8
        %v482 = vstv %s478
        %vm483 = vcmp.lt.s32.totalorder %v480, %v482
        %vm484 = vcmp.lt.s32.totalorder %v481, %v482
        %485 = vst [vmem:[#allocation2] sm:$0xff] 0.0
        %486 = vst [vmem:[#allocation2 + $0x18] sm:$0xff] 0.0
        %v487 = vld [vmem:[%s407] sm:$0xf]
        %v488 = vld [vmem:[%s407 + $0x4] sm:$0xf]
        %v489 = vunpack.c.l.bf16 %v487
        %v490 = vunpack.c.l.bf16 %v488
        %v491 = vsel %vm483, %v489, 0.0
        %v492 = vsel %vm484, %v490, 0.0
        %493 = vst [vmem:[#allocation2 + $0x8] sm:$0xff] %v491
        %494 = vst [vmem:[#allocation2 + $0x10] sm:$0xff] %v492
        %v495 = vld [vmem:[#allocation2 + $0x5] sm:$0xff]
        %v496 = vld [vmem:[#allocation2 + $0xd] sm:$0xff]
        %v497 = vld [vmem:[#allocation2 + $0x6] sm:$0xff]
        %v498 = vld [vmem:[#allocation2 + $0xe] sm:$0xff]
        %v499 = vld [vmem:[#allocation2 + $0x7] sm:$0xff]
        %v500 = vld [vmem:[#allocation2 + $0xf] sm:$0xff]
        %v501 = vld [vmem:[#allocation2 + $0x8] sm:$0xff]
        %v502 = vld [vmem:[#allocation2 + $0x10] sm:$0xff]
        %v503 = vld [vmem:[#allocation2 + $0x9] sm:$0xff]
        %v504 = vld [vmem:[#allocation2 + $0x11] sm:$0xff]
        %v505 = vld [vmem:[#allocation2 + $0xa] sm:$0xff]
        %v506 = vld [vmem:[#allocation2 + $0x12] sm:$0xff]
        %v507 = vld [vmem:[#allocation2 + $0xb] sm:$0xff]
        %v508 = vld [vmem:[#allocation2 + $0x13] sm:$0xff]
        %v509 = vld [vmem:[#allocation8] sm:$0xf]
        %v510 = vld [vmem:[#allocation8 + $0x4] sm:$0xf]
        %v511 = vld [vmem:[#allocation8 + $0x8] sm:$0xf]
        %v512 = vld [vmem:[#allocation8 + $0xc] sm:$0xf]
        %v513 = vld [vmem:[#allocation8 + $0x10] sm:$0xf]
        %v514 = vld [vmem:[#allocation8 + $0x14] sm:$0xf]
        %v515 = vld [vmem:[#allocation8 + $0x18] sm:$0xf]
        %v516 = vld [vmem:[#allocation8 + $0x1c] sm:$0xf]
        %v517 = vld [vmem:[#allocation8 + $0x20] sm:$0xf]
        %v518 = vld [vmem:[#allocation8 + $0x24] sm:$0xf]
        %v519 = vld [vmem:[#allocation8 + $0x28] sm:$0xf]
        %v520 = vld [vmem:[#allocation8 + $0x2c] sm:$0xf]
        %v521 = vld [vmem:[#allocation8 + $0x30] sm:$0xf]
        %v522 = vld [vmem:[#allocation8 + $0x34] sm:$0xf]
        %v523 = vld [vmem:[#allocation8 + $0x38] sm:$0xf]
        %v524 = vld [vmem:[#allocation8 + $0x3c] sm:$0xf]
        %v525 = vld [vmem:[#allocation8 + $0x40] sm:$0xf]
        %v526 = vld [vmem:[#allocation8 + $0x44] sm:$0xf]
        %v527 = vld [vmem:[#allocation8 + $0x48] sm:$0xf]
        %v528 = vld [vmem:[#allocation8 + $0x4c] sm:$0xf]
        %v529 = vld [vmem:[#allocation8 + $0x50] sm:$0xf]
        %v530 = vld [vmem:[#allocation8 + $0x54] sm:$0xf]
        %v531 = vld [vmem:[#allocation8 + $0x58] sm:$0xf]
        %v532 = vld [vmem:[#allocation8 + $0x5c] sm:$0xf]
        %v533 = vld [vmem:[#allocation8 + $0x60] sm:$0xf]
        %v534 = vld [vmem:[#allocation8 + $0x64] sm:$0xf]
        %v535 = vld [vmem:[#allocation8 + $0x68] sm:$0xf]
        %v536 = vld [vmem:[#allocation8 + $0x6c] sm:$0xf]
        %v537 = vld [vmem:[#allocation8 + $0x70] sm:$0xf]
        %v538 = vld [vmem:[#allocation8 + $0x74] sm:$0xf]
        %v539 = vld [vmem:[#allocation8 + $0x78] sm:$0xf]
        %v540 = vld [vmem:[#allocation8 + $0x7c] sm:$0xf]
        %v541 = vld [vmem:[#allocation8 + $0x80] sm:$0xf]
        %v542 = vld [vmem:[#allocation8 + $0x84] sm:$0xf]
        %v543 = vld [vmem:[#allocation8 + $0x88] sm:$0xf]
        %v544 = vld [vmem:[#allocation8 + $0x8c] sm:$0xf]
        %v545 = vld [vmem:[#allocation8 + $0x90] sm:$0xf]
        %v546 = vld [vmem:[#allocation8 + $0x94] sm:$0xf]
        %v547 = vld [vmem:[#allocation8 + $0x98] sm:$0xf]
        %v548 = vld [vmem:[#allocation8 + $0x9c] sm:$0xf]
        %v549 = vld [vmem:[#allocation8 + $0xa0] sm:$0xf]
        %v550 = vld [vmem:[#allocation8 + $0xa4] sm:$0xf]
        %v551 = vld [vmem:[#allocation8 + $0xa8] sm:$0xf]
        %v552 = vld [vmem:[#allocation8 + $0xac] sm:$0xf]
        %v553 = vld [vmem:[#allocation8 + $0xb0] sm:$0xf]
        %v554 = vld [vmem:[#allocation8 + $0xb4] sm:$0xf]
        %v555 = vld [vmem:[#allocation8 + $0xb8] sm:$0xf]
        %v556 = vld [vmem:[#allocation8 + $0xbc] sm:$0xf]
        %v557 = vld [vmem:[#allocation8 + $0xc0] sm:$0xf]
        %v558 = vld [vmem:[#allocation8 + $0xc4] sm:$0xf]
        %v559 = vld [vmem:[#allocation8 + $0xc8] sm:$0xf]
        %v560 = vld [vmem:[#allocation8 + $0xcc] sm:$0xf]
        %v561 = vld [vmem:[#allocation8 + $0xd0] sm:$0xf]
        %v562 = vld [vmem:[#allocation8 + $0xd4] sm:$0xf]
        %v563 = vld [vmem:[#allocation8 + $0xd8] sm:$0xf]
        %v564 = vld [vmem:[#allocation8 + $0xdc] sm:$0xf]
        %v565 = vld [vmem:[#allocation8 + $0xe0] sm:$0xf]
        %v566 = vld [vmem:[#allocation8 + $0xe4] sm:$0xf]
        %v567 = vld [vmem:[#allocation8 + $0xe8] sm:$0xf]
        %v568 = vld [vmem:[#allocation8 + $0xec] sm:$0xf]
        %v569 = vld [vmem:[#allocation8 + $0xf0] sm:$0xf]
        %v570 = vld [vmem:[#allocation8 + $0xf4] sm:$0xf]
        %v571 = vld [vmem:[#allocation8 + $0xf8] sm:$0xf]
        %v572 = vld [vmem:[#allocation8 + $0xfc] sm:$0xf]
        %v573 = vld [vmem:[#allocation8 + $0x100] sm:$0xf]
        %v574 = vld [vmem:[#allocation8 + $0x104] sm:$0xf]
        %v575 = vld [vmem:[#allocation8 + $0x108] sm:$0xf]
        %v576 = vld [vmem:[#allocation8 + $0x10c] sm:$0xf]
        %v577 = vld [vmem:[#allocation8 + $0x110] sm:$0xf]
        %v578 = vld [vmem:[#allocation8 + $0x114] sm:$0xf]
        %v579 = vld [vmem:[#allocation8 + $0x118] sm:$0xf]
        %v580 = vld [vmem:[#allocation8 + $0x11c] sm:$0xf]
        %v581 = vld [vmem:[#allocation8 + $0x120] sm:$0xf]
        %v582 = vld [vmem:[#allocation8 + $0x124] sm:$0xf]
        %v583 = vld [vmem:[#allocation8 + $0x128] sm:$0xf]
        %v584 = vld [vmem:[#allocation8 + $0x12c] sm:$0xf]
        %v585 = vld [vmem:[#allocation8 + $0x130] sm:$0xf]
        %v586 = vld [vmem:[#allocation8 + $0x134] sm:$0xf]
        %v587 = vld [vmem:[#allocation8 + $0x138] sm:$0xf]
        %v588 = vld [vmem:[#allocation8 + $0x13c] sm:$0xf]
        %v589 = vld [vmem:[#allocation8 + $0x140] sm:$0xf]
        %v590 = vld [vmem:[#allocation8 + $0x144] sm:$0xf]
        %v591 = vld [vmem:[#allocation8 + $0x148] sm:$0xf]
        %v592 = vld [vmem:[#allocation8 + $0x14c] sm:$0xf]
        %v593 = vld [vmem:[#allocation8 + $0x150] sm:$0xf]
        %v594 = vld [vmem:[#allocation8 + $0x154] sm:$0xf]
        %v595 = vld [vmem:[#allocation8 + $0x158] sm:$0xf]
        %v596 = vld [vmem:[#allocation8 + $0x15c] sm:$0xf]
        %v597 = vld [vmem:[#allocation8 + $0x160] sm:$0xf]
        %v598 = vld [vmem:[#allocation8 + $0x164] sm:$0xf]
        %v599 = vld [vmem:[#allocation8 + $0x168] sm:$0xf]
        %v600 = vld [vmem:[#allocation8 + $0x16c] sm:$0xf]
        %v601 = vld [vmem:[#allocation8 + $0x170] sm:$0xf]
        %v602 = vld [vmem:[#allocation8 + $0x174] sm:$0xf]
        %v603 = vld [vmem:[#allocation8 + $0x178] sm:$0xf]
        %v604 = vld [vmem:[#allocation8 + $0x17c] sm:$0xf]
        %v605 = vld [vmem:[#allocation8 + $0x180] sm:$0xf]
        %v606 = vld [vmem:[#allocation8 + $0x184] sm:$0xf]
        %v607 = vld [vmem:[#allocation8 + $0x188] sm:$0xf]
        %v608 = vld [vmem:[#allocation8 + $0x18c] sm:$0xf]
        %v609 = vld [vmem:[#allocation8 + $0x190] sm:$0xf]
        %v610 = vld [vmem:[#allocation8 + $0x194] sm:$0xf]
        %v611 = vld [vmem:[#allocation8 + $0x198] sm:$0xf]
        %v612 = vld [vmem:[#allocation8 + $0x19c] sm:$0xf]
        %v613 = vld [vmem:[#allocation8 + $0x1a0] sm:$0xf]
        %v614 = vld [vmem:[#allocation8 + $0x1a4] sm:$0xf]
        %v615 = vld [vmem:[#allocation8 + $0x1a8] sm:$0xf]
        %v616 = vld [vmem:[#allocation8 + $0x1ac] sm:$0xf]
        %v617 = vld [vmem:[#allocation8 + $0x1b0] sm:$0xf]
        %v618 = vld [vmem:[#allocation8 + $0x1b4] sm:$0xf]
        %v619 = vld [vmem:[#allocation8 + $0x1b8] sm:$0xf]
        %v620 = vld [vmem:[#allocation8 + $0x1bc] sm:$0xf]
        %v621 = vpack.c.bf16 %v496, %v495
        %v622 = vpack.c.bf16 %v498, %v497
        %v623 = vpack.c.bf16 %v500, %v499
        %v624 = vpack.c.bf16 %v502, %v501
        %v625 = vpack.c.bf16 %v504, %v503
        %v626 = vpack.c.bf16 %v506, %v505
        %v627 = vpack.c.bf16 %v508, %v507
        %v628 = vld [vmem:[%s9] sm:$0x1]
        %v629 = vperm.slane %v628, 0
        %v742 = vunpack.c.l.b16 %v509
        %v743 = vunpack.c.l.b16 %v510
        %v744 = vunpack.c.l.b16 %v511
        %v745 = vunpack.c.l.b16 %v512
        %v746 = vunpack.c.l.b16 %v513
        %v747 = vunpack.c.l.b16 %v514
        %v748 = vunpack.c.l.b16 %v515
        %v749 = vunpack.c.l.b16 %v516
        %v750 = vunpack.c.l.b16 %v517
        %v751 = vunpack.c.l.b16 %v518
        %v752 = vunpack.c.l.b16 %v519
        %v753 = vunpack.c.l.b16 %v520
        %v754 = vunpack.c.l.b16 %v521
        %v755 = vunpack.c.l.b16 %v522
        %v756 = vunpack.c.l.b16 %v523
        %v757 = vunpack.c.l.b16 %v524
        %v758 = vunpack.c.l.b16 %v525
        %v759 = vunpack.c.l.b16 %v526
        %v760 = vunpack.c.l.b16 %v527
        %v761 = vunpack.c.l.b16 %v528
        %v762 = vunpack.c.l.b16 %v529
        %v763 = vunpack.c.l.b16 %v530
        %v764 = vunpack.c.l.b16 %v531
        %v765 = vunpack.c.l.b16 %v532
        %v766 = vunpack.c.l.b16 %v533
        %v767 = vunpack.c.l.b16 %v534
        %v768 = vunpack.c.l.b16 %v535
        %v769 = vunpack.c.l.b16 %v536
        %v770 = vunpack.c.l.b16 %v537
        %v771 = vunpack.c.l.b16 %v538
        %v772 = vunpack.c.l.b16 %v539
        %v773 = vunpack.c.l.b16 %v540
        %v774 = vunpack.c.l.b16 %v541
        %v775 = vunpack.c.l.b16 %v542
        %v776 = vunpack.c.l.b16 %v543
        %v777 = vunpack.c.l.b16 %v544
        %v778 = vunpack.c.l.b16 %v545
        %v779 = vunpack.c.l.b16 %v546
        %v780 = vunpack.c.l.b16 %v547
        %v781 = vunpack.c.l.b16 %v548
        %v782 = vunpack.c.l.b16 %v549
        %v783 = vunpack.c.l.b16 %v550
        %v784 = vunpack.c.l.b16 %v551
        %v785 = vunpack.c.l.b16 %v552
        %v786 = vunpack.c.l.b16 %v553
        %v787 = vunpack.c.l.b16 %v554
        %v788 = vunpack.c.l.b16 %v555
        %v789 = vunpack.c.l.b16 %v556
        %v790 = vunpack.c.l.b16 %v557
        %v791 = vunpack.c.l.b16 %v558
        %v792 = vunpack.c.l.b16 %v559
        %v793 = vunpack.c.l.b16 %v560
        %v794 = vunpack.c.l.b16 %v561
        %v795 = vunpack.c.l.b16 %v562
        %v796 = vunpack.c.l.b16 %v563
        %v797 = vunpack.c.l.b16 %v564
        %v798 = vunpack.c.l.b16 %v565
        %v799 = vunpack.c.l.b16 %v566
        %v800 = vunpack.c.l.b16 %v567
        %v801 = vunpack.c.l.b16 %v568
        %v802 = vunpack.c.l.b16 %v569
        %v803 = vunpack.c.l.b16 %v570
        %v804 = vunpack.c.l.b16 %v571
        %v805 = vunpack.c.l.b16 %v572
        %v806 = vunpack.c.l.b16 %v573
        %v807 = vunpack.c.l.b16 %v574
        %v808 = vunpack.c.l.b16 %v575
        %v809 = vunpack.c.l.b16 %v576
        %v810 = vunpack.c.l.b16 %v577
        %v811 = vunpack.c.l.b16 %v578
        %v812 = vunpack.c.l.b16 %v579
        %v813 = vunpack.c.l.b16 %v580
        %v814 = vunpack.c.l.b16 %v581
        %v815 = vunpack.c.l.b16 %v582
        %v816 = vunpack.c.l.b16 %v583
        %v817 = vunpack.c.l.b16 %v584
        %v818 = vunpack.c.l.b16 %v585
        %v819 = vunpack.c.l.b16 %v586
        %v820 = vunpack.c.l.b16 %v587
        %v821 = vunpack.c.l.b16 %v588
        %v822 = vunpack.c.l.b16 %v589
        %v823 = vunpack.c.l.b16 %v590
        %v824 = vunpack.c.l.b16 %v591
        %v825 = vunpack.c.l.b16 %v592
        %v826 = vunpack.c.l.b16 %v593
        %v827 = vunpack.c.l.b16 %v594
        %v828 = vunpack.c.l.b16 %v595
        %v829 = vunpack.c.l.b16 %v596
        %v830 = vunpack.c.l.b16 %v597
        %v831 = vunpack.c.l.b16 %v598
        %v832 = vunpack.c.l.b16 %v599
        %v833 = vunpack.c.l.b16 %v600
        %v834 = vunpack.c.l.b16 %v601
        %v835 = vunpack.c.l.b16 %v602
        %v836 = vunpack.c.l.b16 %v603
        %v837 = vunpack.c.l.b16 %v604
        %v838 = vunpack.c.l.b16 %v605
        %v839 = vunpack.c.l.b16 %v606
        %v840 = vunpack.c.l.b16 %v607
        %v841 = vunpack.c.l.b16 %v608
        %v842 = vunpack.c.l.b16 %v609
        %v843 = vunpack.c.l.b16 %v610
        %v844 = vunpack.c.l.b16 %v611
        %v845 = vunpack.c.l.b16 %v612
        %v846 = vunpack.c.l.b16 %v613
        %v847 = vunpack.c.l.b16 %v614
        %v848 = vunpack.c.l.b16 %v615
        %v849 = vunpack.c.l.b16 %v616
        %v850 = vunpack.c.l.b16 %v617
        %v851 = vunpack.c.l.b16 %v618
        %v852 = vunpack.c.l.b16 %v619
        %v853 = vunpack.c.l.b16 %v620
        %v854 = vpack.c.b16 %v743, %v742
        %v855 = vpack.c.b16 %v745, %v744
        %v856 = vpack.c.b16 %v747, %v746
        %v857 = vpack.c.b16 %v749, %v748
        %v858 = vpack.c.b16 %v751, %v750
        %v859 = vpack.c.b16 %v753, %v752
        %v860 = vpack.c.b16 %v755, %v754
        %v861 = vpack.c.b16 %v757, %v756
        %v862 = vpack.c.b16 %v759, %v758
        %v863 = vpack.c.b16 %v761, %v760
        %v864 = vpack.c.b16 %v763, %v762
        %v865 = vpack.c.b16 %v765, %v764
        %v866 = vpack.c.b16 %v767, %v766
        %v867 = vpack.c.b16 %v769, %v768
        %v868 = vpack.c.b16 %v771, %v770
        %v869 = vpack.c.b16 %v773, %v772
        %v870 = vpack.c.b16 %v775, %v774
        %v871 = vpack.c.b16 %v777, %v776
        %v872 = vpack.c.b16 %v779, %v778
        %v873 = vpack.c.b16 %v781, %v780
        %v874 = vpack.c.b16 %v783, %v782
        %v875 = vpack.c.b16 %v785, %v784
        %v876 = vpack.c.b16 %v787, %v786
        %v877 = vpack.c.b16 %v789, %v788
        %v878 = vpack.c.b16 %v791, %v790
        %v879 = vpack.c.b16 %v793, %v792
        %v880 = vpack.c.b16 %v795, %v794
        %v881 = vpack.c.b16 %v797, %v796
        %v882 = vpack.c.b16 %v799, %v798
        %v883 = vpack.c.b16 %v801, %v800
        %v884 = vpack.c.b16 %v803, %v802
        %v885 = vpack.c.b16 %v805, %v804
        %v886 = vpack.c.b16 %v807, %v806
        %v887 = vpack.c.b16 %v809, %v808
        %v888 = vpack.c.b16 %v811, %v810
        %v889 = vpack.c.b16 %v813, %v812
        %v890 = vpack.c.b16 %v815, %v814
        %v891 = vpack.c.b16 %v817, %v816
        %v892 = vpack.c.b16 %v819, %v818
        %v893 = vpack.c.b16 %v821, %v820
        %v894 = vpack.c.b16 %v823, %v822
        %v895 = vpack.c.b16 %v825, %v824
        %v896 = vpack.c.b16 %v827, %v826
        %v897 = vpack.c.b16 %v829, %v828
        %v898 = vpack.c.b16 %v831, %v830
        %v899 = vpack.c.b16 %v833, %v832
        %v900 = vpack.c.b16 %v835, %v834
        %v901 = vpack.c.b16 %v837, %v836
        %v902 = vpack.c.b16 %v839, %v838
        %v903 = vpack.c.b16 %v841, %v840
        %v904 = vpack.c.b16 %v843, %v842
        %v905 = vpack.c.b16 %v845, %v844
        %v906 = vpack.c.b16 %v847, %v846
        %v907 = vpack.c.b16 %v849, %v848
        %v908 = vpack.c.b16 %v851, %v850
        %v909 = vpack.c.b16 %v853, %v852
        %966 = vmatpush.bf16.msra.mxu0 %v861
        %967 = vmatpush.bf16.msra.mxu0 %v860
        %968 = vmatpush.bf16.msra.mxu0 %v859
        %969 = vmatpush.bf16.msra.mxu0 %v858
        %970 = vmatpush.bf16.msra.mxu0 %v857
        %971 = vmatpush.bf16.msra.mxu0 %v856
        %972 = vmatpush.bf16.msra.mxu0 %v855
        %973 = vmatpush.bf16.msra.mxu0 %v854
        %974 = vmatmul.bf16.gmra.mxu0 %v621
        %v975 = vpop.f32.mrf.mxu0
        %v976 = vadd.f32 %v629, %v975
        %v977 = vpop.f32.mrf.mxu0
        %v978 = vadd.f32 %v629, %v977
        %979 = vdwg.mxu0
        %980 = vmatpush.bf16.msra.mxu0 %v869
        %981 = vmatpush.bf16.msra.mxu0 %v868
        %982 = vmatpush.bf16.msra.mxu0 %v867
        %983 = vmatpush.bf16.msra.mxu0 %v866
        %984 = vmatpush.bf16.msra.mxu0 %v865
        %985 = vmatpush.bf16.msra.mxu0 %v864
        %986 = vmatpush.bf16.msra.mxu0 %v863
        %987 = vmatpush.bf16.msra.mxu0 %v862
        %988 = vmatmul.bf16.gmra.mxu0 %v622
        %v989 = vpop.f32.mrf.mxu0
        %v990 = vadd.f32 %v976, %v989
        %v991 = vpop.f32.mrf.mxu0
        %v992 = vadd.f32 %v978, %v991
        %993 = vdwg.mxu0
        %994 = vmatpush.bf16.msra.mxu0 %v877
        %995 = vmatpush.bf16.msra.mxu0 %v876
        %996 = vmatpush.bf16.msra.mxu0 %v875
        %997 = vmatpush.bf16.msra.mxu0 %v874
        %998 = vmatpush.bf16.msra.mxu0 %v873
        %999 = vmatpush.bf16.msra.mxu0 %v872
        %1000 = vmatpush.bf16.msra.mxu0 %v871
        %1001 = vmatpush.bf16.msra.mxu0 %v870
        %1002 = vmatmul.bf16.gmra.mxu0 %v623
        %v1003 = vpop.f32.mrf.mxu0
        %v1004 = vadd.f32 %v990, %v1003
        %v1005 = vpop.f32.mrf.mxu0
        %v1006 = vadd.f32 %v992, %v1005
        %1007 = vdwg.mxu0
        %1008 = vmatpush.bf16.msra.mxu0 %v885
        %1009 = vmatpush.bf16.msra.mxu0 %v884
        %1010 = vmatpush.bf16.msra.mxu0 %v883
        %1011 = vmatpush.bf16.msra.mxu0 %v882
        %1012 = vmatpush.bf16.msra.mxu0 %v881
        %1013 = vmatpush.bf16.msra.mxu0 %v880
        %1014 = vmatpush.bf16.msra.mxu0 %v879
        %1015 = vmatpush.bf16.msra.mxu0 %v878
        %1016 = vmatmul.bf16.gmra.mxu0 %v624
        %v1017 = vpop.f32.mrf.mxu0
        %v1018 = vadd.f32 %v1004, %v1017
        %v1019 = vpop.f32.mrf.mxu0
        %v1020 = vadd.f32 %v1006, %v1019
        %1021 = vdwg.mxu0
        %1022 = vmatpush.bf16.msra.mxu0 %v893
        %1023 = vmatpush.bf16.msra.mxu0 %v892
        %1024 = vmatpush.bf16.msra.mxu0 %v891
        %1025 = vmatpush.bf16.msra.mxu0 %v890
        %1026 = vmatpush.bf16.msra.mxu0 %v889
        %1027 = vmatpush.bf16.msra.mxu0 %v888
        %1028 = vmatpush.bf16.msra.mxu0 %v887
        %1029 = vmatpush.bf16.msra.mxu0 %v886
        %1030 = vmatmul.bf16.gmra.mxu0 %v625
        %v1031 = vpop.f32.mrf.mxu0
        %v1032 = vadd.f32 %v1018, %v1031
        %v1033 = vpop.f32.mrf.mxu0
        %v1034 = vadd.f32 %v1020, %v1033
        %1035 = vdwg.mxu0
        %1036 = vmatpush.bf16.msra.mxu0 %v901
        %1037 = vmatpush.bf16.msra.mxu0 %v900
        %1038 = vmatpush.bf16.msra.mxu0 %v899
        %1039 = vmatpush.bf16.msra.mxu0 %v898
        %1040 = vmatpush.bf16.msra.mxu0 %v897
        %1041 = vmatpush.bf16.msra.mxu0 %v896
        %1042 = vmatpush.bf16.msra.mxu0 %v895
        %1043 = vmatpush.bf16.msra.mxu0 %v894
        %1044 = vmatmul.bf16.gmra.mxu0 %v626
        %v1045 = vpop.f32.mrf.mxu0
        %v1046 = vadd.f32 %v1032, %v1045
        %v1047 = vpop.f32.mrf.mxu0
        %v1048 = vadd.f32 %v1034, %v1047
        %1049 = vdwg.mxu0
        %1050 = vmatpush.bf16.msra.mxu0 %v909
        %1051 = vmatpush.bf16.msra.mxu0 %v908
        %1052 = vmatpush.bf16.msra.mxu0 %v907
        %1053 = vmatpush.bf16.msra.mxu0 %v906
        %1054 = vmatpush.bf16.msra.mxu0 %v905
        %1055 = vmatpush.bf16.msra.mxu0 %v904
        %1056 = vmatpush.bf16.msra.mxu0 %v903
        %1057 = vmatpush.bf16.msra.mxu0 %v902
        %1058 = vmatmul.bf16.gmra.mxu0 %v627
        %v1059 = vpop.f32.mrf.mxu0
        %v1060 = vadd.f32 %v1046, %v1059
        %v1061 = vpop.f32.mrf.mxu0
        %v1062 = vadd.f32 %v1048, %v1061
        %1063 = vdwg.mxu0
        %v1064 = vmax.f32 %v1060, 0.0
        %v1065 = vmax.f32 %v1062, 0.0
        %v1066 = vsel %vm483, %v1064, 0.0
        %v1067 = vsel %vm484, %v1065, 0.0
        %1068 = vst [vmem:[#allocation2 + $0x8] sm:$0xff] %v1066
        %1069 = vst [vmem:[#allocation2 + $0x10] sm:$0xff] %v1067
        %v1070 = vld [vmem:[#allocation2 + $0x5] sm:$0xff]
        %v1071 = vld [vmem:[#allocation2 + $0xd] sm:$0xff]
        %v1072 = vld [vmem:[#allocation2 + $0x6] sm:$0xff]
        %v1073 = vld [vmem:[#allocation2 + $0xe] sm:$0xff]
        %v1074 = vld [vmem:[#allocation2 + $0x7] sm:$0xff]
        %v1075 = vld [vmem:[#allocation2 + $0xf] sm:$0xff]
        %v1076 = vld [vmem:[#allocation2 + $0x8] sm:$0xff]
        %v1077 = vld [vmem:[#allocation2 + $0x10] sm:$0xff]
        %v1078 = vld [vmem:[#allocation2 + $0x9] sm:$0xff]
        %v1079 = vld [vmem:[#allocation2 + $0x11] sm:$0xff]
        %v1080 = vld [vmem:[#allocation2 + $0xa] sm:$0xff]
        %v1081 = vld [vmem:[#allocation2 + $0x12] sm:$0xff]
        %v1082 = vld [vmem:[#allocation2 + $0xb] sm:$0xff]
        %v1083 = vld [vmem:[#allocation2 + $0x13] sm:$0xff]
        %v1084 = vld [vmem:[#allocation10] sm:$0xf]
        %v1085 = vld [vmem:[#allocation10 + $0x4] sm:$0xf]
        %v1086 = vld [vmem:[#allocation10 + $0x8] sm:$0xf]
        %v1087 = vld [vmem:[#allocation10 + $0xc] sm:$0xf]
        %v1088 = vld [vmem:[#allocation10 + $0x10] sm:$0xf]
        %v1089 = vld [vmem:[#allocation10 + $0x14] sm:$0xf]
        %v1090 = vld [vmem:[#allocation10 + $0x18] sm:$0xf]
        %v1091 = vld [vmem:[#allocation10 + $0x1c] sm:$0xf]
        %v1092 = vld [vmem:[#allocation10 + $0x20] sm:$0xf]
        %v1093 = vld [vmem:[#allocation10 + $0x24] sm:$0xf]
        %v1094 = vld [vmem:[#allocation10 + $0x28] sm:$0xf]
        %v1095 = vld [vmem:[#allocation10 + $0x2c] sm:$0xf]
        %v1096 = vld [vmem:[#allocation10 + $0x30] sm:$0xf]
        %v1097 = vld [vmem:[#allocation10 + $0x34] sm:$0xf]
        %v1098 = vld [vmem:[#allocation10 + $0x38] sm:$0xf]
        %v1099 = vld [vmem:[#allocation10 + $0x3c] sm:$0xf]
        %v1100 = vld [vmem:[#allocation10 + $0x40] sm:$0xf]
        %v1101 = vld [vmem:[#allocation10 + $0x44] sm:$0xf]
        %v1102 = vld [vmem:[#allocation10 + $0x48] sm:$0xf]
        %v1103 = vld [vmem:[#allocation10 + $0x4c] sm:$0xf]
        %v1104 = vld [vmem:[#allocation10 + $0x50] sm:$0xf]
        %v1105 = vld [vmem:[#allocation10 + $0x54] sm:$0xf]
        %v1106 = vld [vmem:[#allocation10 + $0x58] sm:$0xf]
        %v1107 = vld [vmem:[#allocation10 + $0x5c] sm:$0xf]
        %v1108 = vld [vmem:[#allocation10 + $0x60] sm:$0xf]
        %v1109 = vld [vmem:[#allocation10 + $0x64] sm:$0xf]
        %v1110 = vld [vmem:[#allocation10 + $0x68] sm:$0xf]
        %v1111 = vld [vmem:[#allocation10 + $0x6c] sm:$0xf]
        %v1112 = vld [vmem:[#allocation10 + $0x70] sm:$0xf]
        %v1113 = vld [vmem:[#allocation10 + $0x74] sm:$0xf]
        %v1114 = vld [vmem:[#allocation10 + $0x78] sm:$0xf]
        %v1115 = vld [vmem:[#allocation10 + $0x7c] sm:$0xf]
        %v1116 = vld [vmem:[#allocation10 + $0x80] sm:$0xf]
        %v1117 = vld [vmem:[#allocation10 + $0x84] sm:$0xf]
        %v1118 = vld [vmem:[#allocation10 + $0x88] sm:$0xf]
        %v1119 = vld [vmem:[#allocation10 + $0x8c] sm:$0xf]
        %v1120 = vld [vmem:[#allocation10 + $0x90] sm:$0xf]
        %v1121 = vld [vmem:[#allocation10 + $0x94] sm:$0xf]
        %v1122 = vld [vmem:[#allocation10 + $0x98] sm:$0xf]
        %v1123 = vld [vmem:[#allocation10 + $0x9c] sm:$0xf]
        %v1124 = vld [vmem:[#allocation10 + $0xa0] sm:$0xf]
        %v1125 = vld [vmem:[#allocation10 + $0xa4] sm:$0xf]
        %v1126 = vld [vmem:[#allocation10 + $0xa8] sm:$0xf]
        %v1127 = vld [vmem:[#allocation10 + $0xac] sm:$0xf]
        %v1128 = vld [vmem:[#allocation10 + $0xb0] sm:$0xf]
        %v1129 = vld [vmem:[#allocation10 + $0xb4] sm:$0xf]
        %v1130 = vld [vmem:[#allocation10 + $0xb8] sm:$0xf]
        %v1131 = vld [vmem:[#allocation10 + $0xbc] sm:$0xf]
        %v1132 = vld [vmem:[#allocation10 + $0xc0] sm:$0xf]
        %v1133 = vld [vmem:[#allocation10 + $0xc4] sm:$0xf]
        %v1134 = vld [vmem:[#allocation10 + $0xc8] sm:$0xf]
        %v1135 = vld [vmem:[#allocation10 + $0xcc] sm:$0xf]
        %v1136 = vld [vmem:[#allocation10 + $0xd0] sm:$0xf]
        %v1137 = vld [vmem:[#allocation10 + $0xd4] sm:$0xf]
        %v1138 = vld [vmem:[#allocation10 + $0xd8] sm:$0xf]
        %v1139 = vld [vmem:[#allocation10 + $0xdc] sm:$0xf]
        %v1140 = vld [vmem:[#allocation10 + $0xe0] sm:$0xf]
        %v1141 = vld [vmem:[#allocation10 + $0xe4] sm:$0xf]
        %v1142 = vld [vmem:[#allocation10 + $0xe8] sm:$0xf]
        %v1143 = vld [vmem:[#allocation10 + $0xec] sm:$0xf]
        %v1144 = vld [vmem:[#allocation10 + $0xf0] sm:$0xf]
        %v1145 = vld [vmem:[#allocation10 + $0xf4] sm:$0xf]
        %v1146 = vld [vmem:[#allocation10 + $0xf8] sm:$0xf]
        %v1147 = vld [vmem:[#allocation10 + $0xfc] sm:$0xf]
        %v1148 = vld [vmem:[#allocation10 + $0x100] sm:$0xf]
        %v1149 = vld [vmem:[#allocation10 + $0x104] sm:$0xf]
        %v1150 = vld [vmem:[#allocation10 + $0x108] sm:$0xf]
        %v1151 = vld [vmem:[#allocation10 + $0x10c] sm:$0xf]
        %v1152 = vld [vmem:[#allocation10 + $0x110] sm:$0xf]
        %v1153 = vld [vmem:[#allocation10 + $0x114] sm:$0xf]
        %v1154 = vld [vmem:[#allocation10 + $0x118] sm:$0xf]
        %v1155 = vld [vmem:[#allocation10 + $0x11c] sm:$0xf]
        %v1156 = vld [vmem:[#allocation10 + $0x120] sm:$0xf]
        %v1157 = vld [vmem:[#allocation10 + $0x124] sm:$0xf]
        %v1158 = vld [vmem:[#allocation10 + $0x128] sm:$0xf]
        %v1159 = vld [vmem:[#allocation10 + $0x12c] sm:$0xf]
        %v1160 = vld [vmem:[#allocation10 + $0x130] sm:$0xf]
        %v1161 = vld [vmem:[#allocation10 + $0x134] sm:$0xf]
        %v1162 = vld [vmem:[#allocation10 + $0x138] sm:$0xf]
        %v1163 = vld [vmem:[#allocation10 + $0x13c] sm:$0xf]
        %v1164 = vld [vmem:[#allocation10 + $0x140] sm:$0xf]
        %v1165 = vld [vmem:[#allocation10 + $0x144] sm:$0xf]
        %v1166 = vld [vmem:[#allocation10 + $0x148] sm:$0xf]
        %v1167 = vld [vmem:[#allocation10 + $0x14c] sm:$0xf]
        %v1168 = vld [vmem:[#allocation10 + $0x150] sm:$0xf]
        %v1169 = vld [vmem:[#allocation10 + $0x154] sm:$0xf]
        %v1170 = vld [vmem:[#allocation10 + $0x158] sm:$0xf]
        %v1171 = vld [vmem:[#allocation10 + $0x15c] sm:$0xf]
        %v1172 = vld [vmem:[#allocation10 + $0x160] sm:$0xf]
        %v1173 = vld [vmem:[#allocation10 + $0x164] sm:$0xf]
        %v1174 = vld [vmem:[#allocation10 + $0x168] sm:$0xf]
        %v1175 = vld [vmem:[#allocation10 + $0x16c] sm:$0xf]
        %v1176 = vld [vmem:[#allocation10 + $0x170] sm:$0xf]
        %v1177 = vld [vmem:[#allocation10 + $0x174] sm:$0xf]
        %v1178 = vld [vmem:[#allocation10 + $0x178] sm:$0xf]
        %v1179 = vld [vmem:[#allocation10 + $0x17c] sm:$0xf]
        %v1180 = vld [vmem:[#allocation10 + $0x180] sm:$0xf]
        %v1181 = vld [vmem:[#allocation10 + $0x184] sm:$0xf]
        %v1182 = vld [vmem:[#allocation10 + $0x188] sm:$0xf]
        %v1183 = vld [vmem:[#allocation10 + $0x18c] sm:$0xf]
        %v1184 = vld [vmem:[#allocation10 + $0x190] sm:$0xf]
        %v1185 = vld [vmem:[#allocation10 + $0x194] sm:$0xf]
        %v1186 = vld [vmem:[#allocation10 + $0x198] sm:$0xf]
        %v1187 = vld [vmem:[#allocation10 + $0x19c] sm:$0xf]
        %v1188 = vld [vmem:[#allocation10 + $0x1a0] sm:$0xf]
        %v1189 = vld [vmem:[#allocation10 + $0x1a4] sm:$0xf]
        %v1190 = vld [vmem:[#allocation10 + $0x1a8] sm:$0xf]
        %v1191 = vld [vmem:[#allocation10 + $0x1ac] sm:$0xf]
        %v1192 = vld [vmem:[#allocation10 + $0x1b0] sm:$0xf]
        %v1193 = vld [vmem:[#allocation10 + $0x1b4] sm:$0xf]
        %v1194 = vld [vmem:[#allocation10 + $0x1b8] sm:$0xf]
        %v1195 = vld [vmem:[#allocation10 + $0x1bc] sm:$0xf]
        %v1196 = vpack.c.bf16 %v1071, %v1070
        %v1197 = vpack.c.bf16 %v1073, %v1072
        %v1198 = vpack.c.bf16 %v1075, %v1074
        %v1199 = vpack.c.bf16 %v1077, %v1076
        %v1200 = vpack.c.bf16 %v1079, %v1078
        %v1201 = vpack.c.bf16 %v1081, %v1080
        %v1202 = vpack.c.bf16 %v1083, %v1082
        %v1203 = vld [vmem:[%s9 + $0x1] sm:$0x1]
        %v1204 = vperm.slane %v1203, 0
        %v1317 = vunpack.c.l.b16 %v1084
        %v1318 = vunpack.c.l.b16 %v1085
        %v1319 = vunpack.c.l.b16 %v1086
        %v1320 = vunpack.c.l.b16 %v1087
        %v1321 = vunpack.c.l.b16 %v1088
        %v1322 = vunpack.c.l.b16 %v1089
        %v1323 = vunpack.c.l.b16 %v1090
        %v1324 = vunpack.c.l.b16 %v1091
        %v1325 = vunpack.c.l.b16 %v1092
        %v1326 = vunpack.c.l.b16 %v1093
        %v1327 = vunpack.c.l.b16 %v1094
        %v1328 = vunpack.c.l.b16 %v1095
        %v1329 = vunpack.c.l.b16 %v1096
        %v1330 = vunpack.c.l.b16 %v1097
        %v1331 = vunpack.c.l.b16 %v1098
        %v1332 = vunpack.c.l.b16 %v1099
        %v1333 = vunpack.c.l.b16 %v1100
        %v1334 = vunpack.c.l.b16 %v1101
        %v1335 = vunpack.c.l.b16 %v1102
        %v1336 = vunpack.c.l.b16 %v1103
        %v1337 = vunpack.c.l.b16 %v1104
        %v1338 = vunpack.c.l.b16 %v1105
        %v1339 = vunpack.c.l.b16 %v1106
        %v1340 = vunpack.c.l.b16 %v1107
        %v1341 = vunpack.c.l.b16 %v1108
        %v1342 = vunpack.c.l.b16 %v1109
        %v1343 = vunpack.c.l.b16 %v1110
        %v1344 = vunpack.c.l.b16 %v1111
        %v1345 = vunpack.c.l.b16 %v1112
        %v1346 = vunpack.c.l.b16 %v1113
        %v1347 = vunpack.c.l.b16 %v1114
        %v1348 = vunpack.c.l.b16 %v1115
        %v1349 = vunpack.c.l.b16 %v1116
        %v1350 = vunpack.c.l.b16 %v1117
        %v1351 = vunpack.c.l.b16 %v1118
        %v1352 = vunpack.c.l.b16 %v1119
        %v1353 = vunpack.c.l.b16 %v1120
        %v1354 = vunpack.c.l.b16 %v1121
        %v1355 = vunpack.c.l.b16 %v1122
        %v1356 = vunpack.c.l.b16 %v1123
        %v1357 = vunpack.c.l.b16 %v1124
        %v1358 = vunpack.c.l.b16 %v1125
        %v1359 = vunpack.c.l.b16 %v1126
        %v1360 = vunpack.c.l.b16 %v1127
        %v1361 = vunpack.c.l.b16 %v1128
        %v1362 = vunpack.c.l.b16 %v1129
        %v1363 = vunpack.c.l.b16 %v1130
        %v1364 = vunpack.c.l.b16 %v1131
        %v1365 = vunpack.c.l.b16 %v1132
        %v1366 = vunpack.c.l.b16 %v1133
        %v1367 = vunpack.c.l.b16 %v1134
        %v1368 = vunpack.c.l.b16 %v1135
        %v1369 = vunpack.c.l.b16 %v1136
        %v1370 = vunpack.c.l.b16 %v1137
        %v1371 = vunpack.c.l.b16 %v1138
        %v1372 = vunpack.c.l.b16 %v1139
        %v1373 = vunpack.c.l.b16 %v1140
        %v1374 = vunpack.c.l.b16 %v1141
        %v1375 = vunpack.c.l.b16 %v1142
        %v1376 = vunpack.c.l.b16 %v1143
        %v1377 = vunpack.c.l.b16 %v1144
        %v1378 = vunpack.c.l.b16 %v1145
        %v1379 = vunpack.c.l.b16 %v1146
        %v1380 = vunpack.c.l.b16 %v1147
        %v1381 = vunpack.c.l.b16 %v1148
        %v1382 = vunpack.c.l.b16 %v1149
        %v1383 = vunpack.c.l.b16 %v1150
        %v1384 = vunpack.c.l.b16 %v1151
        %v1385 = vunpack.c.l.b16 %v1152
        %v1386 = vunpack.c.l.b16 %v1153
        %v1387 = vunpack.c.l.b16 %v1154
        %v1388 = vunpack.c.l.b16 %v1155
        %v1389 = vunpack.c.l.b16 %v1156
        %v1390 = vunpack.c.l.b16 %v1157
        %v1391 = vunpack.c.l.b16 %v1158
        %v1392 = vunpack.c.l.b16 %v1159
        %v1393 = vunpack.c.l.b16 %v1160
        %v1394 = vunpack.c.l.b16 %v1161
        %v1395 = vunpack.c.l.b16 %v1162
        %v1396 = vunpack.c.l.b16 %v1163
        %v1397 = vunpack.c.l.b16 %v1164
        %v1398 = vunpack.c.l.b16 %v1165
        %v1399 = vunpack.c.l.b16 %v1166
        %v1400 = vunpack.c.l.b16 %v1167
        %v1401 = vunpack.c.l.b16 %v1168
        %v1402 = vunpack.c.l.b16 %v1169
        %v1403 = vunpack.c.l.b16 %v1170
        %v1404 = vunpack.c.l.b16 %v1171
        %v1405 = vunpack.c.l.b16 %v1172
        %v1406 = vunpack.c.l.b16 %v1173
        %v1407 = vunpack.c.l.b16 %v1174
        %v1408 = vunpack.c.l.b16 %v1175
        %v1409 = vunpack.c.l.b16 %v1176
        %v1410 = vunpack.c.l.b16 %v1177
        %v1411 = vunpack.c.l.b16 %v1178
        %v1412 = vunpack.c.l.b16 %v1179
        %v1413 = vunpack.c.l.b16 %v1180
        %v1414 = vunpack.c.l.b16 %v1181
        %v1415 = vunpack.c.l.b16 %v1182
        %v1416 = vunpack.c.l.b16 %v1183
        %v1417 = vunpack.c.l.b16 %v1184
        %v1418 = vunpack.c.l.b16 %v1185
        %v1419 = vunpack.c.l.b16 %v1186
        %v1420 = vunpack.c.l.b16 %v1187
        %v1421 = vunpack.c.l.b16 %v1188
        %v1422 = vunpack.c.l.b16 %v1189
        %v1423 = vunpack.c.l.b16 %v1190
        %v1424 = vunpack.c.l.b16 %v1191
        %v1425 = vunpack.c.l.b16 %v1192
        %v1426 = vunpack.c.l.b16 %v1193
        %v1427 = vunpack.c.l.b16 %v1194
        %v1428 = vunpack.c.l.b16 %v1195
        %v1429 = vpack.c.b16 %v1318, %v1317
        %v1430 = vpack.c.b16 %v1320, %v1319
        %v1431 = vpack.c.b16 %v1322, %v1321
        %v1432 = vpack.c.b16 %v1324, %v1323
        %v1433 = vpack.c.b16 %v1326, %v1325
        %v1434 = vpack.c.b16 %v1328, %v1327
        %v1435 = vpack.c.b16 %v1330, %v1329
        %v1436 = vpack.c.b16 %v1332, %v1331
        %v1437 = vpack.c.b16 %v1334, %v1333
        %v1438 = vpack.c.b16 %v1336, %v1335
        %v1439 = vpack.c.b16 %v1338, %v1337
        %v1440 = vpack.c.b16 %v1340, %v1339
        %v1441 = vpack.c.b16 %v1342, %v1341
        %v1442 = vpack.c.b16 %v1344, %v1343
        %v1443 = vpack.c.b16 %v1346, %v1345
        %v1444 = vpack.c.b16 %v1348, %v1347
        %v1445 = vpack.c.b16 %v1350, %v1349
        %v1446 = vpack.c.b16 %v1352, %v1351
        %v1447 = vpack.c.b16 %v1354, %v1353
        %v1448 = vpack.c.b16 %v1356, %v1355
        %v1449 = vpack.c.b16 %v1358, %v1357
        %v1450 = vpack.c.b16 %v1360, %v1359
        %v1451 = vpack.c.b16 %v1362, %v1361
        %v1452 = vpack.c.b16 %v1364, %v1363
        %v1453 = vpack.c.b16 %v1366, %v1365
        %v1454 = vpack.c.b16 %v1368, %v1367
        %v1455 = vpack.c.b16 %v1370, %v1369
        %v1456 = vpack.c.b16 %v1372, %v1371
        %v1457 = vpack.c.b16 %v1374, %v1373
        %v1458 = vpack.c.b16 %v1376, %v1375
        %v1459 = vpack.c.b16 %v1378, %v1377
        %v1460 = vpack.c.b16 %v1380, %v1379
        %v1461 = vpack.c.b16 %v1382, %v1381
        %v1462 = vpack.c.b16 %v1384, %v1383
        %v1463 = vpack.c.b16 %v1386, %v1385
        %v1464 = vpack.c.b16 %v1388, %v1387
        %v1465 = vpack.c.b16 %v1390, %v1389
        %v1466 = vpack.c.b16 %v1392, %v1391
        %v1467 = vpack.c.b16 %v1394, %v1393
        %v1468 = vpack.c.b16 %v1396, %v1395
        %v1469 = vpack.c.b16 %v1398, %v1397
        %v1470 = vpack.c.b16 %v1400, %v1399
        %v1471 = vpack.c.b16 %v1402, %v1401
        %v1472 = vpack.c.b16 %v1404, %v1403
        %v1473 = vpack.c.b16 %v1406, %v1405
        %v1474 = vpack.c.b16 %v1408, %v1407
        %v1475 = vpack.c.b16 %v1410, %v1409
        %v1476 = vpack.c.b16 %v1412, %v1411
        %v1477 = vpack.c.b16 %v1414, %v1413
        %v1478 = vpack.c.b16 %v1416, %v1415
        %v1479 = vpack.c.b16 %v1418, %v1417
        %v1480 = vpack.c.b16 %v1420, %v1419
        %v1481 = vpack.c.b16 %v1422, %v1421
        %v1482 = vpack.c.b16 %v1424, %v1423
        %v1483 = vpack.c.b16 %v1426, %v1425
        %v1484 = vpack.c.b16 %v1428, %v1427
        %1541 = vmatpush.bf16.msra.mxu0 %v1436
        %1542 = vmatpush.bf16.msra.mxu0 %v1435
        %1543 = vmatpush.bf16.msra.mxu0 %v1434
        %1544 = vmatpush.bf16.msra.mxu0 %v1433
        %1545 = vmatpush.bf16.msra.mxu0 %v1432
        %1546 = vmatpush.bf16.msra.mxu0 %v1431
        %1547 = vmatpush.bf16.msra.mxu0 %v1430
        %1548 = vmatpush.bf16.msra.mxu0 %v1429
        %1549 = vmatmul.bf16.gmra.mxu0 %v1196
        %v1550 = vpop.f32.mrf.mxu0
        %v1551 = vadd.f32 %v1204, %v1550
        %v1552 = vpop.f32.mrf.mxu0
        %v1553 = vadd.f32 %v1204, %v1552
        %1554 = vdwg.mxu0
        %1555 = vmatpush.bf16.msra.mxu0 %v1444
        %1556 = vmatpush.bf16.msra.mxu0 %v1443
        %1557 = vmatpush.bf16.msra.mxu0 %v1442
        %1558 = vmatpush.bf16.msra.mxu0 %v1441
        %1559 = vmatpush.bf16.msra.mxu0 %v1440
        %1560 = vmatpush.bf16.msra.mxu0 %v1439
        %1561 = vmatpush.bf16.msra.mxu0 %v1438
        %1562 = vmatpush.bf16.msra.mxu0 %v1437
        %1563 = vmatmul.bf16.gmra.mxu0 %v1197
        %v1564 = vpop.f32.mrf.mxu0
        %v1565 = vadd.f32 %v1551, %v1564
        %v1566 = vpop.f32.mrf.mxu0
        %v1567 = vadd.f32 %v1553, %v1566
        %1568 = vdwg.mxu0
        %1569 = vmatpush.bf16.msra.mxu0 %v1452
        %1570 = vmatpush.bf16.msra.mxu0 %v1451
        %1571 = vmatpush.bf16.msra.mxu0 %v1450
        %1572 = vmatpush.bf16.msra.mxu0 %v1449
        %1573 = vmatpush.bf16.msra.mxu0 %v1448
        %1574 = vmatpush.bf16.msra.mxu0 %v1447
        %1575 = vmatpush.bf16.msra.mxu0 %v1446
        %1576 = vmatpush.bf16.msra.mxu0 %v1445
        %1577 = vmatmul.bf16.gmra.mxu0 %v1198
        %v1578 = vpop.f32.mrf.mxu0
        %v1579 = vadd.f32 %v1565, %v1578
        %v1580 = vpop.f32.mrf.mxu0
        %v1581 = vadd.f32 %v1567, %v1580
        %1582 = vdwg.mxu0
        %1583 = vmatpush.bf16.msra.mxu0 %v1460
        %1584 = vmatpush.bf16.msra.mxu0 %v1459
        %1585 = vmatpush.bf16.msra.mxu0 %v1458
        %1586 = vmatpush.bf16.msra.mxu0 %v1457
        %1587 = vmatpush.bf16.msra.mxu0 %v1456
        %1588 = vmatpush.bf16.msra.mxu0 %v1455
        %1589 = vmatpush.bf16.msra.mxu0 %v1454
        %1590 = vmatpush.bf16.msra.mxu0 %v1453
        %1591 = vmatmul.bf16.gmra.mxu0 %v1199
        %v1592 = vpop.f32.mrf.mxu0
        %v1593 = vadd.f32 %v1579, %v1592
        %v1594 = vpop.f32.mrf.mxu0
        %v1595 = vadd.f32 %v1581, %v1594
        %1596 = vdwg.mxu0
        %1597 = vmatpush.bf16.msra.mxu0 %v1468
        %1598 = vmatpush.bf16.msra.mxu0 %v1467
        %1599 = vmatpush.bf16.msra.mxu0 %v1466
        %1600 = vmatpush.bf16.msra.mxu0 %v1465
        %1601 = vmatpush.bf16.msra.mxu0 %v1464
        %1602 = vmatpush.bf16.msra.mxu0 %v1463
        %1603 = vmatpush.bf16.msra.mxu0 %v1462
        %1604 = vmatpush.bf16.msra.mxu0 %v1461
        %1605 = vmatmul.bf16.gmra.mxu0 %v1200
        %v1606 = vpop.f32.mrf.mxu0
        %v1607 = vadd.f32 %v1593, %v1606
        %v1608 = vpop.f32.mrf.mxu0
        %v1609 = vadd.f32 %v1595, %v1608
        %1610 = vdwg.mxu0
        %1611 = vmatpush.bf16.msra.mxu0 %v1476
        %1612 = vmatpush.bf16.msra.mxu0 %v1475
        %1613 = vmatpush.bf16.msra.mxu0 %v1474
        %1614 = vmatpush.bf16.msra.mxu0 %v1473
        %1615 = vmatpush.bf16.msra.mxu0 %v1472
        %1616 = vmatpush.bf16.msra.mxu0 %v1471
        %1617 = vmatpush.bf16.msra.mxu0 %v1470
        %1618 = vmatpush.bf16.msra.mxu0 %v1469
        %1619 = vmatmul.bf16.gmra.mxu0 %v1201
        %v1620 = vpop.f32.mrf.mxu0
        %v1621 = vadd.f32 %v1607, %v1620
        %v1622 = vpop.f32.mrf.mxu0
        %v1623 = vadd.f32 %v1609, %v1622
        %1624 = vdwg.mxu0
        %1625 = vmatpush.bf16.msra.mxu0 %v1484
        %1626 = vmatpush.bf16.msra.mxu0 %v1483
        %1627 = vmatpush.bf16.msra.mxu0 %v1482
        %1628 = vmatpush.bf16.msra.mxu0 %v1481
        %1629 = vmatpush.bf16.msra.mxu0 %v1480
        %1630 = vmatpush.bf16.msra.mxu0 %v1479
        %1631 = vmatpush.bf16.msra.mxu0 %v1478
        %1632 = vmatpush.bf16.msra.mxu0 %v1477
        %1633 = vmatmul.bf16.gmra.mxu0 %v1202
        %v1634 = vpop.f32.mrf.mxu0
        %v1635 = vadd.f32 %v1621, %v1634
        %v1636 = vpop.f32.mrf.mxu0
        %v1637 = vadd.f32 %v1623, %v1636
        %1638 = vdwg.mxu0
        %v1639 = vmax.f32 %v1635, 0.0
        %v1640 = vmax.f32 %v1637, 0.0
        %v1641 = vsel %vm483, %v1639, 0.0
        %v1642 = vsel %vm484, %v1640, 0.0
        %1643 = vst [vmem:[#allocation2 + $0x8] sm:$0xff] %v1641
        %1644 = vst [vmem:[#allocation2 + $0x10] sm:$0xff] %v1642
        %v1645 = vld [vmem:[#allocation2 + $0x5] sm:$0xff]
        %v1646 = vld [vmem:[#allocation2 + $0xd] sm:$0xff]
        %v1647 = vld [vmem:[#allocation2 + $0x6] sm:$0xff]
        %v1648 = vld [vmem:[#allocation2 + $0xe] sm:$0xff]
        %v1649 = vld [vmem:[#allocation2 + $0x7] sm:$0xff]
        %v1650 = vld [vmem:[#allocation2 + $0xf] sm:$0xff]
        %v1651 = vld [vmem:[#allocation2 + $0x8] sm:$0xff]
        %v1652 = vld [vmem:[#allocation2 + $0x10] sm:$0xff]
        %v1653 = vld [vmem:[#allocation2 + $0x9] sm:$0xff]
        %v1654 = vld [vmem:[#allocation2 + $0x11] sm:$0xff]
        %v1655 = vld [vmem:[#allocation2 + $0xa] sm:$0xff]
        %v1656 = vld [vmem:[#allocation2 + $0x12] sm:$0xff]
        %v1657 = vld [vmem:[#allocation2 + $0xb] sm:$0xff]
        %v1658 = vld [vmem:[#allocation2 + $0x13] sm:$0xff]
        %v1659 = vld [vmem:[#allocation11] sm:$0xf]
        %v1660 = vld [vmem:[#allocation11 + $0x4] sm:$0xf]
        %v1661 = vld [vmem:[#allocation11 + $0x8] sm:$0xf]
        %v1662 = vld [vmem:[#allocation11 + $0xc] sm:$0xf]
        %v1663 = vld [vmem:[#allocation11 + $0x10] sm:$0xf]
        %v1664 = vld [vmem:[#allocation11 + $0x14] sm:$0xf]
        %v1665 = vld [vmem:[#allocation11 + $0x18] sm:$0xf]
        %v1666 = vld [vmem:[#allocation11 + $0x1c] sm:$0xf]
        %v1667 = vld [vmem:[#allocation11 + $0x20] sm:$0xf]
        %v1668 = vld [vmem:[#allocation11 + $0x24] sm:$0xf]
        %v1669 = vld [vmem:[#allocation11 + $0x28] sm:$0xf]
        %v1670 = vld [vmem:[#allocation11 + $0x2c] sm:$0xf]
        %v1671 = vld [vmem:[#allocation11 + $0x30] sm:$0xf]
        %v1672 = vld [vmem:[#allocation11 + $0x34] sm:$0xf]
        %v1673 = vld [vmem:[#allocation11 + $0x38] sm:$0xf]
        %v1674 = vld [vmem:[#allocation11 + $0x3c] sm:$0xf]
        %v1675 = vld [vmem:[#allocation11 + $0x40] sm:$0xf]
        %v1676 = vld [vmem:[#allocation11 + $0x44] sm:$0xf]
        %v1677 = vld [vmem:[#allocation11 + $0x48] sm:$0xf]
        %v1678 = vld [vmem:[#allocation11 + $0x4c] sm:$0xf]
        %v1679 = vld [vmem:[#allocation11 + $0x50] sm:$0xf]
        %v1680 = vld [vmem:[#allocation11 + $0x54] sm:$0xf]
        %v1681 = vld [vmem:[#allocation11 + $0x58] sm:$0xf]
        %v1682 = vld [vmem:[#allocation11 + $0x5c] sm:$0xf]
        %v1683 = vld [vmem:[#allocation11 + $0x60] sm:$0xf]
        %v1684 = vld [vmem:[#allocation11 + $0x64] sm:$0xf]
        %v1685 = vld [vmem:[#allocation11 + $0x68] sm:$0xf]
        %v1686 = vld [vmem:[#allocation11 + $0x6c] sm:$0xf]
        %v1687 = vld [vmem:[#allocation11 + $0x70] sm:$0xf]
        %v1688 = vld [vmem:[#allocation11 + $0x74] sm:$0xf]
        %v1689 = vld [vmem:[#allocation11 + $0x78] sm:$0xf]
        %v1690 = vld [vmem:[#allocation11 + $0x7c] sm:$0xf]
        %v1691 = vld [vmem:[#allocation11 + $0x80] sm:$0xf]
        %v1692 = vld [vmem:[#allocation11 + $0x84] sm:$0xf]
        %v1693 = vld [vmem:[#allocation11 + $0x88] sm:$0xf]
        %v1694 = vld [vmem:[#allocation11 + $0x8c] sm:$0xf]
        %v1695 = vld [vmem:[#allocation11 + $0x90] sm:$0xf]
        %v1696 = vld [vmem:[#allocation11 + $0x94] sm:$0xf]
        %v1697 = vld [vmem:[#allocation11 + $0x98] sm:$0xf]
        %v1698 = vld [vmem:[#allocation11 + $0x9c] sm:$0xf]
        %v1699 = vld [vmem:[#allocation11 + $0xa0] sm:$0xf]
        %v1700 = vld [vmem:[#allocation11 + $0xa4] sm:$0xf]
        %v1701 = vld [vmem:[#allocation11 + $0xa8] sm:$0xf]
        %v1702 = vld [vmem:[#allocation11 + $0xac] sm:$0xf]
        %v1703 = vld [vmem:[#allocation11 + $0xb0] sm:$0xf]
        %v1704 = vld [vmem:[#allocation11 + $0xb4] sm:$0xf]
        %v1705 = vld [vmem:[#allocation11 + $0xb8] sm:$0xf]
        %v1706 = vld [vmem:[#allocation11 + $0xbc] sm:$0xf]
        %v1707 = vld [vmem:[#allocation11 + $0xc0] sm:$0xf]
        %v1708 = vld [vmem:[#allocation11 + $0xc4] sm:$0xf]
        %v1709 = vld [vmem:[#allocation11 + $0xc8] sm:$0xf]
        %v1710 = vld [vmem:[#allocation11 + $0xcc] sm:$0xf]
        %v1711 = vld [vmem:[#allocation11 + $0xd0] sm:$0xf]
        %v1712 = vld [vmem:[#allocation11 + $0xd4] sm:$0xf]
        %v1713 = vld [vmem:[#allocation11 + $0xd8] sm:$0xf]
        %v1714 = vld [vmem:[#allocation11 + $0xdc] sm:$0xf]
        %v1715 = vld [vmem:[#allocation11 + $0xe0] sm:$0xf]
        %v1716 = vld [vmem:[#allocation11 + $0xe4] sm:$0xf]
        %v1717 = vld [vmem:[#allocation11 + $0xe8] sm:$0xf]
        %v1718 = vld [vmem:[#allocation11 + $0xec] sm:$0xf]
        %v1719 = vld [vmem:[#allocation11 + $0xf0] sm:$0xf]
        %v1720 = vld [vmem:[#allocation11 + $0xf4] sm:$0xf]
        %v1721 = vld [vmem:[#allocation11 + $0xf8] sm:$0xf]
        %v1722 = vld [vmem:[#allocation11 + $0xfc] sm:$0xf]
        %v1723 = vld [vmem:[#allocation11 + $0x100] sm:$0xf]
        %v1724 = vld [vmem:[#allocation11 + $0x104] sm:$0xf]
        %v1725 = vld [vmem:[#allocation11 + $0x108] sm:$0xf]
        %v1726 = vld [vmem:[#allocation11 + $0x10c] sm:$0xf]
        %v1727 = vld [vmem:[#allocation11 + $0x110] sm:$0xf]
        %v1728 = vld [vmem:[#allocation11 + $0x114] sm:$0xf]
        %v1729 = vld [vmem:[#allocation11 + $0x118] sm:$0xf]
        %v1730 = vld [vmem:[#allocation11 + $0x11c] sm:$0xf]
        %v1731 = vld [vmem:[#allocation11 + $0x120] sm:$0xf]
        %v1732 = vld [vmem:[#allocation11 + $0x124] sm:$0xf]
        %v1733 = vld [vmem:[#allocation11 + $0x128] sm:$0xf]
        %v1734 = vld [vmem:[#allocation11 + $0x12c] sm:$0xf]
        %v1735 = vld [vmem:[#allocation11 + $0x130] sm:$0xf]
        %v1736 = vld [vmem:[#allocation11 + $0x134] sm:$0xf]
        %v1737 = vld [vmem:[#allocation11 + $0x138] sm:$0xf]
        %v1738 = vld [vmem:[#allocation11 + $0x13c] sm:$0xf]
        %v1739 = vld [vmem:[#allocation11 + $0x140] sm:$0xf]
        %v1740 = vld [vmem:[#allocation11 + $0x144] sm:$0xf]
        %v1741 = vld [vmem:[#allocation11 + $0x148] sm:$0xf]
        %v1742 = vld [vmem:[#allocation11 + $0x14c] sm:$0xf]
        %v1743 = vld [vmem:[#allocation11 + $0x150] sm:$0xf]
        %v1744 = vld [vmem:[#allocation11 + $0x154] sm:$0xf]
        %v1745 = vld [vmem:[#allocation11 + $0x158] sm:$0xf]
        %v1746 = vld [vmem:[#allocation11 + $0x15c] sm:$0xf]
        %v1747 = vld [vmem:[#allocation11 + $0x160] sm:$0xf]
        %v1748 = vld [vmem:[#allocation11 + $0x164] sm:$0xf]
        %v1749 = vld [vmem:[#allocation11 + $0x168] sm:$0xf]
        %v1750 = vld [vmem:[#allocation11 + $0x16c] sm:$0xf]
        %v1751 = vld [vmem:[#allocation11 + $0x170] sm:$0xf]
        %v1752 = vld [vmem:[#allocation11 + $0x174] sm:$0xf]
        %v1753 = vld [vmem:[#allocation11 + $0x178] sm:$0xf]
        %v1754 = vld [vmem:[#allocation11 + $0x17c] sm:$0xf]
        %v1755 = vld [vmem:[#allocation11 + $0x180] sm:$0xf]
        %v1756 = vld [vmem:[#allocation11 + $0x184] sm:$0xf]
        %v1757 = vld [vmem:[#allocation11 + $0x188] sm:$0xf]
        %v1758 = vld [vmem:[#allocation11 + $0x18c] sm:$0xf]
        %v1759 = vld [vmem:[#allocation11 + $0x190] sm:$0xf]
        %v1760 = vld [vmem:[#allocation11 + $0x194] sm:$0xf]
        %v1761 = vld [vmem:[#allocation11 + $0x198] sm:$0xf]
        %v1762 = vld [vmem:[#allocation11 + $0x19c] sm:$0xf]
        %v1763 = vld [vmem:[#allocation11 + $0x1a0] sm:$0xf]
        %v1764 = vld [vmem:[#allocation11 + $0x1a4] sm:$0xf]
        %v1765 = vld [vmem:[#allocation11 + $0x1a8] sm:$0xf]
        %v1766 = vld [vmem:[#allocation11 + $0x1ac] sm:$0xf]
        %v1767 = vld [vmem:[#allocation11 + $0x1b0] sm:$0xf]
        %v1768 = vld [vmem:[#allocation11 + $0x1b4] sm:$0xf]
        %v1769 = vld [vmem:[#allocation11 + $0x1b8] sm:$0xf]
        %v1770 = vld [vmem:[#allocation11 + $0x1bc] sm:$0xf]
        %v1771 = vld [vmem:[#allocation11 + $0x1c0] sm:$0xf]
        %v1772 = vld [vmem:[#allocation11 + $0x1c4] sm:$0xf]
        %v1773 = vld [vmem:[#allocation11 + $0x1c8] sm:$0xf]
        %v1774 = vld [vmem:[#allocation11 + $0x1cc] sm:$0xf]
        %v1775 = vld [vmem:[#allocation11 + $0x1d0] sm:$0xf]
        %v1776 = vld [vmem:[#allocation11 + $0x1d4] sm:$0xf]
        %v1777 = vld [vmem:[#allocation11 + $0x1d8] sm:$0xf]
        %v1778 = vld [vmem:[#allocation11 + $0x1dc] sm:$0xf]
        %v1779 = vld [vmem:[#allocation11 + $0x1e0] sm:$0xf]
        %v1780 = vld [vmem:[#allocation11 + $0x1e4] sm:$0xf]
        %v1781 = vld [vmem:[#allocation11 + $0x1e8] sm:$0xf]
        %v1782 = vld [vmem:[#allocation11 + $0x1ec] sm:$0xf]
        %v1783 = vld [vmem:[#allocation11 + $0x1f0] sm:$0xf]
        %v1784 = vld [vmem:[#allocation11 + $0x1f4] sm:$0xf]
        %v1785 = vld [vmem:[#allocation11 + $0x1f8] sm:$0xf]
        %v1786 = vld [vmem:[#allocation11 + $0x1fc] sm:$0xf]
        %v1787 = vpack.c.bf16 %v1646, %v1645
        %v1788 = vpack.c.bf16 %v1648, %v1647
        %v1789 = vpack.c.bf16 %v1650, %v1649
        %v1790 = vpack.c.bf16 %v1652, %v1651
        %v1791 = vpack.c.bf16 %v1654, %v1653
        %v1792 = vpack.c.bf16 %v1656, %v1655
        %v1793 = vpack.c.bf16 %v1658, %v1657
        %v1794 = vpack.c.bf16 %v1067, %v1066
        %v1795 = vld [vmem:[%s9 + $0x2] sm:$0x1]
        %v1796 = vperm.slane %v1795, 0
        %v1925 = vunpack.c.l.b16 %v1659
        %v1926 = vunpack.c.l.b16 %v1660
        %v1927 = vunpack.c.l.b16 %v1661
        %v1928 = vunpack.c.l.b16 %v1662
        %v1929 = vunpack.c.l.b16 %v1663
        %v1930 = vunpack.c.l.b16 %v1664
        %v1931 = vunpack.c.l.b16 %v1665
        %v1932 = vunpack.c.l.b16 %v1666
        %v1933 = vunpack.c.l.b16 %v1667
        %v1934 = vunpack.c.l.b16 %v1668
        %v1935 = vunpack.c.l.b16 %v1669
        %v1936 = vunpack.c.l.b16 %v1670
        %v1937 = vunpack.c.l.b16 %v1671
        %v1938 = vunpack.c.l.b16 %v1672
        %v1939 = vunpack.c.l.b16 %v1673
        %v1940 = vunpack.c.l.b16 %v1674
        %v1941 = vunpack.c.l.b16 %v1675
        %v1942 = vunpack.c.l.b16 %v1676
        %v1943 = vunpack.c.l.b16 %v1677
        %v1944 = vunpack.c.l.b16 %v1678
        %v1945 = vunpack.c.l.b16 %v1679
        %v1946 = vunpack.c.l.b16 %v1680
        %v1947 = vunpack.c.l.b16 %v1681
        %v1948 = vunpack.c.l.b16 %v1682
        %v1949 = vunpack.c.l.b16 %v1683
        %v1950 = vunpack.c.l.b16 %v1684
        %v1951 = vunpack.c.l.b16 %v1685
        %v1952 = vunpack.c.l.b16 %v1686
        %v1953 = vunpack.c.l.b16 %v1687
        %v1954 = vunpack.c.l.b16 %v1688
        %v1955 = vunpack.c.l.b16 %v1689
        %v1956 = vunpack.c.l.b16 %v1690
        %v1957 = vunpack.c.l.b16 %v1691
        %v1958 = vunpack.c.l.b16 %v1692
        %v1959 = vunpack.c.l.b16 %v1693
        %v1960 = vunpack.c.l.b16 %v1694
        %v1961 = vunpack.c.l.b16 %v1695
        %v1962 = vunpack.c.l.b16 %v1696
        %v1963 = vunpack.c.l.b16 %v1697
        %v1964 = vunpack.c.l.b16 %v1698
        %v1965 = vunpack.c.l.b16 %v1699
        %v1966 = vunpack.c.l.b16 %v1700
        %v1967 = vunpack.c.l.b16 %v1701
        %v1968 = vunpack.c.l.b16 %v1702
        %v1969 = vunpack.c.l.b16 %v1703
        %v1970 = vunpack.c.l.b16 %v1704
        %v1971 = vunpack.c.l.b16 %v1705
        %v1972 = vunpack.c.l.b16 %v1706
        %v1973 = vunpack.c.l.b16 %v1707
        %v1974 = vunpack.c.l.b16 %v1708
        %v1975 = vunpack.c.l.b16 %v1709
        %v1976 = vunpack.c.l.b16 %v1710
        %v1977 = vunpack.c.l.b16 %v1711
        %v1978 = vunpack.c.l.b16 %v1712
        %v1979 = vunpack.c.l.b16 %v1713
        %v1980 = vunpack.c.l.b16 %v1714
        %v1981 = vunpack.c.l.b16 %v1715
        %v1982 = vunpack.c.l.b16 %v1716
        %v1983 = vunpack.c.l.b16 %v1717
        %v1984 = vunpack.c.l.b16 %v1718
        %v1985 = vunpack.c.l.b16 %v1719
        %v1986 = vunpack.c.l.b16 %v1720
        %v1987 = vunpack.c.l.b16 %v1721
        %v1988 = vunpack.c.l.b16 %v1722
        %v1989 = vunpack.c.l.b16 %v1723
        %v1990 = vunpack.c.l.b16 %v1724
        %v1991 = vunpack.c.l.b16 %v1725
        %v1992 = vunpack.c.l.b16 %v1726
        %v1993 = vunpack.c.l.b16 %v1727
        %v1994 = vunpack.c.l.b16 %v1728
        %v1995 = vunpack.c.l.b16 %v1729
        %v1996 = vunpack.c.l.b16 %v1730
        %v1997 = vunpack.c.l.b16 %v1731
        %v1998 = vunpack.c.l.b16 %v1732
        %v1999 = vunpack.c.l.b16 %v1733
        %v2000 = vunpack.c.l.b16 %v1734
        %v2001 = vunpack.c.l.b16 %v1735
        %v2002 = vunpack.c.l.b16 %v1736
        %v2003 = vunpack.c.l.b16 %v1737
        %v2004 = vunpack.c.l.b16 %v1738
        %v2005 = vunpack.c.l.b16 %v1739
        %v2006 = vunpack.c.l.b16 %v1740
        %v2007 = vunpack.c.l.b16 %v1741
        %v2008 = vunpack.c.l.b16 %v1742
        %v2009 = vunpack.c.l.b16 %v1743
        %v2010 = vunpack.c.l.b16 %v1744
        %v2011 = vunpack.c.l.b16 %v1745
        %v2012 = vunpack.c.l.b16 %v1746
        %v2013 = vunpack.c.l.b16 %v1747
        %v2014 = vunpack.c.l.b16 %v1748
        %v2015 = vunpack.c.l.b16 %v1749
        %v2016 = vunpack.c.l.b16 %v1750
        %v2017 = vunpack.c.l.b16 %v1751
        %v2018 = vunpack.c.l.b16 %v1752
        %v2019 = vunpack.c.l.b16 %v1753
        %v2020 = vunpack.c.l.b16 %v1754
        %v2021 = vunpack.c.l.b16 %v1755
        %v2022 = vunpack.c.l.b16 %v1756
        %v2023 = vunpack.c.l.b16 %v1757
        %v2024 = vunpack.c.l.b16 %v1758
        %v2025 = vunpack.c.l.b16 %v1759
        %v2026 = vunpack.c.l.b16 %v1760
        %v2027 = vunpack.c.l.b16 %v1761
        %v2028 = vunpack.c.l.b16 %v1762
        %v2029 = vunpack.c.l.b16 %v1763
        %v2030 = vunpack.c.l.b16 %v1764
        %v2031 = vunpack.c.l.b16 %v1765
        %v2032 = vunpack.c.l.b16 %v1766
        %v2033 = vunpack.c.l.b16 %v1767
        %v2034 = vunpack.c.l.b16 %v1768
        %v2035 = vunpack.c.l.b16 %v1769
        %v2036 = vunpack.c.l.b16 %v1770
        %v2037 = vunpack.c.l.b16 %v1771
        %v2038 = vunpack.c.l.b16 %v1772
        %v2039 = vunpack.c.l.b16 %v1773
        %v2040 = vunpack.c.l.b16 %v1774
        %v2041 = vunpack.c.l.b16 %v1775
        %v2042 = vunpack.c.l.b16 %v1776
        %v2043 = vunpack.c.l.b16 %v1777
        %v2044 = vunpack.c.l.b16 %v1778
        %v2045 = vunpack.c.l.b16 %v1779
        %v2046 = vunpack.c.l.b16 %v1780
        %v2047 = vunpack.c.l.b16 %v1781
        %v2048 = vunpack.c.l.b16 %v1782
        %v2049 = vunpack.c.l.b16 %v1783
        %v2050 = vunpack.c.l.b16 %v1784
        %v2051 = vunpack.c.l.b16 %v1785
        %v2052 = vunpack.c.l.b16 %v1786
        %v2053 = vpack.c.b16 %v1926, %v1925
        %v2054 = vpack.c.b16 %v1928, %v1927
        %v2055 = vpack.c.b16 %v1930, %v1929
        %v2056 = vpack.c.b16 %v1932, %v1931
        %v2057 = vpack.c.b16 %v1934, %v1933
        %v2058 = vpack.c.b16 %v1936, %v1935
        %v2059 = vpack.c.b16 %v1938, %v1937
        %v2060 = vpack.c.b16 %v1940, %v1939
        %v2061 = vpack.c.b16 %v1942, %v1941
        %v2062 = vpack.c.b16 %v1944, %v1943
        %v2063 = vpack.c.b16 %v1946, %v1945
        %v2064 = vpack.c.b16 %v1948, %v1947
        %v2065 = vpack.c.b16 %v1950, %v1949
        %v2066 = vpack.c.b16 %v1952, %v1951
        %v2067 = vpack.c.b16 %v1954, %v1953
        %v2068 = vpack.c.b16 %v1956, %v1955
        %v2069 = vpack.c.b16 %v1958, %v1957
        %v2070 = vpack.c.b16 %v1960, %v1959
        %v2071 = vpack.c.b16 %v1962, %v1961
        %v2072 = vpack.c.b16 %v1964, %v1963
        %v2073 = vpack.c.b16 %v1966, %v1965
        %v2074 = vpack.c.b16 %v1968, %v1967
        %v2075 = vpack.c.b16 %v1970, %v1969
        %v2076 = vpack.c.b16 %v1972, %v1971
        %v2077 = vpack.c.b16 %v1974, %v1973
        %v2078 = vpack.c.b16 %v1976, %v1975
        %v2079 = vpack.c.b16 %v1978, %v1977
        %v2080 = vpack.c.b16 %v1980, %v1979
        %v2081 = vpack.c.b16 %v1982, %v1981
        %v2082 = vpack.c.b16 %v1984, %v1983
        %v2083 = vpack.c.b16 %v1986, %v1985
        %v2084 = vpack.c.b16 %v1988, %v1987
        %v2085 = vpack.c.b16 %v1990, %v1989
        %v2086 = vpack.c.b16 %v1992, %v1991
        %v2087 = vpack.c.b16 %v1994, %v1993
        %v2088 = vpack.c.b16 %v1996, %v1995
        %v2089 = vpack.c.b16 %v1998, %v1997
        %v2090 = vpack.c.b16 %v2000, %v1999
        %v2091 = vpack.c.b16 %v2002, %v2001
        %v2092 = vpack.c.b16 %v2004, %v2003
        %v2093 = vpack.c.b16 %v2006, %v2005
        %v2094 = vpack.c.b16 %v2008, %v2007
        %v2095 = vpack.c.b16 %v2010, %v2009
        %v2096 = vpack.c.b16 %v2012, %v2011
        %v2097 = vpack.c.b16 %v2014, %v2013
        %v2098 = vpack.c.b16 %v2016, %v2015
        %v2099 = vpack.c.b16 %v2018, %v2017
        %v2100 = vpack.c.b16 %v2020, %v2019
        %v2101 = vpack.c.b16 %v2022, %v2021
        %v2102 = vpack.c.b16 %v2024, %v2023
        %v2103 = vpack.c.b16 %v2026, %v2025
        %v2104 = vpack.c.b16 %v2028, %v2027
        %v2105 = vpack.c.b16 %v2030, %v2029
        %v2106 = vpack.c.b16 %v2032, %v2031
        %v2107 = vpack.c.b16 %v2034, %v2033
        %v2108 = vpack.c.b16 %v2036, %v2035
        %v2109 = vpack.c.b16 %v2038, %v2037
        %v2110 = vpack.c.b16 %v2040, %v2039
        %v2111 = vpack.c.b16 %v2042, %v2041
        %v2112 = vpack.c.b16 %v2044, %v2043
        %v2113 = vpack.c.b16 %v2046, %v2045
        %v2114 = vpack.c.b16 %v2048, %v2047
        %v2115 = vpack.c.b16 %v2050, %v2049
        %v2116 = vpack.c.b16 %v2052, %v2051
        %2181 = vmatpush.bf16.msra.mxu0 %v2060
        %2182 = vmatpush.bf16.msra.mxu0 %v2059
        %2183 = vmatpush.bf16.msra.mxu0 %v2058
        %2184 = vmatpush.bf16.msra.mxu0 %v2057
        %2185 = vmatpush.bf16.msra.mxu0 %v2056
        %2186 = vmatpush.bf16.msra.mxu0 %v2055
        %2187 = vmatpush.bf16.msra.mxu0 %v2054
        %2188 = vmatpush.bf16.msra.mxu0 %v2053
        %2189 = vmatmul.bf16.gmra.mxu0 %v1787
        %v2190 = vpop.f32.mrf.mxu0
        %v2191 = vadd.f32 %v1796, %v2190
        %v2192 = vpop.f32.mrf.mxu0
        %v2193 = vadd.f32 %v1796, %v2192
        %2194 = vdwg.mxu0
        %2195 = vmatpush.bf16.msra.mxu0 %v2068
        %2196 = vmatpush.bf16.msra.mxu0 %v2067
        %2197 = vmatpush.bf16.msra.mxu0 %v2066
        %2198 = vmatpush.bf16.msra.mxu0 %v2065
        %2199 = vmatpush.bf16.msra.mxu0 %v2064
        %2200 = vmatpush.bf16.msra.mxu0 %v2063
        %2201 = vmatpush.bf16.msra.mxu0 %v2062
        %2202 = vmatpush.bf16.msra.mxu0 %v2061
        %2203 = vmatmul.bf16.gmra.mxu0 %v1788
        %v2204 = vpop.f32.mrf.mxu0
        %v2205 = vadd.f32 %v2191, %v2204
        %v2206 = vpop.f32.mrf.mxu0
        %v2207 = vadd.f32 %v2193, %v2206
        %2208 = vdwg.mxu0
        %2209 = vmatpush.bf16.msra.mxu0 %v2076
        %2210 = vmatpush.bf16.msra.mxu0 %v2075
        %2211 = vmatpush.bf16.msra.mxu0 %v2074
        %2212 = vmatpush.bf16.msra.mxu0 %v2073
        %2213 = vmatpush.bf16.msra.mxu0 %v2072
        %2214 = vmatpush.bf16.msra.mxu0 %v2071
        %2215 = vmatpush.bf16.msra.mxu0 %v2070
        %2216 = vmatpush.bf16.msra.mxu0 %v2069
        %2217 = vmatmul.bf16.gmra.mxu0 %v1789
        %v2218 = vpop.f32.mrf.mxu0
        %v2219 = vadd.f32 %v2205, %v2218
        %v2220 = vpop.f32.mrf.mxu0
        %v2221 = vadd.f32 %v2207, %v2220
        %2222 = vdwg.mxu0
        %2223 = vmatpush.bf16.msra.mxu0 %v2084
        %2224 = vmatpush.bf16.msra.mxu0 %v2083
        %2225 = vmatpush.bf16.msra.mxu0 %v2082
        %2226 = vmatpush.bf16.msra.mxu0 %v2081
        %2227 = vmatpush.bf16.msra.mxu0 %v2080
        %2228 = vmatpush.bf16.msra.mxu0 %v2079
        %2229 = vmatpush.bf16.msra.mxu0 %v2078
        %2230 = vmatpush.bf16.msra.mxu0 %v2077
        %2231 = vmatmul.bf16.gmra.mxu0 %v1790
        %v2232 = vpop.f32.mrf.mxu0
        %v2233 = vadd.f32 %v2219, %v2232
        %v2234 = vpop.f32.mrf.mxu0
        %v2235 = vadd.f32 %v2221, %v2234
        %2236 = vdwg.mxu0
        %2237 = vmatpush.bf16.msra.mxu0 %v2092
        %2238 = vmatpush.bf16.msra.mxu0 %v2091
        %2239 = vmatpush.bf16.msra.mxu0 %v2090
        %2240 = vmatpush.bf16.msra.mxu0 %v2089
        %2241 = vmatpush.bf16.msra.mxu0 %v2088
        %2242 = vmatpush.bf16.msra.mxu0 %v2087
        %2243 = vmatpush.bf16.msra.mxu0 %v2086
        %2244 = vmatpush.bf16.msra.mxu0 %v2085
        %2245 = vmatmul.bf16.gmra.mxu0 %v1791
        %v2246 = vpop.f32.mrf.mxu0
        %v2247 = vadd.f32 %v2233, %v2246
        %v2248 = vpop.f32.mrf.mxu0
        %v2249 = vadd.f32 %v2235, %v2248
        %2250 = vdwg.mxu0
        %2251 = vmatpush.bf16.msra.mxu0 %v2100
        %2252 = vmatpush.bf16.msra.mxu0 %v2099
        %2253 = vmatpush.bf16.msra.mxu0 %v2098
        %2254 = vmatpush.bf16.msra.mxu0 %v2097
        %2255 = vmatpush.bf16.msra.mxu0 %v2096
        %2256 = vmatpush.bf16.msra.mxu0 %v2095
        %2257 = vmatpush.bf16.msra.mxu0 %v2094
        %2258 = vmatpush.bf16.msra.mxu0 %v2093
        %2259 = vmatmul.bf16.gmra.mxu0 %v1792
        %v2260 = vpop.f32.mrf.mxu0
        %v2261 = vadd.f32 %v2247, %v2260
        %v2262 = vpop.f32.mrf.mxu0
        %v2263 = vadd.f32 %v2249, %v2262
        %2264 = vdwg.mxu0
        %2265 = vmatpush.bf16.msra.mxu0 %v2108
        %2266 = vmatpush.bf16.msra.mxu0 %v2107
        %2267 = vmatpush.bf16.msra.mxu0 %v2106
        %2268 = vmatpush.bf16.msra.mxu0 %v2105
        %2269 = vmatpush.bf16.msra.mxu0 %v2104
        %2270 = vmatpush.bf16.msra.mxu0 %v2103
        %2271 = vmatpush.bf16.msra.mxu0 %v2102
        %2272 = vmatpush.bf16.msra.mxu0 %v2101
        %2273 = vmatmul.bf16.gmra.mxu0 %v1793
        %v2274 = vpop.f32.mrf.mxu0
        %v2275 = vadd.f32 %v2261, %v2274
        %v2276 = vpop.f32.mrf.mxu0
        %v2277 = vadd.f32 %v2263, %v2276
        %2278 = vdwg.mxu0
        %2279 = vmatpush.bf16.msra.mxu0 %v2116
        %2280 = vmatpush.bf16.msra.mxu0 %v2115
        %2281 = vmatpush.bf16.msra.mxu0 %v2114
        %2282 = vmatpush.bf16.msra.mxu0 %v2113
        %2283 = vmatpush.bf16.msra.mxu0 %v2112
        %2284 = vmatpush.bf16.msra.mxu0 %v2111
        %2285 = vmatpush.bf16.msra.mxu0 %v2110
        %2286 = vmatpush.bf16.msra.mxu0 %v2109
        %2287 = vmatmul.bf16.gmra.mxu0 %v1794
        %v2288 = vpop.f32.mrf.mxu0
        %v2289 = vadd.f32 %v2275, %v2288
        %v2290 = vpop.f32.mrf.mxu0
        %v2291 = vadd.f32 %v2277, %v2290
        %2292 = vdwg.mxu0
        %v2293 = vmax.f32 %v2289, 0.0
        %v2294 = vmax.f32 %v2291, 0.0
        %v2295 = vsel %vm483, %v2293, 0.0
        %v2296 = vsel %vm484, %v2294, 0.0
        %2297 = vst [vmem:[#allocation2 + $0x8] sm:$0xff] %v2295
        %2298 = vst [vmem:[#allocation2 + $0x10] sm:$0xff] %v2296
        %v2299 = vld [vmem:[#allocation2 + $0x6] sm:$0xff]
        %v2300 = vld [vmem:[#allocation2 + $0xe] sm:$0xff]
        %v2301 = vld [vmem:[#allocation2 + $0x7] sm:$0xff]
        %v2302 = vld [vmem:[#allocation2 + $0xf] sm:$0xff]
        %v2303 = vld [vmem:[#allocation2 + $0x8] sm:$0xff]
        %v2304 = vld [vmem:[#allocation2 + $0x10] sm:$0xff]
        %v2305 = vld [vmem:[#allocation2 + $0x9] sm:$0xff]
        %v2306 = vld [vmem:[#allocation2 + $0x11] sm:$0xff]
        %v2307 = vld [vmem:[#allocation2 + $0xa] sm:$0xff]
        %v2308 = vld [vmem:[#allocation2 + $0x12] sm:$0xff]
        %v2309 = vld [vmem:[#allocation13] sm:$0xf]
        %v2310 = vld [vmem:[#allocation13 + $0x4] sm:$0xf]
        %v2311 = vld [vmem:[#allocation13 + $0x8] sm:$0xf]
        %v2312 = vld [vmem:[#allocation13 + $0xc] sm:$0xf]
        %v2313 = vld [vmem:[#allocation13 + $0x10] sm:$0xf]
        %v2314 = vld [vmem:[#allocation13 + $0x14] sm:$0xf]
        %v2315 = vld [vmem:[#allocation13 + $0x18] sm:$0xf]
        %v2316 = vld [vmem:[#allocation13 + $0x1c] sm:$0xf]
        %v2317 = vld [vmem:[#allocation13 + $0x20] sm:$0xf]
        %v2318 = vld [vmem:[#allocation13 + $0x24] sm:$0xf]
        %v2319 = vld [vmem:[#allocation13 + $0x28] sm:$0xf]
        %v2320 = vld [vmem:[#allocation13 + $0x2c] sm:$0xf]
        %v2321 = vld [vmem:[#allocation13 + $0x30] sm:$0xf]
        %v2322 = vld [vmem:[#allocation13 + $0x34] sm:$0xf]
        %v2323 = vld [vmem:[#allocation13 + $0x38] sm:$0xf]
        %v2324 = vld [vmem:[#allocation13 + $0x3c] sm:$0xf]
        %v2325 = vld [vmem:[#allocation13 + $0x40] sm:$0xf]
        %v2326 = vld [vmem:[#allocation13 + $0x44] sm:$0xf]
        %v2327 = vld [vmem:[#allocation13 + $0x48] sm:$0xf]
        %v2328 = vld [vmem:[#allocation13 + $0x4c] sm:$0xf]
        %v2329 = vld [vmem:[#allocation13 + $0x50] sm:$0xf]
        %v2330 = vld [vmem:[#allocation13 + $0x54] sm:$0xf]
        %v2331 = vld [vmem:[#allocation13 + $0x58] sm:$0xf]
        %v2332 = vld [vmem:[#allocation13 + $0x5c] sm:$0xf]
        %v2333 = vld [vmem:[#allocation13 + $0x60] sm:$0xf]
        %v2334 = vld [vmem:[#allocation13 + $0x64] sm:$0xf]
        %v2335 = vld [vmem:[#allocation13 + $0x68] sm:$0xf]
        %v2336 = vld [vmem:[#allocation13 + $0x6c] sm:$0xf]
        %v2337 = vld [vmem:[#allocation13 + $0x70] sm:$0xf]
        %v2338 = vld [vmem:[#allocation13 + $0x74] sm:$0xf]
        %v2339 = vld [vmem:[#allocation13 + $0x78] sm:$0xf]
        %v2340 = vld [vmem:[#allocation13 + $0x7c] sm:$0xf]
        %v2341 = vld [vmem:[#allocation13 + $0x80] sm:$0xf]
        %v2342 = vld [vmem:[#allocation13 + $0x84] sm:$0xf]
        %v2343 = vld [vmem:[#allocation13 + $0x88] sm:$0xf]
        %v2344 = vld [vmem:[#allocation13 + $0x8c] sm:$0xf]
        %v2345 = vld [vmem:[#allocation13 + $0x90] sm:$0xf]
        %v2346 = vld [vmem:[#allocation13 + $0x94] sm:$0xf]
        %v2347 = vld [vmem:[#allocation13 + $0x98] sm:$0xf]
        %v2348 = vld [vmem:[#allocation13 + $0x9c] sm:$0xf]
        %v2349 = vld [vmem:[#allocation13 + $0xa0] sm:$0xf]
        %v2350 = vld [vmem:[#allocation13 + $0xa4] sm:$0xf]
        %v2351 = vld [vmem:[#allocation13 + $0xa8] sm:$0xf]
        %v2352 = vld [vmem:[#allocation13 + $0xac] sm:$0xf]
        %v2353 = vld [vmem:[#allocation13 + $0xb0] sm:$0xf]
        %v2354 = vld [vmem:[#allocation13 + $0xb4] sm:$0xf]
        %v2355 = vld [vmem:[#allocation13 + $0xb8] sm:$0xf]
        %v2356 = vld [vmem:[#allocation13 + $0xbc] sm:$0xf]
        %v2357 = vld [vmem:[#allocation13 + $0xc0] sm:$0xf]
        %v2358 = vld [vmem:[#allocation13 + $0xc4] sm:$0xf]
        %v2359 = vld [vmem:[#allocation13 + $0xc8] sm:$0xf]
        %v2360 = vld [vmem:[#allocation13 + $0xcc] sm:$0xf]
        %v2361 = vld [vmem:[#allocation13 + $0xd0] sm:$0xf]
        %v2362 = vld [vmem:[#allocation13 + $0xd4] sm:$0xf]
        %v2363 = vld [vmem:[#allocation13 + $0xd8] sm:$0xf]
        %v2364 = vld [vmem:[#allocation13 + $0xdc] sm:$0xf]
        %v2365 = vld [vmem:[#allocation13 + $0xe0] sm:$0xf]
        %v2366 = vld [vmem:[#allocation13 + $0xe4] sm:$0xf]
        %v2367 = vld [vmem:[#allocation13 + $0xe8] sm:$0xf]
        %v2368 = vld [vmem:[#allocation13 + $0xec] sm:$0xf]
        %v2369 = vld [vmem:[#allocation13 + $0xf0] sm:$0xf]
        %v2370 = vld [vmem:[#allocation13 + $0xf4] sm:$0xf]
        %v2371 = vld [vmem:[#allocation13 + $0xf8] sm:$0xf]
        %v2372 = vld [vmem:[#allocation13 + $0xfc] sm:$0xf]
        %v2373 = vld [vmem:[#allocation13 + $0x100] sm:$0xf]
        %v2374 = vld [vmem:[#allocation13 + $0x104] sm:$0xf]
        %v2375 = vld [vmem:[#allocation13 + $0x108] sm:$0xf]
        %v2376 = vld [vmem:[#allocation13 + $0x10c] sm:$0xf]
        %v2377 = vld [vmem:[#allocation13 + $0x110] sm:$0xf]
        %v2378 = vld [vmem:[#allocation13 + $0x114] sm:$0xf]
        %v2379 = vld [vmem:[#allocation13 + $0x118] sm:$0xf]
        %v2380 = vld [vmem:[#allocation13 + $0x11c] sm:$0xf]
        %v2381 = vld [vmem:[#allocation13 + $0x120] sm:$0xf]
        %v2382 = vld [vmem:[#allocation13 + $0x124] sm:$0xf]
        %v2383 = vld [vmem:[#allocation13 + $0x128] sm:$0xf]
        %v2384 = vld [vmem:[#allocation13 + $0x12c] sm:$0xf]
        %v2385 = vld [vmem:[#allocation13 + $0x130] sm:$0xf]
        %v2386 = vld [vmem:[#allocation13 + $0x134] sm:$0xf]
        %v2387 = vld [vmem:[#allocation13 + $0x138] sm:$0xf]
        %v2388 = vld [vmem:[#allocation13 + $0x13c] sm:$0xf]
        %v2389 = vpack.c.bf16 %v2300, %v2299
        %v2390 = vpack.c.bf16 %v2302, %v2301
        %v2391 = vpack.c.bf16 %v2304, %v2303
        %v2392 = vpack.c.bf16 %v2306, %v2305
        %v2393 = vpack.c.bf16 %v2308, %v2307
        %v2394 = vld [vmem:[%s9 + $0x3] sm:$0x1]
        %v2395 = vperm.slane %v2394, 0
        %v2476 = vunpack.c.l.b16 %v2309
        %v2477 = vunpack.c.l.b16 %v2310
        %v2478 = vunpack.c.l.b16 %v2311
        %v2479 = vunpack.c.l.b16 %v2312
        %v2480 = vunpack.c.l.b16 %v2313
        %v2481 = vunpack.c.l.b16 %v2314
        %v2482 = vunpack.c.l.b16 %v2315
        %v2483 = vunpack.c.l.b16 %v2316
        %v2484 = vunpack.c.l.b16 %v2317
        %v2485 = vunpack.c.l.b16 %v2318
        %v2486 = vunpack.c.l.b16 %v2319
        %v2487 = vunpack.c.l.b16 %v2320
        %v2488 = vunpack.c.l.b16 %v2321
        %v2489 = vunpack.c.l.b16 %v2322
        %v2490 = vunpack.c.l.b16 %v2323
        %v2491 = vunpack.c.l.b16 %v2324
        %v2492 = vunpack.c.l.b16 %v2325
        %v2493 = vunpack.c.l.b16 %v2326
        %v2494 = vunpack.c.l.b16 %v2327
        %v2495 = vunpack.c.l.b16 %v2328
        %v2496 = vunpack.c.l.b16 %v2329
        %v2497 = vunpack.c.l.b16 %v2330
        %v2498 = vunpack.c.l.b16 %v2331
        %v2499 = vunpack.c.l.b16 %v2332
        %v2500 = vunpack.c.l.b16 %v2333
        %v2501 = vunpack.c.l.b16 %v2334
        %v2502 = vunpack.c.l.b16 %v2335
        %v2503 = vunpack.c.l.b16 %v2336
        %v2504 = vunpack.c.l.b16 %v2337
        %v2505 = vunpack.c.l.b16 %v2338
        %v2506 = vunpack.c.l.b16 %v2339
        %v2507 = vunpack.c.l.b16 %v2340
        %v2508 = vunpack.c.l.b16 %v2341
        %v2509 = vunpack.c.l.b16 %v2342
        %v2510 = vunpack.c.l.b16 %v2343
        %v2511 = vunpack.c.l.b16 %v2344
        %v2512 = vunpack.c.l.b16 %v2345
        %v2513 = vunpack.c.l.b16 %v2346
        %v2514 = vunpack.c.l.b16 %v2347
        %v2515 = vunpack.c.l.b16 %v2348
        %v2516 = vunpack.c.l.b16 %v2349
        %v2517 = vunpack.c.l.b16 %v2350
        %v2518 = vunpack.c.l.b16 %v2351
        %v2519 = vunpack.c.l.b16 %v2352
        %v2520 = vunpack.c.l.b16 %v2353
        %v2521 = vunpack.c.l.b16 %v2354
        %v2522 = vunpack.c.l.b16 %v2355
        %v2523 = vunpack.c.l.b16 %v2356
        %v2524 = vunpack.c.l.b16 %v2357
        %v2525 = vunpack.c.l.b16 %v2358
        %v2526 = vunpack.c.l.b16 %v2359
        %v2527 = vunpack.c.l.b16 %v2360
        %v2528 = vunpack.c.l.b16 %v2361
        %v2529 = vunpack.c.l.b16 %v2362
        %v2530 = vunpack.c.l.b16 %v2363
        %v2531 = vunpack.c.l.b16 %v2364
        %v2532 = vunpack.c.l.b16 %v2365
        %v2533 = vunpack.c.l.b16 %v2366
        %v2534 = vunpack.c.l.b16 %v2367
        %v2535 = vunpack.c.l.b16 %v2368
        %v2536 = vunpack.c.l.b16 %v2369
        %v2537 = vunpack.c.l.b16 %v2370
        %v2538 = vunpack.c.l.b16 %v2371
        %v2539 = vunpack.c.l.b16 %v2372
        %v2540 = vunpack.c.l.b16 %v2373
        %v2541 = vunpack.c.l.b16 %v2374
        %v2542 = vunpack.c.l.b16 %v2375
        %v2543 = vunpack.c.l.b16 %v2376
        %v2544 = vunpack.c.l.b16 %v2377
        %v2545 = vunpack.c.l.b16 %v2378
        %v2546 = vunpack.c.l.b16 %v2379
        %v2547 = vunpack.c.l.b16 %v2380
        %v2548 = vunpack.c.l.b16 %v2381
        %v2549 = vunpack.c.l.b16 %v2382
        %v2550 = vunpack.c.l.b16 %v2383
        %v2551 = vunpack.c.l.b16 %v2384
        %v2552 = vunpack.c.l.b16 %v2385
        %v2553 = vunpack.c.l.b16 %v2386
        %v2554 = vunpack.c.l.b16 %v2387
        %v2555 = vunpack.c.l.b16 %v2388
        %v2556 = vpack.c.b16 %v2477, %v2476
        %v2557 = vpack.c.b16 %v2479, %v2478
        %v2558 = vpack.c.b16 %v2481, %v2480
        %v2559 = vpack.c.b16 %v2483, %v2482
        %v2560 = vpack.c.b16 %v2485, %v2484
        %v2561 = vpack.c.b16 %v2487, %v2486
        %v2562 = vpack.c.b16 %v2489, %v2488
        %v2563 = vpack.c.b16 %v2491, %v2490
        %v2564 = vpack.c.b16 %v2493, %v2492
        %v2565 = vpack.c.b16 %v2495, %v2494
        %v2566 = vpack.c.b16 %v2497, %v2496
        %v2567 = vpack.c.b16 %v2499, %v2498
        %v2568 = vpack.c.b16 %v2501, %v2500
        %v2569 = vpack.c.b16 %v2503, %v2502
        %v2570 = vpack.c.b16 %v2505, %v2504
        %v2571 = vpack.c.b16 %v2507, %v2506
        %v2572 = vpack.c.b16 %v2509, %v2508
        %v2573 = vpack.c.b16 %v2511, %v2510
        %v2574 = vpack.c.b16 %v2513, %v2512
        %v2575 = vpack.c.b16 %v2515, %v2514
        %v2576 = vpack.c.b16 %v2517, %v2516
        %v2577 = vpack.c.b16 %v2519, %v2518
        %v2578 = vpack.c.b16 %v2521, %v2520
        %v2579 = vpack.c.b16 %v2523, %v2522
        %v2580 = vpack.c.b16 %v2525, %v2524
        %v2581 = vpack.c.b16 %v2527, %v2526
        %v2582 = vpack.c.b16 %v2529, %v2528
        %v2583 = vpack.c.b16 %v2531, %v2530
        %v2584 = vpack.c.b16 %v2533, %v2532
        %v2585 = vpack.c.b16 %v2535, %v2534
        %v2586 = vpack.c.b16 %v2537, %v2536
        %v2587 = vpack.c.b16 %v2539, %v2538
        %v2588 = vpack.c.b16 %v2541, %v2540
        %v2589 = vpack.c.b16 %v2543, %v2542
        %v2590 = vpack.c.b16 %v2545, %v2544
        %v2591 = vpack.c.b16 %v2547, %v2546
        %v2592 = vpack.c.b16 %v2549, %v2548
        %v2593 = vpack.c.b16 %v2551, %v2550
        %v2594 = vpack.c.b16 %v2553, %v2552
        %v2595 = vpack.c.b16 %v2555, %v2554
        %2636 = vmatpush.bf16.msra.mxu0 %v2563
        %2637 = vmatpush.bf16.msra.mxu0 %v2562
        %2638 = vmatpush.bf16.msra.mxu0 %v2561
        %2639 = vmatpush.bf16.msra.mxu0 %v2560
        %2640 = vmatpush.bf16.msra.mxu0 %v2559
        %2641 = vmatpush.bf16.msra.mxu0 %v2558
        %2642 = vmatpush.bf16.msra.mxu0 %v2557
        %2643 = vmatpush.bf16.msra.mxu0 %v2556
        %2644 = vmatmul.bf16.gmra.mxu0 %v2389
        %v2645 = vpop.f32.mrf.mxu0
        %v2646 = vadd.f32 %v2395, %v2645
        %v2647 = vpop.f32.mrf.mxu0
        %v2648 = vadd.f32 %v2395, %v2647
        %2649 = vdwg.mxu0
        %2650 = vmatpush.bf16.msra.mxu0 %v2571
        %2651 = vmatpush.bf16.msra.mxu0 %v2570
        %2652 = vmatpush.bf16.msra.mxu0 %v2569
        %2653 = vmatpush.bf16.msra.mxu0 %v2568
        %2654 = vmatpush.bf16.msra.mxu0 %v2567
        %2655 = vmatpush.bf16.msra.mxu0 %v2566
        %2656 = vmatpush.bf16.msra.mxu0 %v2565
        %2657 = vmatpush.bf16.msra.mxu0 %v2564
        %2658 = vmatmul.bf16.gmra.mxu0 %v2390
        %v2659 = vpop.f32.mrf.mxu0
        %v2660 = vadd.f32 %v2646, %v2659
        %v2661 = vpop.f32.mrf.mxu0
        %v2662 = vadd.f32 %v2648, %v2661
        %2663 = vdwg.mxu0
        %2664 = vmatpush.bf16.msra.mxu0 %v2579
        %2665 = vmatpush.bf16.msra.mxu0 %v2578
        %2666 = vmatpush.bf16.msra.mxu0 %v2577
        %2667 = vmatpush.bf16.msra.mxu0 %v2576
        %2668 = vmatpush.bf16.msra.mxu0 %v2575
        %2669 = vmatpush.bf16.msra.mxu0 %v2574
        %2670 = vmatpush.bf16.msra.mxu0 %v2573
        %2671 = vmatpush.bf16.msra.mxu0 %v2572
        %2672 = vmatmul.bf16.gmra.mxu0 %v2391
        %v2673 = vpop.f32.mrf.mxu0
        %v2674 = vadd.f32 %v2660, %v2673
        %v2675 = vpop.f32.mrf.mxu0
        %v2676 = vadd.f32 %v2662, %v2675
        %2677 = vdwg.mxu0
        %2678 = vmatpush.bf16.msra.mxu0 %v2587
        %2679 = vmatpush.bf16.msra.mxu0 %v2586
        %2680 = vmatpush.bf16.msra.mxu0 %v2585
        %2681 = vmatpush.bf16.msra.mxu0 %v2584
        %2682 = vmatpush.bf16.msra.mxu0 %v2583
        %2683 = vmatpush.bf16.msra.mxu0 %v2582
        %2684 = vmatpush.bf16.msra.mxu0 %v2581
        %2685 = vmatpush.bf16.msra.mxu0 %v2580
        %2686 = vmatmul.bf16.gmra.mxu0 %v2392
        %v2687 = vpop.f32.mrf.mxu0
        %v2688 = vadd.f32 %v2674, %v2687
        %v2689 = vpop.f32.mrf.mxu0
        %v2690 = vadd.f32 %v2676, %v2689
        %2691 = vdwg.mxu0
        %2692 = vmatpush.bf16.msra.mxu0 %v2595
        %2693 = vmatpush.bf16.msra.mxu0 %v2594
        %2694 = vmatpush.bf16.msra.mxu0 %v2593
        %2695 = vmatpush.bf16.msra.mxu0 %v2592
        %2696 = vmatpush.bf16.msra.mxu0 %v2591
        %2697 = vmatpush.bf16.msra.mxu0 %v2590
        %2698 = vmatpush.bf16.msra.mxu0 %v2589
        %2699 = vmatpush.bf16.msra.mxu0 %v2588
        %2700 = vmatmul.bf16.gmra.mxu0 %v2393
        %v2701 = vpop.f32.mrf.mxu0
        %v2702 = vadd.f32 %v2688, %v2701
        %v2703 = vpop.f32.mrf.mxu0
        %v2704 = vadd.f32 %v2690, %v2703
        %2705 = vdwg.mxu0
        %v2706 = vmax.f32 %v2702, 0.0
        %v2707 = vmax.f32 %v2704, 0.0
        %v2708 = vsel %vm483, %v2706, 0.0
        %v2709 = vsel %vm484, %v2707, 0.0
        %2710 = vst [vmem:[#allocation2 + $0x8] sm:$0xff] %v2708
        %2711 = vst [vmem:[#allocation2 + $0x10] sm:$0xff] %v2709
        %v2712 = vld [vmem:[#allocation2 + $0x6] sm:$0xff]
        %v2713 = vld [vmem:[#allocation2 + $0xe] sm:$0xff]
        %v2714 = vld [vmem:[#allocation2 + $0x7] sm:$0xff]
        %v2715 = vld [vmem:[#allocation2 + $0xf] sm:$0xff]
        %v2716 = vld [vmem:[#allocation2 + $0x8] sm:$0xff]
        %v2717 = vld [vmem:[#allocation2 + $0x10] sm:$0xff]
        %v2718 = vld [vmem:[#allocation2 + $0x9] sm:$0xff]
        %v2719 = vld [vmem:[#allocation2 + $0x11] sm:$0xff]
        %v2720 = vld [vmem:[#allocation2 + $0xa] sm:$0xff]
        %v2721 = vld [vmem:[#allocation2 + $0x12] sm:$0xff]
        %v2722 = vld [vmem:[#allocation14] sm:$0xf]
        %v2723 = vld [vmem:[#allocation14 + $0x4] sm:$0xf]
        %v2724 = vld [vmem:[#allocation14 + $0x8] sm:$0xf]
        %v2725 = vld [vmem:[#allocation14 + $0xc] sm:$0xf]
        %v2726 = vld [vmem:[#allocation14 + $0x10] sm:$0xf]
        %v2727 = vld [vmem:[#allocation14 + $0x14] sm:$0xf]
        %v2728 = vld [vmem:[#allocation14 + $0x18] sm:$0xf]
        %v2729 = vld [vmem:[#allocation14 + $0x1c] sm:$0xf]
        %v2730 = vld [vmem:[#allocation14 + $0x20] sm:$0xf]
        %v2731 = vld [vmem:[#allocation14 + $0x24] sm:$0xf]
        %v2732 = vld [vmem:[#allocation14 + $0x28] sm:$0xf]
        %v2733 = vld [vmem:[#allocation14 + $0x2c] sm:$0xf]
        %v2734 = vld [vmem:[#allocation14 + $0x30] sm:$0xf]
        %v2735 = vld [vmem:[#allocation14 + $0x34] sm:$0xf]
        %v2736 = vld [vmem:[#allocation14 + $0x38] sm:$0xf]
        %v2737 = vld [vmem:[#allocation14 + $0x3c] sm:$0xf]
        %v2738 = vld [vmem:[#allocation14 + $0x40] sm:$0xf]
        %v2739 = vld [vmem:[#allocation14 + $0x44] sm:$0xf]
        %v2740 = vld [vmem:[#allocation14 + $0x48] sm:$0xf]
        %v2741 = vld [vmem:[#allocation14 + $0x4c] sm:$0xf]
        %v2742 = vld [vmem:[#allocation14 + $0x50] sm:$0xf]
        %v2743 = vld [vmem:[#allocation14 + $0x54] sm:$0xf]
        %v2744 = vld [vmem:[#allocation14 + $0x58] sm:$0xf]
        %v2745 = vld [vmem:[#allocation14 + $0x5c] sm:$0xf]
        %v2746 = vld [vmem:[#allocation14 + $0x60] sm:$0xf]
        %v2747 = vld [vmem:[#allocation14 + $0x64] sm:$0xf]
        %v2748 = vld [vmem:[#allocation14 + $0x68] sm:$0xf]
        %v2749 = vld [vmem:[#allocation14 + $0x6c] sm:$0xf]
        %v2750 = vld [vmem:[#allocation14 + $0x70] sm:$0xf]
        %v2751 = vld [vmem:[#allocation14 + $0x74] sm:$0xf]
        %v2752 = vld [vmem:[#allocation14 + $0x78] sm:$0xf]
        %v2753 = vld [vmem:[#allocation14 + $0x7c] sm:$0xf]
        %v2754 = vld [vmem:[#allocation14 + $0x80] sm:$0xf]
        %v2755 = vld [vmem:[#allocation14 + $0x84] sm:$0xf]
        %v2756 = vld [vmem:[#allocation14 + $0x88] sm:$0xf]
        %v2757 = vld [vmem:[#allocation14 + $0x8c] sm:$0xf]
        %v2758 = vld [vmem:[#allocation14 + $0x90] sm:$0xf]
        %v2759 = vld [vmem:[#allocation14 + $0x94] sm:$0xf]
        %v2760 = vld [vmem:[#allocation14 + $0x98] sm:$0xf]
        %v2761 = vld [vmem:[#allocation14 + $0x9c] sm:$0xf]
        %v2762 = vld [vmem:[#allocation14 + $0xa0] sm:$0xf]
        %v2763 = vld [vmem:[#allocation14 + $0xa4] sm:$0xf]
        %v2764 = vld [vmem:[#allocation14 + $0xa8] sm:$0xf]
        %v2765 = vld [vmem:[#allocation14 + $0xac] sm:$0xf]
        %v2766 = vld [vmem:[#allocation14 + $0xb0] sm:$0xf]
        %v2767 = vld [vmem:[#allocation14 + $0xb4] sm:$0xf]
        %v2768 = vld [vmem:[#allocation14 + $0xb8] sm:$0xf]
        %v2769 = vld [vmem:[#allocation14 + $0xbc] sm:$0xf]
        %v2770 = vld [vmem:[#allocation14 + $0xc0] sm:$0xf]
        %v2771 = vld [vmem:[#allocation14 + $0xc4] sm:$0xf]
        %v2772 = vld [vmem:[#allocation14 + $0xc8] sm:$0xf]
        %v2773 = vld [vmem:[#allocation14 + $0xcc] sm:$0xf]
        %v2774 = vld [vmem:[#allocation14 + $0xd0] sm:$0xf]
        %v2775 = vld [vmem:[#allocation14 + $0xd4] sm:$0xf]
        %v2776 = vld [vmem:[#allocation14 + $0xd8] sm:$0xf]
        %v2777 = vld [vmem:[#allocation14 + $0xdc] sm:$0xf]
        %v2778 = vld [vmem:[#allocation14 + $0xe0] sm:$0xf]
        %v2779 = vld [vmem:[#allocation14 + $0xe4] sm:$0xf]
        %v2780 = vld [vmem:[#allocation14 + $0xe8] sm:$0xf]
        %v2781 = vld [vmem:[#allocation14 + $0xec] sm:$0xf]
        %v2782 = vld [vmem:[#allocation14 + $0xf0] sm:$0xf]
        %v2783 = vld [vmem:[#allocation14 + $0xf4] sm:$0xf]
        %v2784 = vld [vmem:[#allocation14 + $0xf8] sm:$0xf]
        %v2785 = vld [vmem:[#allocation14 + $0xfc] sm:$0xf]
        %v2786 = vld [vmem:[#allocation14 + $0x100] sm:$0xf]
        %v2787 = vld [vmem:[#allocation14 + $0x104] sm:$0xf]
        %v2788 = vld [vmem:[#allocation14 + $0x108] sm:$0xf]
        %v2789 = vld [vmem:[#allocation14 + $0x10c] sm:$0xf]
        %v2790 = vld [vmem:[#allocation14 + $0x110] sm:$0xf]
        %v2791 = vld [vmem:[#allocation14 + $0x114] sm:$0xf]
        %v2792 = vld [vmem:[#allocation14 + $0x118] sm:$0xf]
        %v2793 = vld [vmem:[#allocation14 + $0x11c] sm:$0xf]
        %v2794 = vld [vmem:[#allocation14 + $0x120] sm:$0xf]
        %v2795 = vld [vmem:[#allocation14 + $0x124] sm:$0xf]
        %v2796 = vld [vmem:[#allocation14 + $0x128] sm:$0xf]
        %v2797 = vld [vmem:[#allocation14 + $0x12c] sm:$0xf]
        %v2798 = vld [vmem:[#allocation14 + $0x130] sm:$0xf]
        %v2799 = vld [vmem:[#allocation14 + $0x134] sm:$0xf]
        %v2800 = vld [vmem:[#allocation14 + $0x138] sm:$0xf]
        %v2801 = vld [vmem:[#allocation14 + $0x13c] sm:$0xf]
        %v2802 = vld [vmem:[#allocation14 + $0x140] sm:$0xf]
        %v2803 = vld [vmem:[#allocation14 + $0x144] sm:$0xf]
        %v2804 = vld [vmem:[#allocation14 + $0x148] sm:$0xf]
        %v2805 = vld [vmem:[#allocation14 + $0x14c] sm:$0xf]
        %v2806 = vld [vmem:[#allocation14 + $0x150] sm:$0xf]
        %v2807 = vld [vmem:[#allocation14 + $0x154] sm:$0xf]
        %v2808 = vld [vmem:[#allocation14 + $0x158] sm:$0xf]
        %v2809 = vld [vmem:[#allocation14 + $0x15c] sm:$0xf]
        %v2810 = vld [vmem:[#allocation14 + $0x160] sm:$0xf]
        %v2811 = vld [vmem:[#allocation14 + $0x164] sm:$0xf]
        %v2812 = vld [vmem:[#allocation14 + $0x168] sm:$0xf]
        %v2813 = vld [vmem:[#allocation14 + $0x16c] sm:$0xf]
        %v2814 = vld [vmem:[#allocation14 + $0x170] sm:$0xf]
        %v2815 = vld [vmem:[#allocation14 + $0x174] sm:$0xf]
        %v2816 = vld [vmem:[#allocation14 + $0x178] sm:$0xf]
        %v2817 = vld [vmem:[#allocation14 + $0x17c] sm:$0xf]
        %v2818 = vld [vmem:[#allocation14 + $0x180] sm:$0xf]
        %v2819 = vld [vmem:[#allocation14 + $0x184] sm:$0xf]
        %v2820 = vld [vmem:[#allocation14 + $0x188] sm:$0xf]
        %v2821 = vld [vmem:[#allocation14 + $0x18c] sm:$0xf]
        %v2822 = vld [vmem:[#allocation14 + $0x190] sm:$0xf]
        %v2823 = vld [vmem:[#allocation14 + $0x194] sm:$0xf]
        %v2824 = vld [vmem:[#allocation14 + $0x198] sm:$0xf]
        %v2825 = vld [vmem:[#allocation14 + $0x19c] sm:$0xf]
        %v2826 = vld [vmem:[#allocation14 + $0x1a0] sm:$0xf]
        %v2827 = vld [vmem:[#allocation14 + $0x1a4] sm:$0xf]
        %v2828 = vld [vmem:[#allocation14 + $0x1a8] sm:$0xf]
        %v2829 = vld [vmem:[#allocation14 + $0x1ac] sm:$0xf]
        %v2830 = vld [vmem:[#allocation14 + $0x1b0] sm:$0xf]
        %v2831 = vld [vmem:[#allocation14 + $0x1b4] sm:$0xf]
        %v2832 = vld [vmem:[#allocation14 + $0x1b8] sm:$0xf]
        %v2833 = vld [vmem:[#allocation14 + $0x1bc] sm:$0xf]
        %v2834 = vpack.c.bf16 %v2713, %v2712
        %v2835 = vpack.c.bf16 %v2715, %v2714
        %v2836 = vpack.c.bf16 %v2717, %v2716
        %v2837 = vpack.c.bf16 %v2719, %v2718
        %v2838 = vpack.c.bf16 %v2721, %v2720
        %v2839 = vpack.c.bf16 %v2296, %v2295
        %v2840 = vld [vmem:[%s9 + $0x4] sm:$0x1]
        %v2841 = vperm.slane %v2840, 0
        %v2954 = vunpack.c.l.b16 %v2722
        %v2955 = vunpack.c.l.b16 %v2723
        %v2956 = vunpack.c.l.b16 %v2724
        %v2957 = vunpack.c.l.b16 %v2725
        %v2958 = vunpack.c.l.b16 %v2726
        %v2959 = vunpack.c.l.b16 %v2727
        %v2960 = vunpack.c.l.b16 %v2728
        %v2961 = vunpack.c.l.b16 %v2729
        %v2962 = vunpack.c.l.b16 %v2730
        %v2963 = vunpack.c.l.b16 %v2731
        %v2964 = vunpack.c.l.b16 %v2732
        %v2965 = vunpack.c.l.b16 %v2733
        %v2966 = vunpack.c.l.b16 %v2734
        %v2967 = vunpack.c.l.b16 %v2735
        %v2968 = vunpack.c.l.b16 %v2736
        %v2969 = vunpack.c.l.b16 %v2737
        %v2970 = vunpack.c.l.b16 %v2738
        %v2971 = vunpack.c.l.b16 %v2739
        %v2972 = vunpack.c.l.b16 %v2740
        %v2973 = vunpack.c.l.b16 %v2741
        %v2974 = vunpack.c.l.b16 %v2742
        %v2975 = vunpack.c.l.b16 %v2743
        %v2976 = vunpack.c.l.b16 %v2744
        %v2977 = vunpack.c.l.b16 %v2745
        %v2978 = vunpack.c.l.b16 %v2746
        %v2979 = vunpack.c.l.b16 %v2747
        %v2980 = vunpack.c.l.b16 %v2748
        %v2981 = vunpack.c.l.b16 %v2749
        %v2982 = vunpack.c.l.b16 %v2750
        %v2983 = vunpack.c.l.b16 %v2751
        %v2984 = vunpack.c.l.b16 %v2752
        %v2985 = vunpack.c.l.b16 %v2753
        %v2986 = vunpack.c.l.b16 %v2754
        %v2987 = vunpack.c.l.b16 %v2755
        %v2988 = vunpack.c.l.b16 %v2756
        %v2989 = vunpack.c.l.b16 %v2757
        %v2990 = vunpack.c.l.b16 %v2758
        %v2991 = vunpack.c.l.b16 %v2759
        %v2992 = vunpack.c.l.b16 %v2760
        %v2993 = vunpack.c.l.b16 %v2761
        %v2994 = vunpack.c.l.b16 %v2762
        %v2995 = vunpack.c.l.b16 %v2763
        %v2996 = vunpack.c.l.b16 %v2764
        %v2997 = vunpack.c.l.b16 %v2765
        %v2998 = vunpack.c.l.b16 %v2766
        %v2999 = vunpack.c.l.b16 %v2767
        %v3000 = vunpack.c.l.b16 %v2768
        %v3001 = vunpack.c.l.b16 %v2769
        %v3002 = vunpack.c.l.b16 %v2770
        %v3003 = vunpack.c.l.b16 %v2771
        %v3004 = vunpack.c.l.b16 %v2772
        %v3005 = vunpack.c.l.b16 %v2773
        %v3006 = vunpack.c.l.b16 %v2774
        %v3007 = vunpack.c.l.b16 %v2775
        %v3008 = vunpack.c.l.b16 %v2776
        %v3009 = vunpack.c.l.b16 %v2777
        %v3010 = vunpack.c.l.b16 %v2778
        %v3011 = vunpack.c.l.b16 %v2779
        %v3012 = vunpack.c.l.b16 %v2780
        %v3013 = vunpack.c.l.b16 %v2781
        %v3014 = vunpack.c.l.b16 %v2782
        %v3015 = vunpack.c.l.b16 %v2783
        %v3016 = vunpack.c.l.b16 %v2784
        %v3017 = vunpack.c.l.b16 %v2785
        %v3018 = vunpack.c.l.b16 %v2786
        %v3019 = vunpack.c.l.b16 %v2787
        %v3020 = vunpack.c.l.b16 %v2788
        %v3021 = vunpack.c.l.b16 %v2789
        %v3022 = vunpack.c.l.b16 %v2790
        %v3023 = vunpack.c.l.b16 %v2791
        %v3024 = vunpack.c.l.b16 %v2792
        %v3025 = vunpack.c.l.b16 %v2793
        %v3026 = vunpack.c.l.b16 %v2794
        %v3027 = vunpack.c.l.b16 %v2795
        %v3028 = vunpack.c.l.b16 %v2796
        %v3029 = vunpack.c.l.b16 %v2797
        %v3030 = vunpack.c.l.b16 %v2798
        %v3031 = vunpack.c.l.b16 %v2799
        %v3032 = vunpack.c.l.b16 %v2800
        %v3033 = vunpack.c.l.b16 %v2801
        %v3034 = vunpack.c.l.b16 %v2802
        %v3035 = vunpack.c.l.b16 %v2803
        %v3036 = vunpack.c.l.b16 %v2804
        %v3037 = vunpack.c.l.b16 %v2805
        %v3038 = vunpack.c.l.b16 %v2806
        %v3039 = vunpack.c.l.b16 %v2807
        %v3040 = vunpack.c.l.b16 %v2808
        %v3041 = vunpack.c.l.b16 %v2809
        %v3042 = vunpack.c.l.b16 %v2810
        %v3043 = vunpack.c.l.b16 %v2811
        %v3044 = vunpack.c.l.b16 %v2812
        %v3045 = vunpack.c.l.b16 %v2813
        %v3046 = vunpack.c.l.b16 %v2814
        %v3047 = vunpack.c.l.b16 %v2815
        %v3048 = vunpack.c.l.b16 %v2816
        %v3049 = vunpack.c.l.b16 %v2817
        %v3050 = vunpack.c.l.b16 %v2818
        %v3051 = vunpack.c.l.b16 %v2819
        %v3052 = vunpack.c.l.b16 %v2820
        %v3053 = vunpack.c.l.b16 %v2821
        %v3054 = vunpack.c.l.b16 %v2822
        %v3055 = vunpack.c.l.b16 %v2823
        %v3056 = vunpack.c.l.b16 %v2824
        %v3057 = vunpack.c.l.b16 %v2825
        %v3058 = vunpack.c.l.b16 %v2826
        %v3059 = vunpack.c.l.b16 %v2827
        %v3060 = vunpack.c.l.b16 %v2828
        %v3061 = vunpack.c.l.b16 %v2829
        %v3062 = vunpack.c.l.b16 %v2830
        %v3063 = vunpack.c.l.b16 %v2831
        %v3064 = vunpack.c.l.b16 %v2832
        %v3065 = vunpack.c.l.b16 %v2833
        %v3066 = vpack.c.b16 %v2955, %v2954
        %v3067 = vpack.c.b16 %v2957, %v2956
        %v3068 = vpack.c.b16 %v2959, %v2958
        %v3069 = vpack.c.b16 %v2961, %v2960
        %v3070 = vpack.c.b16 %v2963, %v2962
        %v3071 = vpack.c.b16 %v2965, %v2964
        %v3072 = vpack.c.b16 %v2967, %v2966
        %v3073 = vpack.c.b16 %v2969, %v2968
        %v3074 = vpack.c.b16 %v2971, %v2970
        %v3075 = vpack.c.b16 %v2973, %v2972
        %v3076 = vpack.c.b16 %v2975, %v2974
        %v3077 = vpack.c.b16 %v2977, %v2976
        %v3078 = vpack.c.b16 %v2979, %v2978
        %v3079 = vpack.c.b16 %v2981, %v2980
        %v3080 = vpack.c.b16 %v2983, %v2982
        %v3081 = vpack.c.b16 %v2985, %v2984
        %v3082 = vpack.c.b16 %v2987, %v2986
        %v3083 = vpack.c.b16 %v2989, %v2988
        %v3084 = vpack.c.b16 %v2991, %v2990
        %v3085 = vpack.c.b16 %v2993, %v2992
        %v3086 = vpack.c.b16 %v2995, %v2994
        %v3087 = vpack.c.b16 %v2997, %v2996
        %v3088 = vpack.c.b16 %v2999, %v2998
        %v3089 = vpack.c.b16 %v3001, %v3000
        %v3090 = vpack.c.b16 %v3003, %v3002
        %v3091 = vpack.c.b16 %v3005, %v3004
        %v3092 = vpack.c.b16 %v3007, %v3006
        %v3093 = vpack.c.b16 %v3009, %v3008
        %v3094 = vpack.c.b16 %v3011, %v3010
        %v3095 = vpack.c.b16 %v3013, %v3012
        %v3096 = vpack.c.b16 %v3015, %v3014
        %v3097 = vpack.c.b16 %v3017, %v3016
        %v3098 = vpack.c.b16 %v3019, %v3018
        %v3099 = vpack.c.b16 %v3021, %v3020
        %v3100 = vpack.c.b16 %v3023, %v3022
        %v3101 = vpack.c.b16 %v3025, %v3024
        %v3102 = vpack.c.b16 %v3027, %v3026
        %v3103 = vpack.c.b16 %v3029, %v3028
        %v3104 = vpack.c.b16 %v3031, %v3030
        %v3105 = vpack.c.b16 %v3033, %v3032
        %v3106 = vpack.c.b16 %v3035, %v3034
        %v3107 = vpack.c.b16 %v3037, %v3036
        %v3108 = vpack.c.b16 %v3039, %v3038
        %v3109 = vpack.c.b16 %v3041, %v3040
        %v3110 = vpack.c.b16 %v3043, %v3042
        %v3111 = vpack.c.b16 %v3045, %v3044
        %v3112 = vpack.c.b16 %v3047, %v3046
        %v3113 = vpack.c.b16 %v3049, %v3048
        %v3114 = vpack.c.b16 %v3051, %v3050
        %v3115 = vpack.c.b16 %v3053, %v3052
        %v3116 = vpack.c.b16 %v3055, %v3054
        %v3117 = vpack.c.b16 %v3057, %v3056
        %v3118 = vpack.c.b16 %v3059, %v3058
        %v3119 = vpack.c.b16 %v3061, %v3060
        %v3120 = vpack.c.b16 %v3063, %v3062
        %v3121 = vpack.c.b16 %v3065, %v3064
        %3178 = vmatpush.bf16.msra.mxu0 %v3073
        %3179 = vmatpush.bf16.msra.mxu0 %v3072
        %3180 = vmatpush.bf16.msra.mxu0 %v3071
        %3181 = vmatpush.bf16.msra.mxu0 %v3070
        %3182 = vmatpush.bf16.msra.mxu0 %v3069
        %3183 = vmatpush.bf16.msra.mxu0 %v3068
        %3184 = vmatpush.bf16.msra.mxu0 %v3067
        %3185 = vmatpush.bf16.msra.mxu0 %v3066
        %3186 = vmatmul.bf16.gmra.mxu0 %v2834
        %v3187 = vpop.f32.mrf.mxu0
        %v3188 = vadd.f32 %v2841, %v3187
        %v3189 = vpop.f32.mrf.mxu0
        %v3190 = vadd.f32 %v2841, %v3189
        %3191 = vdwg.mxu0
        %3192 = vmatpush.bf16.msra.mxu0 %v3081
        %3193 = vmatpush.bf16.msra.mxu0 %v3080
        %3194 = vmatpush.bf16.msra.mxu0 %v3079
        %3195 = vmatpush.bf16.msra.mxu0 %v3078
        %3196 = vmatpush.bf16.msra.mxu0 %v3077
        %3197 = vmatpush.bf16.msra.mxu0 %v3076
        %3198 = vmatpush.bf16.msra.mxu0 %v3075
        %3199 = vmatpush.bf16.msra.mxu0 %v3074
        %3200 = vmatmul.bf16.gmra.mxu0 %v2835
        %v3201 = vpop.f32.mrf.mxu0
        %v3202 = vadd.f32 %v3188, %v3201
        %v3203 = vpop.f32.mrf.mxu0
        %v3204 = vadd.f32 %v3190, %v3203
        %3205 = vdwg.mxu0
        %3206 = vmatpush.bf16.msra.mxu0 %v3089
        %3207 = vmatpush.bf16.msra.mxu0 %v3088
        %3208 = vmatpush.bf16.msra.mxu0 %v3087
        %3209 = vmatpush.bf16.msra.mxu0 %v3086
        %3210 = vmatpush.bf16.msra.mxu0 %v3085
        %3211 = vmatpush.bf16.msra.mxu0 %v3084
        %3212 = vmatpush.bf16.msra.mxu0 %v3083
        %3213 = vmatpush.bf16.msra.mxu0 %v3082
        %3214 = vmatmul.bf16.gmra.mxu0 %v2836
        %v3215 = vpop.f32.mrf.mxu0
        %v3216 = vadd.f32 %v3202, %v3215
        %v3217 = vpop.f32.mrf.mxu0
        %v3218 = vadd.f32 %v3204, %v3217
        %3219 = vdwg.mxu0
        %3220 = vmatpush.bf16.msra.mxu0 %v3097
        %3221 = vmatpush.bf16.msra.mxu0 %v3096
        %3222 = vmatpush.bf16.msra.mxu0 %v3095
        %3223 = vmatpush.bf16.msra.mxu0 %v3094
        %3224 = vmatpush.bf16.msra.mxu0 %v3093
        %3225 = vmatpush.bf16.msra.mxu0 %v3092
        %3226 = vmatpush.bf16.msra.mxu0 %v3091
        %3227 = vmatpush.bf16.msra.mxu0 %v3090
        %3228 = vmatmul.bf16.gmra.mxu0 %v2837
        %v3229 = vpop.f32.mrf.mxu0
        %v3230 = vadd.f32 %v3216, %v3229
        %v3231 = vpop.f32.mrf.mxu0
        %v3232 = vadd.f32 %v3218, %v3231
        %3233 = vdwg.mxu0
        %3234 = vmatpush.bf16.msra.mxu0 %v3105
        %3235 = vmatpush.bf16.msra.mxu0 %v3104
        %3236 = vmatpush.bf16.msra.mxu0 %v3103
        %3237 = vmatpush.bf16.msra.mxu0 %v3102
        %3238 = vmatpush.bf16.msra.mxu0 %v3101
        %3239 = vmatpush.bf16.msra.mxu0 %v3100
        %3240 = vmatpush.bf16.msra.mxu0 %v3099
        %3241 = vmatpush.bf16.msra.mxu0 %v3098
        %3242 = vmatmul.bf16.gmra.mxu0 %v2838
        %v3243 = vpop.f32.mrf.mxu0
        %v3244 = vadd.f32 %v3230, %v3243
        %v3245 = vpop.f32.mrf.mxu0
        %v3246 = vadd.f32 %v3232, %v3245
        %3247 = vdwg.mxu0
        %3248 = vmatpush.bf16.msra.mxu0 %v3113
        %3249 = vmatpush.bf16.msra.mxu0 %v3112
        %3250 = vmatpush.bf16.msra.mxu0 %v3111
        %3251 = vmatpush.bf16.msra.mxu0 %v3110
        %3252 = vmatpush.bf16.msra.mxu0 %v3109
        %3253 = vmatpush.bf16.msra.mxu0 %v3108
        %3254 = vmatpush.bf16.msra.mxu0 %v3107
        %3255 = vmatpush.bf16.msra.mxu0 %v3106
        %3256 = vmatmul.bf16.gmra.mxu0 %v1794
        %v3257 = vpop.f32.mrf.mxu0
        %v3258 = vadd.f32 %v3244, %v3257
        %v3259 = vpop.f32.mrf.mxu0
        %v3260 = vadd.f32 %v3246, %v3259
        %3261 = vdwg.mxu0
        %3262 = vmatpush.bf16.msra.mxu0 %v3121
        %3263 = vmatpush.bf16.msra.mxu0 %v3120
        %3264 = vmatpush.bf16.msra.mxu0 %v3119
        %3265 = vmatpush.bf16.msra.mxu0 %v3118
        %3266 = vmatpush.bf16.msra.mxu0 %v3117
        %3267 = vmatpush.bf16.msra.mxu0 %v3116
        %3268 = vmatpush.bf16.msra.mxu0 %v3115
        %3269 = vmatpush.bf16.msra.mxu0 %v3114
        %3270 = vmatmul.bf16.gmra.mxu0 %v2839
        %v3271 = vpop.f32.mrf.mxu0
        %v3272 = vadd.f32 %v3258, %v3271
        %v3273 = vpop.f32.mrf.mxu0
        %v3274 = vadd.f32 %v3260, %v3273
        %3275 = vdwg.mxu0
        %v3276 = vmax.f32 %v3272, 0.0
        %v3277 = vmax.f32 %v3274, 0.0
        %v3278 = vsel %vm483, %v3276, 0.0
        %v3279 = vsel %vm484, %v3277, 0.0
        %v3280 = vld [vmem:[#allocation16] sm:$0xf]
        %v3281 = vld [vmem:[#allocation16 + $0x4] sm:$0xf]
        %v3282 = vld [vmem:[#allocation16 + $0x8] sm:$0xf]
        %v3283 = vld [vmem:[#allocation16 + $0xc] sm:$0xf]
        %v3284 = vld [vmem:[#allocation16 + $0x10] sm:$0xf]
        %v3285 = vld [vmem:[#allocation16 + $0x14] sm:$0xf]
        %v3286 = vld [vmem:[#allocation16 + $0x18] sm:$0xf]
        %v3287 = vld [vmem:[#allocation16 + $0x1c] sm:$0xf]
        %v3288 = vld [vmem:[#allocation16 + $0x20] sm:$0xf]
        %v3289 = vld [vmem:[#allocation16 + $0x24] sm:$0xf]
        %v3290 = vld [vmem:[#allocation16 + $0x28] sm:$0xf]
        %v3291 = vld [vmem:[#allocation16 + $0x2c] sm:$0xf]
        %v3292 = vld [vmem:[#allocation16 + $0x30] sm:$0xf]
        %v3293 = vld [vmem:[#allocation16 + $0x34] sm:$0xf]
        %v3294 = vld [vmem:[#allocation16 + $0x38] sm:$0xf]
        %v3295 = vld [vmem:[#allocation16 + $0x3c] sm:$0xf]
        %v3296 = vpack.c.bf16 %v3279, %v3278
        %v3297 = vld [vmem:[%s9 + $0x5] sm:$0x1]
        %v3298 = vperm.slane %v3297, 0
        %v3315 = vunpack.c.l.b16 %v3280
        %v3316 = vunpack.c.l.b16 %v3281
        %v3317 = vunpack.c.l.b16 %v3282
        %v3318 = vunpack.c.l.b16 %v3283
        %v3319 = vunpack.c.l.b16 %v3284
        %v3320 = vunpack.c.l.b16 %v3285
        %v3321 = vunpack.c.l.b16 %v3286
        %v3322 = vunpack.c.l.b16 %v3287
        %v3323 = vunpack.c.l.b16 %v3288
        %v3324 = vunpack.c.l.b16 %v3289
        %v3325 = vunpack.c.l.b16 %v3290
        %v3326 = vunpack.c.l.b16 %v3291
        %v3327 = vunpack.c.l.b16 %v3292
        %v3328 = vunpack.c.l.b16 %v3293
        %v3329 = vunpack.c.l.b16 %v3294
        %v3330 = vunpack.c.l.b16 %v3295
        %v3331 = vpack.c.b16 %v3316, %v3315
        %v3332 = vpack.c.b16 %v3318, %v3317
        %v3333 = vpack.c.b16 %v3320, %v3319
        %v3334 = vpack.c.b16 %v3322, %v3321
        %v3335 = vpack.c.b16 %v3324, %v3323
        %v3336 = vpack.c.b16 %v3326, %v3325
        %v3337 = vpack.c.b16 %v3328, %v3327
        %v3338 = vpack.c.b16 %v3330, %v3329
        %3347 = vmatpush.bf16.msra.mxu0 %v3338
        %3348 = vmatpush.bf16.msra.mxu0 %v3337
        %3349 = vmatpush.bf16.msra.mxu0 %v3336
        %3350 = vmatpush.bf16.msra.mxu0 %v3335
        %3351 = vmatpush.bf16.msra.mxu0 %v3334
        %3352 = vmatpush.bf16.msra.mxu0 %v3333
        %3353 = vmatpush.bf16.msra.mxu0 %v3332
        %3354 = vmatpush.bf16.msra.mxu0 %v3331
        %3355 = vmatmul.bf16.gmra.mxu0 %v3296
        %v3356 = vpop.f32.mrf.mxu0
        %v3357 = vadd.f32 %v3298, %v3356
        %v3358 = vpop.f32.mrf.mxu0
        %v3359 = vadd.f32 %v3298, %v3358
        %3360 = vdwg.mxu0
        %v3361 = vmax.f32 %v3357, 0.0
        %v3362 = vmax.f32 %v3359, 0.0
        %v3363 = vld [vmem:[#allocation17] sm:$0xf]
        %v3364 = vld [vmem:[#allocation17 + $0x4] sm:$0xf]
        %v3365 = vld [vmem:[#allocation17 + $0x8] sm:$0xf]
        %v3366 = vld [vmem:[#allocation17 + $0xc] sm:$0xf]
        %v3367 = vld [vmem:[#allocation17 + $0x10] sm:$0xf]
        %v3368 = vld [vmem:[#allocation17 + $0x14] sm:$0xf]
        %v3369 = vld [vmem:[#allocation17 + $0x18] sm:$0xf]
        %v3370 = vld [vmem:[#allocation17 + $0x1c] sm:$0xf]
        %v3371 = vld [vmem:[#allocation17 + $0x20] sm:$0xf]
        %v3372 = vld [vmem:[#allocation17 + $0x24] sm:$0xf]
        %v3373 = vld [vmem:[#allocation17 + $0x28] sm:$0xf]
        %v3374 = vld [vmem:[#allocation17 + $0x2c] sm:$0xf]
        %v3375 = vld [vmem:[#allocation17 + $0x30] sm:$0xf]
        %v3376 = vld [vmem:[#allocation17 + $0x34] sm:$0xf]
        %v3377 = vld [vmem:[#allocation17 + $0x38] sm:$0xf]
        %v3378 = vld [vmem:[#allocation17 + $0x3c] sm:$0xf]
        %v3379 = vpack.c.bf16 %v3362, %v3361
        %v3380 = vld [vmem:[%s9 + $0x6] sm:$0x1]
        %v3381 = vperm.slane %v3380, 0
        %v3398 = vunpack.c.l.b16 %v3363
        %v3399 = vunpack.c.l.b16 %v3364
        %v3400 = vunpack.c.l.b16 %v3365
        %v3401 = vunpack.c.l.b16 %v3366
        %v3402 = vunpack.c.l.b16 %v3367
        %v3403 = vunpack.c.l.b16 %v3368
        %v3404 = vunpack.c.l.b16 %v3369
        %v3405 = vunpack.c.l.b16 %v3370
        %v3406 = vunpack.c.l.b16 %v3371
        %v3407 = vunpack.c.l.b16 %v3372
        %v3408 = vunpack.c.l.b16 %v3373
        %v3409 = vunpack.c.l.b16 %v3374
        %v3410 = vunpack.c.l.b16 %v3375
        %v3411 = vunpack.c.l.b16 %v3376
        %v3412 = vunpack.c.l.b16 %v3377
        %v3413 = vunpack.c.l.b16 %v3378
        %v3414 = vpack.c.b16 %v3399, %v3398
        %v3415 = vpack.c.b16 %v3401, %v3400
        %v3416 = vpack.c.b16 %v3403, %v3402
        %v3417 = vpack.c.b16 %v3405, %v3404
        %v3418 = vpack.c.b16 %v3407, %v3406
        %v3419 = vpack.c.b16 %v3409, %v3408
        %v3420 = vpack.c.b16 %v3411, %v3410
        %v3421 = vpack.c.b16 %v3413, %v3412
        %3430 = vmatpush.bf16.msra.mxu0 %v3421
        %3431 = vmatpush.bf16.msra.mxu0 %v3420
        %3432 = vmatpush.bf16.msra.mxu0 %v3419
        %3433 = vmatpush.bf16.msra.mxu0 %v3418
        %3434 = vmatpush.bf16.msra.mxu0 %v3417
        %3435 = vmatpush.bf16.msra.mxu0 %v3416
        %3436 = vmatpush.bf16.msra.mxu0 %v3415
        %3437 = vmatpush.bf16.msra.mxu0 %v3414
        %3438 = vmatmul.bf16.gmra.mxu0 %v3379
        %v3439 = vpop.f32.mrf.mxu0
        %v3440 = vadd.f32 %v3381, %v3439
        %v3441 = vpop.f32.mrf.mxu0
        %v3442 = vadd.f32 %v3381, %v3441
        %3443 = vdwg.mxu0
        %v3444 = vlaneseq
        %v3445 = vand.u32 %v3444, 127
        %vm3446 = vcmp.lt.s32.totalorder %v3445, 29
        %v3447 = vsel %vm3446, %v3440, -1e+30
        %v3448 = vsel %vm3446, %v3442, -1e+30
        %3449 = vmax.xlane.f32.xlu0 %v3447
        %v3450 = vpop.xlane.xlu0 %3449
        %3451 = vmax.xlane.f32.xlu0 %v3448
        %v3452 = vpop.xlane.xlu0 %3451
        %v3453 = vsub.f32 %v3447, %v3450
        %v3454 = vsub.f32 %v3448, %v3452
        %v3455 = vmul.f32 %v3453, 1.442695
        %v3456 = vpow.pop %v3455
        %v3457 = vmul.f32 %v3454, 1.442695
        %v3458 = vpow.pop %v3457
        %3459 = vadd.xlane.f32.xlu0 %v3456
        %v3460 = vpop.xlane.xlu0 %3459
        %3461 = vadd.xlane.f32.xlu0 %v3458
        %v3462 = vpop.xlane.xlu0 %3461
        %v3463 = vlog2.pop %v3460
        %v3464 = vmul.f32 %v3463, 0.6931472
        %v3465 = vlog2.pop %v3462
        %v3466 = vmul.f32 %v3465, 0.6931472
        %v3467 = vadd.f32 %v3464, %v3450
        %v3468 = vadd.f32 %v3466, %v3452
        %v3469 = vsub.f32 %v3447, %v3467
        %v3470 = vsub.f32 %v3448, %v3468
        %3471 = vst [vmem:[%s477] sm:$0xff] %v3469
        %3472 = vst [vmem:[%s477 + $0x8] sm:$0xff] %v3470
        %s3473 = sand.u32 %s241, 1
        %s3474 = scalar_lea.sflag [#allocation7], %s3473
        %s3475 = sand.u32 %s241, 1
        %s3476 = smul.addr %s3475, 16
        %s3477 = scalar_lea.vmem [#allocation19], %s3476
        // Predicated region
        $region89: #{tpu_custom_call.1} parent=55 // pred_check
          %p3478 = pneg %p251
        $region90: #{tpu_custom_call.1} parent=55 // pred_check_branch
          %3480 = sbr.rel (%p3478) target = $region92
        $region91: #{tpu_custom_call.1} parent=55 // pred_region
          %3482 = vsyncadd %s3474, 0
          %s3483 = smul.addr %s39, 2
          %s3484 = smul.addr %s3483, 8
          %s3485 = scalar_lea.hbm %s10, %s3484
          %s3486 = sshll.u32 %s3477, 4
          %s3487 = int_to_ptr.vmem [resolvable:$true] %s3486
          %s3488 = sshll.u32 %s3485, 4
          %s3489 = int_to_ptr.hbm [resolvable:$true] %s3488
          %3494 = dma.vmem_to_hbm [thread:$0]  %s3487, 256, %s3489, %s3474, 128, 128, 8
        $region92: #{tpu_custom_call.1} parent=55 // pred_fallthru
          _
      $region56: #{tpu_custom_call.1} parent=5 // pred_fallthru
        _
      %p3495 = scmp.le.s32.totalorder 2, %s34
      // Predicated region
      $region93: #{tpu_custom_call.1} parent=5 // pred_check
        %p3496 = pneg %p3495
      $region94: #{tpu_custom_call.1} parent=5 // pred_check_branch
        %3498 = sbr.rel (%p3496) target = $region96
      $region95: #{tpu_custom_call.1} parent=5 // pred_region
        %s3499 = ssub.s32 %s34, 2
        // Predicated region
        $region97: #{tpu_custom_call.1} parent=95 // pred_check
          %p3500 = pneg %p257
        $region98: #{tpu_custom_call.1} parent=95 // pred_check_branch
          %3502 = sbr.rel (%p3500) target = $region100
        $region99: #{tpu_custom_call.1} parent=95 // pred_region
          %s3503 = sand.u32 %s242, 1
          %s3504 = scalar_lea.sflag [#allocation7], %s3503
          %s3505 = sand.u32 %s242, 1
          %s3506 = smul.addr %s3505, 16
          %s3507 = scalar_lea.vmem [#allocation19], %s3506
          %3509 = dma.done %s3504, 256
        $region100: #{tpu_custom_call.1} parent=95 // pred_fallthru
          _
      $region96: #{tpu_custom_call.1} parent=5 // pred_fallthru
        _
    $region6: #{tpu_custom_call.1} parent=1 // loop_footer
      %s38 = sadd.s32 1, %s34
    $region7: #{tpu_custom_call.1} parent=1 // loop_footer_branch
      %33 = sbr.rel target = $region3
    $region8: #{tpu_custom_call.1} parent=1 // loop_exit
      _
    %3510 = vsyncpa [#allocation6], 1
    %s3511 = scalar_lea.sflag [#allocation6], 1
    %3512 = vsyncpa %s3511, 1
    %3513 = vsyncpa [#allocation9], 1
    %3514 = vsyncpa [#allocation12], 1
    %3515 = vsyncpa [#allocation15], 1
    %3516 = vsyncpa [#allocation18], 1
    %3517 = vsyncpa [#allocation7], 1
    %s3518 = scalar_lea.sflag [#allocation7], 1
    %3519 = vsyncpa %s3518, 1

</llo_original>
